<compile_context>
chip_gen: v7x
topology: tpu7x:2x2x1
jax: 0.10.0
libtpu: 0.0.40
codegen_flags: <defaults>
</compile_context>

<pallas_src>
import functools

import jax
import jax.numpy as jnp
import numpy as np
from jax.experimental import pallas as pl
from jax.experimental.pallas import tpu as pltpu


def _round_up(x, m):
    return ((x + m - 1) // m) * m


# ----------------------------------------------------------------------------
# Kernel 1: M-tiled matmul + bias (+ ReLU), bf16 MXU operands, f32 epilogue
# ----------------------------------------------------------------------------
def _mm_bias_kernel(a_ref, w_ref, b_ref, o_ref, *, relu):
    acc = jnp.dot(a_ref[...], w_ref[...], preferred_element_type=jnp.float32)
    acc = acc + b_ref[...]          # bias broadcast over rows, shape (1, N), f32
    if relu:
        acc = jnp.maximum(acc, 0.0)
    o_ref[...] = acc.astype(o_ref.dtype)


def matmul_bias(a, w, bias, *, relu=False, out_dtype=jnp.float32, tm_max=512):
    """a:(M,K) @ w:(K,N) + bias:(N,), optional ReLU.

    Tiled over M so HBM->VMEM DMAs pipeline with MXU work; the M axis is
    'parallel' so v7x's two TensorCores split the row tiles.  Operands are cast
    to bf16 at the kernel boundary; accumulation and the epilogue stay f32.
    """
    M, K = a.shape
    K2, N = w.shape
    assert K == K2
    TM = min(tm_max, _round_up(M, 8))
    Mp = _round_up(M, TM)
    a16 = a.astype(jnp.bfloat16)
    if Mp != M:
        a16 = jnp.pad(a16, ((0, Mp - M), (0, 0)))
    out = pl.pallas_call(
        functools.partial(_mm_bias_kernel, relu=relu),
        out_shape=jax.ShapeDtypeStruct((Mp, N), out_dtype),
        grid=(Mp // TM,),
        in_specs=[
            pl.BlockSpec((TM, K), lambda i: (i, 0)),
            pl.BlockSpec((K, N), lambda i: (0, 0)),
            pl.BlockSpec((1, N), lambda i: (0, 0)),
        ],
        out_specs=pl.BlockSpec((TM, N), lambda i: (i, 0)),
        compiler_params=pltpu.CompilerParams(
            dimension_semantics=("parallel",),
            vmem_limit_bytes=32 * 1024 * 1024,
        ),
        cost_estimate=pl.CostEstimate(
            flops=2 * Mp * K * N,
            transcendentals=0,
            bytes_accessed=2 * Mp * K + 2 * K * N + 4 * Mp * N,
        ),
    )(a16, w.astype(jnp.bfloat16), bias.reshape(1, N).astype(jnp.float32))
    return out[:M] if Mp != M else out


# ----------------------------------------------------------------------------
# Kernel 2: fused fc1 -> ReLU -> fc2 -> LSTM input projection
# ----------------------------------------------------------------------------
def _fc_chain_kernel(h_ref, w1_ref, b1_ref, w2_ref, b2_ref, w3_ref, b3_ref, o_ref):
    z = jnp.dot(h_ref[...], w1_ref[...], preferred_element_type=jnp.float32) + b1_ref[...]
    z = jnp.maximum(z, 0.0)                                                            # fc1+ReLU
    z = jnp.dot(z, w2_ref[...], preferred_element_type=jnp.float32) + b2_ref[...]      # fc2
    z = jnp.dot(z, w3_ref[...], preferred_element_type=jnp.float32) + b3_ref[...]      # x@W_ih^T + b
    o_ref[...] = z.astype(o_ref.dtype)


def fc_chain(h, w1, b1, w2, b2, w3, b3, *, tm_max=512):
    """relu(h@w1+b1)@w2+b2, then @w3+b3 — ONE pallas_call, tiled over rows.

    The 64- and 32-wide intermediates stay in VMEM; the only HBM output is the
    lane-dense (M, 128) LSTM gate matrix.  Kept in f32 (feeds the recurrence).
    """
    M, K = h.shape
    N1, N2, N3 = w1.shape[1], w2.shape[1], w3.shape[1]
    TM = min(tm_max, _round_up(M, 8))
    Mp = _round_up(M, TM)
    hp = h.astype(jnp.float32)
    if Mp != M:
        hp = jnp.pad(hp, ((0, Mp - M), (0, 0)))
    out = pl.pallas_call(
        _fc_chain_kernel,
        out_shape=jax.ShapeDtypeStruct((Mp, N3), jnp.float32),
        grid=(Mp // TM,),
        in_specs=[
            pl.BlockSpec((TM, K), lambda i: (i, 0)),
            pl.BlockSpec((K, N1), lambda i: (0, 0)),
            pl.BlockSpec((1, N1), lambda i: (0, 0)),
            pl.BlockSpec((N1, N2), lambda i: (0, 0)),
            pl.BlockSpec((1, N2), lambda i: (0, 0)),
            pl.BlockSpec((N2, N3), lambda i: (0, 0)),
            pl.BlockSpec((1, N3), lambda i: (0, 0)),
        ],
        out_specs=pl.BlockSpec((TM, N3), lambda i: (i, 0)),
        compiler_params=pltpu.CompilerParams(
            dimension_semantics=("parallel",),
            vmem_limit_bytes=32 * 1024 * 1024,
        ),
        cost_estimate=pl.CostEstimate(
            flops=2 * Mp * (K * N1 + N1 * N2 + N2 * N3),
            transcendentals=0,
            bytes_accessed=4 * (Mp * K + K * N1 + N1 * N2 + N2 * N3 + Mp * N3),
        ),
    )(hp,
      w1.astype(jnp.float32), b1.reshape(1, N1).astype(jnp.float32),
      w2.astype(jnp.float32), b2.reshape(1, N2).astype(jnp.float32),
      w3.astype(jnp.float32), b3.reshape(1, N3).astype(jnp.float32))
    return out[:M] if Mp != M else out


# ----------------------------------------------------------------------------
# Kernel 3: LSTM recurrence + output head, one invocation, unrolled over S
# ----------------------------------------------------------------------------
def _lstm_head_kernel(xg_ref, whh_t_ref, wout_t_ref, bout_ref, o_ref):
    S, B, G = xg_ref.shape
    H = whh_t_ref.shape[0]
    h = jnp.zeros((B, H), jnp.float32)
    c = jnp.zeros((B, H), jnp.float32)
    # S is a static trace-time constant, so this Python loop fully unrolls
    # (equivalent to lax.fori_loop(..., unroll=True)): one pallas_call instead
    # of S grid steps, and h/c never leave vregs/VMEM.  Recurrence stays f32.
    for t in range(S):
        gates = xg_ref[t] + jnp.dot(h, whh_t_ref[...],
                                    preferred_element_type=jnp.float32)
        i_g = jax.nn.sigmoid(gates[:, 0:H])
        f_g = jax.nn.sigmoid(gates[:, H:2 * H])
        g_g = jnp.tanh(gates[:, 2 * H:3 * H])
        o_g = jax.nn.sigmoid(gates[:, 3 * H:4 * H])
        c = f_g * c + i_g * g_g
        h = o_g * jnp.tanh(c)
        # Fused 32->6 output head: only the actions ever hit HBM.
        o_ref[t] = (jnp.dot(h, wout_t_ref[...], preferred_element_type=jnp.float32)
                    + bout_ref[...]).astype(o_ref.dtype)


def lstm_head(xg_sbf, w_hh_t, w_out_t, b_out):
    """xg_sbf: (S, B, 4H) precomputed gate inputs (x@W_ih^T + b_ih + b_hh).
    w_hh_t: (H, 4H), w_out_t: (H, 6), b_out: (6,).  Returns actions (S, B, 6)."""
    S, B, G = xg_sbf.shape
    H = G // 4
    A = w_out_t.shape[1]
    return pl.pallas_call(
        _lstm_head_kernel,
        out_shape=jax.ShapeDtypeStruct((S, B, A), jnp.float32),
        grid=(1,),
        in_specs=[
            pl.BlockSpec((S, B, G), lambda i: (0, 0, 0)),
            pl.BlockSpec((H, G), lambda i: (0, 0)),
            pl.BlockSpec((H, A), lambda i: (0, 0)),
            pl.BlockSpec((1, A), lambda i: (0, 0)),
        ],
        out_specs=pl.BlockSpec((S, B, A), lambda i: (0, 0, 0)),
        compiler_params=pltpu.CompilerParams(dimension_semantics=("arbitrary",)),
    )(xg_sbf.astype(jnp.float32), w_hh_t.astype(jnp.float32),
      w_out_t.astype(jnp.float32), b_out.reshape(1, A).astype(jnp.float32))


# ----------------------------------------------------------------------------
# Conv-as-matmul glue: NHWC end-to-end, im2col in plain JAX, matmul in Pallas
# ----------------------------------------------------------------------------
def _im2col_nhwc(x, k, stride, pad):
    # x: (N, H, W, C) -> (N*oh*ow, k*k*C); column index = (di*k + dj)*C + c.
    xp = jnp.pad(x, ((0, 0), (pad, pad), (pad, pad), (0, 0)))
    N, Hp, Wp, C = xp.shape
    oh = (Hp - k) // stride + 1
    ow = (Wp - k) // stride + 1
    cols = []
    for di in range(k):
        for dj in range(k):
            cols.append(xp[:, di:di + stride * oh:stride, dj:dj + stride * ow:stride, :])
    p = jnp.stack(cols, axis=3)                          # (N, oh, ow, k*k, C)
    return p.reshape(N * oh * ow, k * k * C), oh, ow


# TODO(synk): fold the im2col gather into the conv kernel (in-kernel strided
# loads over an NHWC frame block) so the k*k-replicated patch matrix never
# materializes in HBM.
def conv2d_relu(x_nhwc, w_oihw, b, stride, pad):
    # x_nhwc: (N, H, W, C); w_oihw: PyTorch (O, C, k, k).  Returns NHWC bf16.
    N = x_nhwc.shape[0]
    O, C, k, _ = w_oihw.shape
    patches, oh, ow = _im2col_nhwc(x_nhwc.astype(jnp.bfloat16), k, stride, pad)
    # Reorder OIHW -> rows indexed (di*k+dj)*C + c to match the patch columns.
    w2 = jnp.transpose(w_oihw, (2, 3, 1, 0)).reshape(k * k * C, O)
    y = matmul_bias(patches, w2, b, relu=True, out_dtype=jnp.bfloat16)     # (N*oh*ow, O)
    return y.reshape(N, oh, ow, O)                                         # stays NHWC


# ----------------------------------------------------------------------------
# Parameters (deterministic synthetic init; shapes follow the PyTorch module)
# ----------------------------------------------------------------------------
def init_params(key):
    ks = jax.random.split(key, 16)

    def unif(k, shape, fan_in):
        bound = 1.0 / np.sqrt(fan_in)
        return jax.random.uniform(k, shape, jnp.float32, -bound, bound)

    H = 32
    p = {
        "c1_w": unif(ks[0], (16, 3, 5, 5), 3 * 25),   "c1_b": unif(ks[1], (16,), 3 * 25),
        "c2_w": unif(ks[2], (32, 16, 5, 5), 16 * 25), "c2_b": unif(ks[3], (32,), 16 * 25),
        "c3_w": unif(ks[4], (64, 32, 5, 5), 32 * 25), "c3_b": unif(ks[5], (64,), 32 * 25),
        "fc1_w": unif(ks[6], (64, 256), 256),          "fc1_b": unif(ks[7], (64,), 256),
        "fc2_w": unif(ks[8], (32, 64), 64),            "fc2_b": unif(ks[9], (32,), 64),
        "lstm_w_ih": unif(ks[10], (4 * H, H), H),      "lstm_b_ih": unif(ks[11], (4 * H,), H),
        "lstm_w_hh": unif(ks[12], (4 * H, H), H),      "lstm_b_hh": unif(ks[13], (4 * H,), H),
        "out_w": unif(ks[14], (6, H), H),              "out_b": unif(ks[15], (6,), H),
    }
    return p


# ----------------------------------------------------------------------------
# Forward pass (mirrors LSTMCNNModel.forward)
# ----------------------------------------------------------------------------
def lstm_cnn_forward(params, hist):
    # hist: (B, S, 3, 64, 64) float32 (PyTorch NCHW frames).
    B, S, C, H, W = hist.shape
    x = hist.reshape(B * S, C, H, W)
    x = jnp.transpose(x, (0, 2, 3, 1))                                      # -> NHWC, once
    x = conv2d_relu(x, params["c1_w"], params["c1_b"], stride=3, pad=1)     # (B*S,21,21,16)
    x = conv2d_relu(x, params["c2_w"], params["c2_b"], stride=3, pad=1)     # (B*S, 7, 7,32)
    x = conv2d_relu(x, params["c3_w"], params["c3_b"], stride=3, pad=1)     # (B*S, 2, 2,64)
    BS, oh, ow, Co = x.shape
    h = x.reshape(BS, oh * ow * Co)                                         # NHWC flatten

    # Reorder fc1 columns from the PyTorch NCHW flatten (c*oh*ow + i*ow + j) to
    # the NHWC flatten used above ((i*ow + j)*Co + c): one-time weight shuffle.
    fc1_w = (params["fc1_w"].reshape(-1, Co, oh, ow)
             .transpose(0, 2, 3, 1).reshape(-1, oh * ow * Co))

    # fc1 -> ReLU -> fc2 -> LSTM input projection (b_ih + b_hh folded), fused.
    xg = fc_chain(h,
                  fc1_w.T, params["fc1_b"],
                  params["fc2_w"].T, params["fc2_b"],
                  params["lstm_w_ih"].T,
                  params["lstm_b_ih"] + params["lstm_b_hh"])                # (B*S, 4H)

    Hd = params["lstm_w_hh"].shape[1]
    xg = xg.reshape(B, S, 4 * Hd).transpose(1, 0, 2)                        # (S, B, 4H)
    act = lstm_head(xg, params["lstm_w_hh"].T,
                    params["out_w"].T, params["out_b"])                     # (S, B, 6)
    return jnp.transpose(act, (1, 0, 2))                                    # (B, S, 6)


# ----------------------------------------------------------------------------
# Pure-JAX f32 reference (PyTorch semantics) for a sanity check
# ----------------------------------------------------------------------------
def reference_forward(params, hist):
    B, S, C, H, W = hist.shape
    x = hist.reshape(B * S, C, H, W)

    def conv(x, w, b):
        y = jax.lax.conv_general_dilated(
            x, w, window_strides=(3, 3), padding=((1, 1), (1, 1)),
            dimension_numbers=("NCHW", "OIHW", "NCHW"))
        return jax.nn.relu(y + b[None, :, None, None])

    x = conv(x, params["c1_w"], params["c1_b"])
    x = conv(x, params["c2_w"], params["c2_b"])
    x = conv(x, params["c3_w"], params["c3_b"])
    h = x.reshape(B * S, 256)
    h = jax.nn.relu(h @ params["fc1_w"].T + params["fc1_b"])
    h = h @ params["fc2_w"].T + params["fc2_b"]
    h = h.reshape(B, S, -1)

    Hd = params["lstm_w_hh"].shape[1]
    hh = jnp.zeros((B, Hd), jnp.float32)
    cc = jnp.zeros((B, Hd), jnp.float32)
    outs = []
    for t in range(S):
        g = (h[:, t] @ params["lstm_w_ih"].T + hh @ params["lstm_w_hh"].T
             + params["lstm_b_ih"] + params["lstm_b_hh"])
        i = jax.nn.sigmoid(g[:, :Hd]); f = jax.nn.sigmoid(g[:, Hd:2 * Hd])
        gg = jnp.tanh(g[:, 2 * Hd:3 * Hd]); o = jax.nn.sigmoid(g[:, 3 * Hd:])
        cc = f * cc + i * gg
        hh = o * jnp.tanh(cc)
        outs.append(hh)
    lo = jnp.stack(outs, axis=1).reshape(B * S, Hd)
    act = lo @ params["out_w"].T + params["out_b"]
    return act.reshape(B, S, 6)


if __name__ == "__main__":
    key = jax.random.PRNGKey(0)
    pkey, xkey = jax.random.split(key)
    params = init_params(pkey)

    # Small shapes consistent with the module: spatial must be 64x64 so the conv
    # stack flattens to exactly 256 features (64 ch * 2 * 2).
    B, S = 2, 4
    hist = jax.random.uniform(xkey, (B, S, 3, 64, 64), jnp.float32)

    out = jax.jit(lstm_cnn_forward)(params, hist)
    out = jax.block_until_ready(out)
    assert out.shape == (B, S, 6), out.shape

    ref = reference_forward(params, hist)
    np.testing.assert_allclose(np.asarray(out), np.asarray(ref), rtol=5e-2, atol=5e-2)

    print("KERNEL_OK")
</pallas_src>

<mosaic_0001>
module attributes {stable_mosaic.version = 11 : i64} {
  func.func @_mm_bias_kernel(%arg0: i32, %arg1: memref<512x75xbf16, #tpu.memory_space<vmem>>, %arg2: memref<75x16xbf16, #tpu.memory_space<vmem>>, %arg3: memref<1x16xf32, #tpu.memory_space<vmem>>, %arg4: memref<512x16xbf16, #tpu.memory_space<vmem>>) attributes {dimension_semantics = [#tpu.dimension_semantics<parallel>], iteration_bounds = array<i64: 7>, scalar_prefetch = 0 : i64, scratch_operands = 0 : i64, tpu.core_type = #tpu.core_type<tc>, window_params = [{transform_indices = @transform_0, window_bounds = array<i64: 512, 75>}, {pipeline_mode = #tpu.pipeline_mode<synchronous>, transform_indices = @transform_1, window_bounds = array<i64: 75, 16>}, {pipeline_mode = #tpu.pipeline_mode<synchronous>, transform_indices = @transform_2, window_bounds = array<i64: 1, 16>}, {transform_indices = @transform_3, window_bounds = array<i64: 512, 16>}]} {
    %c0 = arith.constant 0 : index
    %c0_0 = arith.constant 0 : index
    %0 = vector.load %arg1[%c0, %c0_0] : memref<512x75xbf16, #tpu.memory_space<vmem>>, vector<512x75xbf16>
    %c0_1 = arith.constant 0 : index
    %c0_2 = arith.constant 0 : index
    %1 = vector.load %arg2[%c0_1, %c0_2] : memref<75x16xbf16, #tpu.memory_space<vmem>>, vector<75x16xbf16>
    %cst = arith.constant dense<0.000000e+00> : vector<512x16xf32>
    %2 = tpu.matmul %0, %1, %cst {dimension_numbers = #tpu.dot_dimension_numbers<[1], [0], [0], [1], [0, 0, 1, 1], [], []>} : vector<512x75xbf16>, vector<75x16xbf16>, vector<512x16xf32> -> vector<512x16xf32>
    %c0_3 = arith.constant 0 : index
    %c0_4 = arith.constant 0 : index
    %3 = vector.load %arg3[%c0_3, %c0_4] : memref<1x16xf32, #tpu.memory_space<vmem>>, vector<1x16xf32>
    %4 = vector.broadcast %3 : vector<1x16xf32> to vector<512x16xf32>
    %5 = arith.addf %2, %4 : vector<512x16xf32>
    %cst_5 = arith.constant 0.000000e+00 : f32
    %6 = vector.broadcast %cst_5 : f32 to vector<512x16xf32>
    %7 = arith.maximumf %5, %6 : vector<512x16xf32>
    %8 = arith.truncf %7 : vector<512x16xf32> to vector<512x16xbf16>
    %c0_6 = arith.constant 0 : index
    %c0_7 = arith.constant 0 : index
    %9 = vector.load %arg4[%c0_6, %c0_7] : memref<512x16xbf16, #tpu.memory_space<vmem>>, vector<512x16xbf16>
    tpu.vector_store %arg4[%c0_6, %c0_7], %8 {strides = array<i32>} : memref<512x16xbf16, #tpu.memory_space<vmem>>, vector<512x16xbf16>,
    return
  }
  func.func @transform_0(%arg0: i32) -> (i32, i32) {
    %c0_i32 = arith.constant 0 : i32
    %c0_i32_0 = arith.constant 0 : i32
    return %arg0, %c0_i32 : i32, i32
  }
  func.func @transform_1(%arg0: i32) -> (i32, i32) {
    %c0_i32 = arith.constant 0 : i32
    %c0_i32_0 = arith.constant 0 : i32
    %c0_i32_1 = arith.constant 0 : i32
    return %c0_i32, %c0_i32_0 : i32, i32
  }
  func.func @transform_2(%arg0: i32) -> (i32, i32) {
    %c0_i32 = arith.constant 0 : i32
    %c0_i32_0 = arith.constant 0 : i32
    %c0_i32_1 = arith.constant 0 : i32
    return %c0_i32, %c0_i32_0 : i32, i32
  }
  func.func @transform_3(%arg0: i32) -> (i32, i32) {
    %c0_i32 = arith.constant 0 : i32
    %c0_i32_0 = arith.constant 0 : i32
    return %arg0, %c0_i32 : i32, i32
  }
}

module attributes {stable_mosaic.version = 11 : i64} {
  func.func @_mm_bias_kernel(%arg0: i32, %arg1: memref<392x400xbf16, #tpu.memory_space<vmem>>, %arg2: memref<400x32xbf16, #tpu.memory_space<vmem>>, %arg3: memref<1x32xf32, #tpu.memory_space<vmem>>, %arg4: memref<392x32xbf16, #tpu.memory_space<vmem>>) attributes {dimension_semantics = [#tpu.dimension_semantics<parallel>], iteration_bounds = array<i64: 1>, scalar_prefetch = 0 : i64, scratch_operands = 0 : i64, tpu.core_type = #tpu.core_type<tc>, window_params = [{transform_indices = @transform_0, window_bounds = array<i64: 392, 400>}, {pipeline_mode = #tpu.pipeline_mode<synchronous>, transform_indices = @transform_1, window_bounds = array<i64: 400, 32>}, {pipeline_mode = #tpu.pipeline_mode<synchronous>, transform_indices = @transform_2, window_bounds = array<i64: 1, 32>}, {transform_indices = @transform_3, window_bounds = array<i64: 392, 32>}]} {
    %c0 = arith.constant 0 : index
    %c0_0 = arith.constant 0 : index
    %0 = vector.load %arg1[%c0, %c0_0] : memref<392x400xbf16, #tpu.memory_space<vmem>>, vector<392x400xbf16>
    %c0_1 = arith.constant 0 : index
    %c0_2 = arith.constant 0 : index
    %1 = vector.load %arg2[%c0_1, %c0_2] : memref<400x32xbf16, #tpu.memory_space<vmem>>, vector<400x32xbf16>
    %cst = arith.constant dense<0.000000e+00> : vector<392x32xf32>
    %2 = tpu.matmul %0, %1, %cst {dimension_numbers = #tpu.dot_dimension_numbers<[1], [0], [0], [1], [0, 0, 1, 1], [], []>} : vector<392x400xbf16>, vector<400x32xbf16>, vector<392x32xf32> -> vector<392x32xf32>
    %c0_3 = arith.constant 0 : index
    %c0_4 = arith.constant 0 : index
    %3 = vector.load %arg3[%c0_3, %c0_4] : memref<1x32xf32, #tpu.memory_space<vmem>>, vector<1x32xf32>
    %4 = vector.broadcast %3 : vector<1x32xf32> to vector<392x32xf32>
    %5 = arith.addf %2, %4 : vector<392x32xf32>
    %cst_5 = arith.constant 0.000000e+00 : f32
    %6 = vector.broadcast %cst_5 : f32 to vector<392x32xf32>
    %7 = arith.maximumf %5, %6 : vector<392x32xf32>
    %8 = arith.truncf %7 : vector<392x32xf32> to vector<392x32xbf16>
    %c0_6 = arith.constant 0 : index
    %c0_7 = arith.constant 0 : index
    %9 = vector.load %arg4[%c0_6, %c0_7] : memref<392x32xbf16, #tpu.memory_space<vmem>>, vector<392x32xbf16>
    tpu.vector_store %arg4[%c0_6, %c0_7], %8 {strides = array<i32>} : memref<392x32xbf16, #tpu.memory_space<vmem>>, vector<392x32xbf16>,
    return
  }
  func.func @transform_0(%arg0: i32) -> (i32, i32) {
    %c0_i32 = arith.constant 0 : i32
    %c0_i32_0 = arith.constant 0 : i32
    return %arg0, %c0_i32 : i32, i32
  }
  func.func @transform_1(%arg0: i32) -> (i32, i32) {
    %c0_i32 = arith.constant 0 : i32
    %c0_i32_0 = arith.constant 0 : i32
    %c0_i32_1 = arith.constant 0 : i32
    return %c0_i32, %c0_i32_0 : i32, i32
  }
  func.func @transform_2(%arg0: i32) -> (i32, i32) {
    %c0_i32 = arith.constant 0 : i32
    %c0_i32_0 = arith.constant 0 : i32
    %c0_i32_1 = arith.constant 0 : i32
    return %c0_i32, %c0_i32_0 : i32, i32
  }
  func.func @transform_3(%arg0: i32) -> (i32, i32) {
    %c0_i32 = arith.constant 0 : i32
    %c0_i32_0 = arith.constant 0 : i32
    return %arg0, %c0_i32 : i32, i32
  }
}

module attributes {stable_mosaic.version = 11 : i64} {
  func.func @_mm_bias_kernel(%arg0: i32, %arg1: memref<32x800xbf16, #tpu.memory_space<vmem>>, %arg2: memref<800x64xbf16, #tpu.memory_space<vmem>>, %arg3: memref<1x64xf32, #tpu.memory_space<vmem>>, %arg4: memref<32x64xbf16, #tpu.memory_space<vmem>>) attributes {dimension_semantics = [#tpu.dimension_semantics<parallel>], iteration_bounds = array<i64: 1>, scalar_prefetch = 0 : i64, scratch_operands = 0 : i64, tpu.core_type = #tpu.core_type<tc>, window_params = [{transform_indices = @transform_0, window_bounds = array<i64: 32, 800>}, {pipeline_mode = #tpu.pipeline_mode<synchronous>, transform_indices = @transform_1, window_bounds = array<i64: 800, 64>}, {pipeline_mode = #tpu.pipeline_mode<synchronous>, transform_indices = @transform_2, window_bounds = array<i64: 1, 64>}, {transform_indices = @transform_3, window_bounds = array<i64: 32, 64>}]} {
    %c0 = arith.constant 0 : index
    %c0_0 = arith.constant 0 : index
    %0 = vector.load %arg1[%c0, %c0_0] : memref<32x800xbf16, #tpu.memory_space<vmem>>, vector<32x800xbf16>
    %c0_1 = arith.constant 0 : index
    %c0_2 = arith.constant 0 : index
    %1 = vector.load %arg2[%c0_1, %c0_2] : memref<800x64xbf16, #tpu.memory_space<vmem>>, vector<800x64xbf16>
    %cst = arith.constant dense<0.000000e+00> : vector<32x64xf32>
    %2 = tpu.matmul %0, %1, %cst {dimension_numbers = #tpu.dot_dimension_numbers<[1], [0], [0], [1], [0, 0, 1, 1], [], []>} : vector<32x800xbf16>, vector<800x64xbf16>, vector<32x64xf32> -> vector<32x64xf32>
    %c0_3 = arith.constant 0 : index
    %c0_4 = arith.constant 0 : index
    %3 = vector.load %arg3[%c0_3, %c0_4] : memref<1x64xf32, #tpu.memory_space<vmem>>, vector<1x64xf32>
    %4 = vector.broadcast %3 : vector<1x64xf32> to vector<32x64xf32>
    %5 = arith.addf %2, %4 : vector<32x64xf32>
    %cst_5 = arith.constant 0.000000e+00 : f32
    %6 = vector.broadcast %cst_5 : f32 to vector<32x64xf32>
    %7 = arith.maximumf %5, %6 : vector<32x64xf32>
    %8 = arith.truncf %7 : vector<32x64xf32> to vector<32x64xbf16>
    %c0_6 = arith.constant 0 : index
    %c0_7 = arith.constant 0 : index
    %9 = vector.load %arg4[%c0_6, %c0_7] : memref<32x64xbf16, #tpu.memory_space<vmem>>, vector<32x64xbf16>
    tpu.vector_store %arg4[%c0_6, %c0_7], %8 {strides = array<i32>} : memref<32x64xbf16, #tpu.memory_space<vmem>>, vector<32x64xbf16>,
    return
  }
  func.func @transform_0(%arg0: i32) -> (i32, i32) {
    %c0_i32 = arith.constant 0 : i32
    %c0_i32_0 = arith.constant 0 : i32
    return %arg0, %c0_i32 : i32, i32
  }
  func.func @transform_1(%arg0: i32) -> (i32, i32) {
    %c0_i32 = arith.constant 0 : i32
    %c0_i32_0 = arith.constant 0 : i32
    %c0_i32_1 = arith.constant 0 : i32
    return %c0_i32, %c0_i32_0 : i32, i32
  }
  func.func @transform_2(%arg0: i32) -> (i32, i32) {
    %c0_i32 = arith.constant 0 : i32
    %c0_i32_0 = arith.constant 0 : i32
    %c0_i32_1 = arith.constant 0 : i32
    return %c0_i32, %c0_i32_0 : i32, i32
  }
  func.func @transform_3(%arg0: i32) -> (i32, i32) {
    %c0_i32 = arith.constant 0 : i32
    %c0_i32_0 = arith.constant 0 : i32
    return %arg0, %c0_i32 : i32, i32
  }
}

module attributes {stable_mosaic.version = 11 : i64} {
  func.func @_fc_chain_kernel(%arg0: i32, %arg1: memref<8x256xf32, #tpu.memory_space<vmem>>, %arg2: memref<256x64xf32, #tpu.memory_space<vmem>>, %arg3: memref<1x64xf32, #tpu.memory_space<vmem>>, %arg4: memref<64x32xf32, #tpu.memory_space<vmem>>, %arg5: memref<1x32xf32, #tpu.memory_space<vmem>>, %arg6: memref<32x128xf32, #tpu.memory_space<vmem>>, %arg7: memref<1x128xf32, #tpu.memory_space<vmem>>, %arg8: memref<8x128xf32, #tpu.memory_space<vmem>>) attributes {dimension_semantics = [#tpu.dimension_semantics<parallel>], iteration_bounds = array<i64: 1>, scalar_prefetch = 0 : i64, scratch_operands = 0 : i64, tpu.core_type = #tpu.core_type<tc>, window_params = [{transform_indices = @transform_0, window_bounds = array<i64: 8, 256>}, {pipeline_mode = #tpu.pipeline_mode<synchronous>, transform_indices = @transform_1, window_bounds = array<i64: 256, 64>}, {pipeline_mode = #tpu.pipeline_mode<synchronous>, transform_indices = @transform_2, window_bounds = array<i64: 1, 64>}, {pipeline_mode = #tpu.pipeline_mode<synchronous>, transform_indices = @transform_3, window_bounds = array<i64: 64, 32>}, {pipeline_mode = #tpu.pipeline_mode<synchronous>, transform_indices = @transform_4, window_bounds = array<i64: 1, 32>}, {pipeline_mode = #tpu.pipeline_mode<synchronous>, transform_indices = @transform_5, window_bounds = array<i64: 32, 128>}, {pipeline_mode = #tpu.pipeline_mode<synchronous>, transform_indices = @transform_6, window_bounds = array<i64: 1, 128>}, {transform_indices = @transform_7, window_bounds = array<i64: 8, 128>}]} {
    %c0 = arith.constant 0 : index
    %c0_0 = arith.constant 0 : index
    %0 = vector.load %arg1[%c0, %c0_0] : memref<8x256xf32, #tpu.memory_space<vmem>>, vector<8x256xf32>
    %c0_1 = arith.constant 0 : index
    %c0_2 = arith.constant 0 : index
    %1 = vector.load %arg2[%c0_1, %c0_2] : memref<256x64xf32, #tpu.memory_space<vmem>>, vector<256x64xf32>
    %cst = arith.constant dense<0.000000e+00> : vector<8x64xf32>
    %2 = tpu.matmul %0, %1, %cst {dimension_numbers = #tpu.dot_dimension_numbers<[1], [0], [0], [1], [0, 0, 1, 1], [], []>} : vector<8x256xf32>, vector<256x64xf32>, vector<8x64xf32> -> vector<8x64xf32>
    %c0_3 = arith.constant 0 : index
    %c0_4 = arith.constant 0 : index
    %3 = vector.load %arg3[%c0_3, %c0_4] : memref<1x64xf32, #tpu.memory_space<vmem>>, vector<1x64xf32>
    %4 = vector.broadcast %3 : vector<1x64xf32> to vector<8x64xf32>
    %5 = arith.addf %2, %4 : vector<8x64xf32>
    %cst_5 = arith.constant 0.000000e+00 : f32
    %6 = vector.broadcast %cst_5 : f32 to vector<8x64xf32>
    %7 = arith.maximumf %5, %6 : vector<8x64xf32>
    %c0_6 = arith.constant 0 : index
    %c0_7 = arith.constant 0 : index
    %8 = vector.load %arg4[%c0_6, %c0_7] : memref<64x32xf32, #tpu.memory_space<vmem>>, vector<64x32xf32>
    %cst_8 = arith.constant dense<0.000000e+00> : vector<8x32xf32>
    %9 = tpu.matmul %7, %8, %cst_8 {dimension_numbers = #tpu.dot_dimension_numbers<[1], [0], [0], [1], [0, 0, 1, 1], [], []>} : vector<8x64xf32>, vector<64x32xf32>, vector<8x32xf32> -> vector<8x32xf32>
    %c0_9 = arith.constant 0 : index
    %c0_10 = arith.constant 0 : index
    %10 = vector.load %arg5[%c0_9, %c0_10] : memref<1x32xf32, #tpu.memory_space<vmem>>, vector<1x32xf32>
    %11 = vector.broadcast %10 : vector<1x32xf32> to vector<8x32xf32>
    %12 = arith.addf %9, %11 : vector<8x32xf32>
    %c0_11 = arith.constant 0 : index
    %c0_12 = arith.constant 0 : index
    %13 = vector.load %arg6[%c0_11, %c0_12] : memref<32x128xf32, #tpu.memory_space<vmem>>, vector<32x128xf32>
    %cst_13 = arith.constant dense<0.000000e+00> : vector<8x128xf32>
    %14 = tpu.matmul %12, %13, %cst_13 {dimension_numbers = #tpu.dot_dimension_numbers<[1], [0], [0], [1], [0, 0, 1, 1], [], []>} : vector<8x32xf32>, vector<32x128xf32>, vector<8x128xf32> -> vector<8x128xf32>
    %c0_14 = arith.constant 0 : index
    %c0_15 = arith.constant 0 : index
    %15 = vector.load %arg7[%c0_14, %c0_15] : memref<1x128xf32, #tpu.memory_space<vmem>>, vector<1x128xf32>
    %16 = vector.broadcast %15 : vector<1x128xf32> to vector<8x128xf32>
    %17 = arith.addf %14, %16 : vector<8x128xf32>
    %c0_16 = arith.constant 0 : index
    %c0_17 = arith.constant 0 : index
    %18 = vector.load %arg8[%c0_16, %c0_17] : memref<8x128xf32, #tpu.memory_space<vmem>>, vector<8x128xf32>
    tpu.vector_store %arg8[%c0_16, %c0_17], %17 {strides = array<i32>} : memref<8x128xf32, #tpu.memory_space<vmem>>, vector<8x128xf32>,
    return
  }
  func.func @transform_0(%arg0: i32) -> (i32, i32) {
    %c0_i32 = arith.constant 0 : i32
    %c0_i32_0 = arith.constant 0 : i32
    return %arg0, %c0_i32 : i32, i32
  }
  func.func @transform_1(%arg0: i32) -> (i32, i32) {
    %c0_i32 = arith.constant 0 : i32
    %c0_i32_0 = arith.constant 0 : i32
    %c0_i32_1 = arith.constant 0 : i32
    return %c0_i32, %c0_i32_0 : i32, i32
  }
  func.func @transform_2(%arg0: i32) -> (i32, i32) {
    %c0_i32 = arith.constant 0 : i32
    %c0_i32_0 = arith.constant 0 : i32
    %c0_i32_1 = arith.constant 0 : i32
    return %c0_i32, %c0_i32_0 : i32, i32
  }
  func.func @transform_3(%arg0: i32) -> (i32, i32) {
    %c0_i32 = arith.constant 0 : i32
    %c0_i32_0 = arith.constant 0 : i32
    %c0_i32_1 = arith.constant 0 : i32
    return %c0_i32, %c0_i32_0 : i32, i32
  }
  func.func @transform_4(%arg0: i32) -> (i32, i32) {
    %c0_i32 = arith.constant 0 : i32
    %c0_i32_0 = arith.constant 0 : i32
    %c0_i32_1 = arith.constant 0 : i32
    return %c0_i32, %c0_i32_0 : i32, i32
  }
  func.func @transform_5(%arg0: i32) -> (i32, i32) {
    %c0_i32 = arith.constant 0 : i32
    %c0_i32_0 = arith.constant 0 : i32
    %c0_i32_1 = arith.constant 0 : i32
    return %c0_i32, %c0_i32_0 : i32, i32
  }
  func.func @transform_6(%arg0: i32) -> (i32, i32) {
    %c0_i32 = arith.constant 0 : i32
    %c0_i32_0 = arith.constant 0 : i32
    %c0_i32_1 = arith.constant 0 : i32
    return %c0_i32, %c0_i32_0 : i32, i32
  }
  func.func @transform_7(%arg0: i32) -> (i32, i32) {
    %c0_i32 = arith.constant 0 : i32
    %c0_i32_0 = arith.constant 0 : i32
    return %arg0, %c0_i32 : i32, i32
  }
}

module attributes {stable_mosaic.version = 11 : i64} {
  func.func @_lstm_head_kernel(%arg0: i32, %arg1: memref<4x2x128xf32, #tpu.memory_space<vmem>>, %arg2: memref<32x128xf32, #tpu.memory_space<vmem>>, %arg3: memref<32x6xf32, #tpu.memory_space<vmem>>, %arg4: memref<1x6xf32, #tpu.memory_space<vmem>>, %arg5: memref<4x2x6xf32, #tpu.memory_space<vmem>>) attributes {dimension_semantics = [#tpu.dimension_semantics<arbitrary>], iteration_bounds = array<i64: 1>, scalar_prefetch = 0 : i64, scratch_operands = 0 : i64, tpu.core_type = #tpu.core_type<tc>, window_params = [{pipeline_mode = #tpu.pipeline_mode<synchronous>, transform_indices = @transform_0, window_bounds = array<i64: 4, 2, 128>}, {pipeline_mode = #tpu.pipeline_mode<synchronous>, transform_indices = @transform_1, window_bounds = array<i64: 32, 128>}, {pipeline_mode = #tpu.pipeline_mode<synchronous>, transform_indices = @transform_2, window_bounds = array<i64: 32, 6>}, {pipeline_mode = #tpu.pipeline_mode<synchronous>, transform_indices = @transform_3, window_bounds = array<i64: 1, 6>}, {pipeline_mode = #tpu.pipeline_mode<synchronous>, transform_indices = @transform_4, window_bounds = array<i64: 4, 2, 6>}]} {
    %cst = arith.constant 0.000000e+00 : f32
    %0 = vector.broadcast %cst : f32 to vector<2x32xf32>
    %cst_0 = arith.constant 0.000000e+00 : f32
    %1 = vector.broadcast %cst_0 : f32 to vector<2x32xf32>
    %c0 = arith.constant 0 : index
    %c0_1 = arith.constant 0 : index
    %c0_2 = arith.constant 0 : index
    %2 = vector.load %arg1[%c0, %c0_1, %c0_2] : memref<4x2x128xf32, #tpu.memory_space<vmem>>, vector<1x2x128xf32>
    %3 = vector.shape_cast %2 : vector<1x2x128xf32> to vector<2x128xf32>
    %c0_3 = arith.constant 0 : index
    %c0_4 = arith.constant 0 : index
    %4 = vector.load %arg2[%c0_3, %c0_4] : memref<32x128xf32, #tpu.memory_space<vmem>>, vector<32x128xf32>
    %cst_5 = arith.constant dense<0.000000e+00> : vector<2x128xf32>
    %5 = tpu.matmul %0, %4, %cst_5 {dimension_numbers = #tpu.dot_dimension_numbers<[1], [0], [0], [1], [0, 0, 1, 1], [], []>} : vector<2x32xf32>, vector<32x128xf32>, vector<2x128xf32> -> vector<2x128xf32>
    %6 = arith.addf %3, %5 : vector<2x128xf32>
    %7 = vector.extract_strided_slice %6 {offsets = [0, 0], sizes = [2, 32], strides = [1, 1]} : vector<2x128xf32> to vector<2x32xf32>
    %8 = arith.negf %7 : vector<2x32xf32>
    %9 = math.exp %8 : vector<2x32xf32>
    %cst_6 = arith.constant 1.000000e+00 : f32
    %10 = vector.broadcast %cst_6 : f32 to vector<2x32xf32>
    %11 = arith.addf %10, %9 : vector<2x32xf32>
    %12 = arith.divf %10, %11 : vector<2x32xf32>
    %13 = vector.extract_strided_slice %6 {offsets = [0, 32], sizes = [2, 32], strides = [1, 1]} : vector<2x128xf32> to vector<2x32xf32>
    %14 = arith.negf %13 : vector<2x32xf32>
    %15 = math.exp %14 : vector<2x32xf32>
    %cst_7 = arith.constant 1.000000e+00 : f32
    %16 = vector.broadcast %cst_7 : f32 to vector<2x32xf32>
    %17 = arith.addf %16, %15 : vector<2x32xf32>
    %18 = arith.divf %16, %17 : vector<2x32xf32>
    %19 = vector.extract_strided_slice %6 {offsets = [0, 64], sizes = [2, 32], strides = [1, 1]} : vector<2x128xf32> to vector<2x32xf32>
    %20 = math.tanh %19 : vector<2x32xf32>
    %21 = vector.extract_strided_slice %6 {offsets = [0, 96], sizes = [2, 32], strides = [1, 1]} : vector<2x128xf32> to vector<2x32xf32>
    %22 = arith.negf %21 : vector<2x32xf32>
    %23 = math.exp %22 : vector<2x32xf32>
    %cst_8 = arith.constant 1.000000e+00 : f32
    %24 = vector.broadcast %cst_8 : f32 to vector<2x32xf32>
    %25 = arith.addf %24, %23 : vector<2x32xf32>
    %26 = arith.divf %24, %25 : vector<2x32xf32>
    %27 = arith.mulf %18, %1 : vector<2x32xf32>
    %28 = arith.mulf %12, %20 : vector<2x32xf32>
    %29 = arith.addf %27, %28 : vector<2x32xf32>
    %30 = math.tanh %29 : vector<2x32xf32>
    %31 = arith.mulf %26, %30 : vector<2x32xf32>
    %c0_9 = arith.constant 0 : index
    %c0_10 = arith.constant 0 : index
    %32 = vector.load %arg3[%c0_9, %c0_10] : memref<32x6xf32, #tpu.memory_space<vmem>>, vector<32x6xf32>
    %cst_11 = arith.constant dense<0.000000e+00> : vector<2x6xf32>
    %33 = tpu.matmul %31, %32, %cst_11 {dimension_numbers = #tpu.dot_dimension_numbers<[1], [0], [0], [1], [0, 0, 1, 1], [], []>} : vector<2x32xf32>, vector<32x6xf32>, vector<2x6xf32> -> vector<2x6xf32>
    %c0_12 = arith.constant 0 : index
    %c0_13 = arith.constant 0 : index
    %34 = vector.load %arg4[%c0_12, %c0_13] : memref<1x6xf32, #tpu.memory_space<vmem>>, vector<1x6xf32>
    %35 = vector.broadcast %34 : vector<1x6xf32> to vector<2x6xf32>
    %36 = arith.addf %33, %35 : vector<2x6xf32>
    %c0_14 = arith.constant 0 : index
    %c0_15 = arith.constant 0 : index
    %c0_16 = arith.constant 0 : index
    %37 = vector.load %arg5[%c0_14, %c0_15, %c0_16] : memref<4x2x6xf32, #tpu.memory_space<vmem>>, vector<1x2x6xf32>
    %38 = vector.shape_cast %37 : vector<1x2x6xf32> to vector<2x6xf32>
    %39 = vector.shape_cast %36 : vector<2x6xf32> to vector<1x2x6xf32>
    tpu.vector_store %arg5[%c0_14, %c0_15, %c0_16], %39 {strides = array<i32>} : memref<4x2x6xf32, #tpu.memory_space<vmem>>, vector<1x2x6xf32>,
    %c1 = arith.constant 1 : index
    %c0_17 = arith.constant 0 : index
    %c0_18 = arith.constant 0 : index
    %40 = vector.load %arg1[%c1, %c0_17, %c0_18] : memref<4x2x128xf32, #tpu.memory_space<vmem>>, vector<1x2x128xf32>
    %41 = vector.shape_cast %40 : vector<1x2x128xf32> to vector<2x128xf32>
    %c0_19 = arith.constant 0 : index
    %c0_20 = arith.constant 0 : index
    %42 = vector.load %arg2[%c0_19, %c0_20] : memref<32x128xf32, #tpu.memory_space<vmem>>, vector<32x128xf32>
    %cst_21 = arith.constant dense<0.000000e+00> : vector<2x128xf32>
    %43 = tpu.matmul %31, %42, %cst_21 {dimension_numbers = #tpu.dot_dimension_numbers<[1], [0], [0], [1], [0, 0, 1, 1], [], []>} : vector<2x32xf32>, vector<32x128xf32>, vector<2x128xf32> -> vector<2x128xf32>
    %44 = arith.addf %41, %43 : vector<2x128xf32>
    %45 = vector.extract_strided_slice %44 {offsets = [0, 0], sizes = [2, 32], strides = [1, 1]} : vector<2x128xf32> to vector<2x32xf32>
    %46 = arith.negf %45 : vector<2x32xf32>
    %47 = math.exp %46 : vector<2x32xf32>
    %cst_22 = arith.constant 1.000000e+00 : f32
    %48 = vector.broadcast %cst_22 : f32 to vector<2x32xf32>
    %49 = arith.addf %48, %47 : vector<2x32xf32>
    %50 = arith.divf %48, %49 : vector<2x32xf32>
    %51 = vector.extract_strided_slice %44 {offsets = [0, 32], sizes = [2, 32], strides = [1, 1]} : vector<2x128xf32> to vector<2x32xf32>
    %52 = arith.negf %51 : vector<2x32xf32>
    %53 = math.exp %52 : vector<2x32xf32>
    %cst_23 = arith.constant 1.000000e+00 : f32
    %54 = vector.broadcast %cst_23 : f32 to vector<2x32xf32>
    %55 = arith.addf %54, %53 : vector<2x32xf32>
    %56 = arith.divf %54, %55 : vector<2x32xf32>
    %57 = vector.extract_strided_slice %44 {offsets = [0, 64], sizes = [2, 32], strides = [1, 1]} : vector<2x128xf32> to vector<2x32xf32>
    %58 = math.tanh %57 : vector<2x32xf32>
    %59 = vector.extract_strided_slice %44 {offsets = [0, 96], sizes = [2, 32], strides = [1, 1]} : vector<2x128xf32> to vector<2x32xf32>
    %60 = arith.negf %59 : vector<2x32xf32>
    %61 = math.exp %60 : vector<2x32xf32>
    %cst_24 = arith.constant 1.000000e+00 : f32
    %62 = vector.broadcast %cst_24 : f32 to vector<2x32xf32>
    %63 = arith.addf %62, %61 : vector<2x32xf32>
    %64 = arith.divf %62, %63 : vector<2x32xf32>
    %65 = arith.mulf %56, %29 : vector<2x32xf32>
    %66 = arith.mulf %50, %58 : vector<2x32xf32>
    %67 = arith.addf %65, %66 : vector<2x32xf32>
    %68 = math.tanh %67 : vector<2x32xf32>
    %69 = arith.mulf %64, %68 : vector<2x32xf32>
    %c0_25 = arith.constant 0 : index
    %c0_26 = arith.constant 0 : index
    %70 = vector.load %arg3[%c0_25, %c0_26] : memref<32x6xf32, #tpu.memory_space<vmem>>, vector<32x6xf32>
    %cst_27 = arith.constant dense<0.000000e+00> : vector<2x6xf32>
    %71 = tpu.matmul %69, %70, %cst_27 {dimension_numbers = #tpu.dot_dimension_numbers<[1], [0], [0], [1], [0, 0, 1, 1], [], []>} : vector<2x32xf32>, vector<32x6xf32>, vector<2x6xf32> -> vector<2x6xf32>
    %c0_28 = arith.constant 0 : index
    %c0_29 = arith.constant 0 : index
    %72 = vector.load %arg4[%c0_28, %c0_29] : memref<1x6xf32, #tpu.memory_space<vmem>>, vector<1x6xf32>
    %73 = vector.broadcast %72 : vector<1x6xf32> to vector<2x6xf32>
    %74 = arith.addf %71, %73 : vector<2x6xf32>
    %c1_30 = arith.constant 1 : index
    %c0_31 = arith.constant 0 : index
    %c0_32 = arith.constant 0 : index
    %75 = vector.load %arg5[%c1_30, %c0_31, %c0_32] : memref<4x2x6xf32, #tpu.memory_space<vmem>>, vector<1x2x6xf32>
    %76 = vector.shape_cast %75 : vector<1x2x6xf32> to vector<2x6xf32>
    %77 = vector.shape_cast %74 : vector<2x6xf32> to vector<1x2x6xf32>
    tpu.vector_store %arg5[%c1_30, %c0_31, %c0_32], %77 {strides = array<i32>} : memref<4x2x6xf32, #tpu.memory_space<vmem>>, vector<1x2x6xf32>,
    %c2 = arith.constant 2 : index
    %c0_33 = arith.constant 0 : index
    %c0_34 = arith.constant 0 : index
    %78 = vector.load %arg1[%c2, %c0_33, %c0_34] : memref<4x2x128xf32, #tpu.memory_space<vmem>>, vector<1x2x128xf32>
    %79 = vector.shape_cast %78 : vector<1x2x128xf32> to vector<2x128xf32>
    %c0_35 = arith.constant 0 : index
    %c0_36 = arith.constant 0 : index
    %80 = vector.load %arg2[%c0_35, %c0_36] : memref<32x128xf32, #tpu.memory_space<vmem>>, vector<32x128xf32>
    %cst_37 = arith.constant dense<0.000000e+00> : vector<2x128xf32>
    %81 = tpu.matmul %69, %80, %cst_37 {dimension_numbers = #tpu.dot_dimension_numbers<[1], [0], [0], [1], [0, 0, 1, 1], [], []>} : vector<2x32xf32>, vector<32x128xf32>, vector<2x128xf32> -> vector<2x128xf32>
    %82 = arith.addf %79, %81 : vector<2x128xf32>
    %83 = vector.extract_strided_slice %82 {offsets = [0, 0], sizes = [2, 32], strides = [1, 1]} : vector<2x128xf32> to vector<2x32xf32>
    %84 = arith.negf %83 : vector<2x32xf32>
    %85 = math.exp %84 : vector<2x32xf32>
    %cst_38 = arith.constant 1.000000e+00 : f32
    %86 = vector.broadcast %cst_38 : f32 to vector<2x32xf32>
    %87 = arith.addf %86, %85 : vector<2x32xf32>
    %88 = arith.divf %86, %87 : vector<2x32xf32>
    %89 = vector.extract_strided_slice %82 {offsets = [0, 32], sizes = [2, 32], strides = [1, 1]} : vector<2x128xf32> to vector<2x32xf32>
    %90 = arith.negf %89 : vector<2x32xf32>
    %91 = math.exp %90 : vector<2x32xf32>
    %cst_39 = arith.constant 1.000000e+00 : f32
    %92 = vector.broadcast %cst_39 : f32 to vector<2x32xf32>
    %93 = arith.addf %92, %91 : vector<2x32xf32>
    %94 = arith.divf %92, %93 : vector<2x32xf32>
    %95 = vector.extract_strided_slice %82 {offsets = [0, 64], sizes = [2, 32], strides = [1, 1]} : vector<2x128xf32> to vector<2x32xf32>
    %96 = math.tanh %95 : vector<2x32xf32>
    %97 = vector.extract_strided_slice %82 {offsets = [0, 96], sizes = [2, 32], strides = [1, 1]} : vector<2x128xf32> to vector<2x32xf32>
    %98 = arith.negf %97 : vector<2x32xf32>
    %99 = math.exp %98 : vector<2x32xf32>
    %cst_40 = arith.constant 1.000000e+00 : f32
    %100 = vector.broadcast %cst_40 : f32 to vector<2x32xf32>
    %101 = arith.addf %100, %99 : vector<2x32xf32>
    %102 = arith.divf %100, %101 : vector<2x32xf32>
    %103 = arith.mulf %94, %67 : vector<2x32xf32>
    %104 = arith.mulf %88, %96 : vector<2x32xf32>
    %105 = arith.addf %103, %104 : vector<2x32xf32>
    %106 = math.tanh %105 : vector<2x32xf32>
    %107 = arith.mulf %102, %106 : vector<2x32xf32>
    %c0_41 = arith.constant 0 : index
    %c0_42 = arith.constant 0 : index
    %108 = vector.load %arg3[%c0_41, %c0_42] : memref<32x6xf32, #tpu.memory_space<vmem>>, vector<32x6xf32>
    %cst_43 = arith.constant dense<0.000000e+00> : vector<2x6xf32>
    %109 = tpu.matmul %107, %108, %cst_43 {dimension_numbers = #tpu.dot_dimension_numbers<[1], [0], [0], [1], [0, 0, 1, 1], [], []>} : vector<2x32xf32>, vector<32x6xf32>, vector<2x6xf32> -> vector<2x6xf32>
    %c0_44 = arith.constant 0 : index
    %c0_45 = arith.constant 0 : index
    %110 = vector.load %arg4[%c0_44, %c0_45] : memref<1x6xf32, #tpu.memory_space<vmem>>, vector<1x6xf32>
    %111 = vector.broadcast %110 : vector<1x6xf32> to vector<2x6xf32>
    %112 = arith.addf %109, %111 : vector<2x6xf32>
    %c2_46 = arith.constant 2 : index
    %c0_47 = arith.constant 0 : index
    %c0_48 = arith.constant 0 : index
    %113 = vector.load %arg5[%c2_46, %c0_47, %c0_48] : memref<4x2x6xf32, #tpu.memory_space<vmem>>, vector<1x2x6xf32>
    %114 = vector.shape_cast %113 : vector<1x2x6xf32> to vector<2x6xf32>
    %115 = vector.shape_cast %112 : vector<2x6xf32> to vector<1x2x6xf32>
    tpu.vector_store %arg5[%c2_46, %c0_47, %c0_48], %115 {strides = array<i32>} : memref<4x2x6xf32, #tpu.memory_space<vmem>>, vector<1x2x6xf32>,
    %c3 = arith.constant 3 : index
    %c0_49 = arith.constant 0 : index
    %c0_50 = arith.constant 0 : index
    %116 = vector.load %arg1[%c3, %c0_49, %c0_50] : memref<4x2x128xf32, #tpu.memory_space<vmem>>, vector<1x2x128xf32>
    %117 = vector.shape_cast %116 : vector<1x2x128xf32> to vector<2x128xf32>
    %c0_51 = arith.constant 0 : index
    %c0_52 = arith.constant 0 : index
    %118 = vector.load %arg2[%c0_51, %c0_52] : memref<32x128xf32, #tpu.memory_space<vmem>>, vector<32x128xf32>
    %cst_53 = arith.constant dense<0.000000e+00> : vector<2x128xf32>
    %119 = tpu.matmul %107, %118, %cst_53 {dimension_numbers = #tpu.dot_dimension_numbers<[1], [0], [0], [1], [0, 0, 1, 1], [], []>} : vector<2x32xf32>, vector<32x128xf32>, vector<2x128xf32> -> vector<2x128xf32>
    %120 = arith.addf %117, %119 : vector<2x128xf32>
    %121 = vector.extract_strided_slice %120 {offsets = [0, 0], sizes = [2, 32], strides = [1, 1]} : vector<2x128xf32> to vector<2x32xf32>
    %122 = arith.negf %121 : vector<2x32xf32>
    %123 = math.exp %122 : vector<2x32xf32>
    %cst_54 = arith.constant 1.000000e+00 : f32
    %124 = vector.broadcast %cst_54 : f32 to vector<2x32xf32>
    %125 = arith.addf %124, %123 : vector<2x32xf32>
    %126 = arith.divf %124, %125 : vector<2x32xf32>
    %127 = vector.extract_strided_slice %120 {offsets = [0, 32], sizes = [2, 32], strides = [1, 1]} : vector<2x128xf32> to vector<2x32xf32>
    %128 = arith.negf %127 : vector<2x32xf32>
    %129 = math.exp %128 : vector<2x32xf32>
    %cst_55 = arith.constant 1.000000e+00 : f32
    %130 = vector.broadcast %cst_55 : f32 to vector<2x32xf32>
    %131 = arith.addf %130, %129 : vector<2x32xf32>
    %132 = arith.divf %130, %131 : vector<2x32xf32>
    %133 = vector.extract_strided_slice %120 {offsets = [0, 64], sizes = [2, 32], strides = [1, 1]} : vector<2x128xf32> to vector<2x32xf32>
    %134 = math.tanh %133 : vector<2x32xf32>
    %135 = vector.extract_strided_slice %120 {offsets = [0, 96], sizes = [2, 32], strides = [1, 1]} : vector<2x128xf32> to vector<2x32xf32>
    %136 = arith.negf %135 : vector<2x32xf32>
    %137 = math.exp %136 : vector<2x32xf32>
    %cst_56 = arith.constant 1.000000e+00 : f32
    %138 = vector.broadcast %cst_56 : f32 to vector<2x32xf32>
    %139 = arith.addf %138, %137 : vector<2x32xf32>
    %140 = arith.divf %138, %139 : vector<2x32xf32>
    %141 = arith.mulf %132, %105 : vector<2x32xf32>
    %142 = arith.mulf %126, %134 : vector<2x32xf32>
    %143 = arith.addf %141, %142 : vector<2x32xf32>
    %144 = math.tanh %143 : vector<2x32xf32>
    %145 = arith.mulf %140, %144 : vector<2x32xf32>
    %c0_57 = arith.constant 0 : index
    %c0_58 = arith.constant 0 : index
    %146 = vector.load %arg3[%c0_57, %c0_58] : memref<32x6xf32, #tpu.memory_space<vmem>>, vector<32x6xf32>
    %cst_59 = arith.constant dense<0.000000e+00> : vector<2x6xf32>
    %147 = tpu.matmul %145, %146, %cst_59 {dimension_numbers = #tpu.dot_dimension_numbers<[1], [0], [0], [1], [0, 0, 1, 1], [], []>} : vector<2x32xf32>, vector<32x6xf32>, vector<2x6xf32> -> vector<2x6xf32>
    %c0_60 = arith.constant 0 : index
    %c0_61 = arith.constant 0 : index
    %148 = vector.load %arg4[%c0_60, %c0_61] : memref<1x6xf32, #tpu.memory_space<vmem>>, vector<1x6xf32>
    %149 = vector.broadcast %148 : vector<1x6xf32> to vector<2x6xf32>
    %150 = arith.addf %147, %149 : vector<2x6xf32>
    %c3_62 = arith.constant 3 : index
    %c0_63 = arith.constant 0 : index
    %c0_64 = arith.constant 0 : index
    %151 = vector.load %arg5[%c3_62, %c0_63, %c0_64] : memref<4x2x6xf32, #tpu.memory_space<vmem>>, vector<1x2x6xf32>
    %152 = vector.shape_cast %151 : vector<1x2x6xf32> to vector<2x6xf32>
    %153 = vector.shape_cast %150 : vector<2x6xf32> to vector<1x2x6xf32>
    tpu.vector_store %arg5[%c3_62, %c0_63, %c0_64], %153 {strides = array<i32>} : memref<4x2x6xf32, #tpu.memory_space<vmem>>, vector<1x2x6xf32>,
    return
  }
  func.func @transform_0(%arg0: i32) -> (i32, i32, i32) {
    %c0_i32 = arith.constant 0 : i32
    %c0_i32_0 = arith.constant 0 : i32
    %c0_i32_1 = arith.constant 0 : i32
    %c0_i32_2 = arith.constant 0 : i32
    return %c0_i32, %c0_i32_0, %c0_i32_1 : i32, i32, i32
  }
  func.func @transform_1(%arg0: i32) -> (i32, i32) {
    %c0_i32 = arith.constant 0 : i32
    %c0_i32_0 = arith.constant 0 : i32
    %c0_i32_1 = arith.constant 0 : i32
    return %c0_i32, %c0_i32_0 : i32, i32
  }
  func.func @transform_2(%arg0: i32) -> (i32, i32) {
    %c0_i32 = arith.constant 0 : i32
    %c0_i32_0 = arith.constant 0 : i32
    %c0_i32_1 = arith.constant 0 : i32
    return %c0_i32, %c0_i32_0 : i32, i32
  }
  func.func @transform_3(%arg0: i32) -> (i32, i32) {
    %c0_i32 = arith.constant 0 : i32
    %c0_i32_0 = arith.constant 0 : i32
    %c0_i32_1 = arith.constant 0 : i32
    return %c0_i32, %c0_i32_0 : i32, i32
  }
  func.func @transform_4(%arg0: i32) -> (i32, i32, i32) {
    %c0_i32 = arith.constant 0 : i32
    %c0_i32_0 = arith.constant 0 : i32
    %c0_i32_1 = arith.constant 0 : i32
    %c0_i32_2 = arith.constant 0 : i32
    return %c0_i32, %c0_i32_0, %c0_i32_1 : i32, i32, i32
  }
}

</mosaic_0001>

<llo_original>
// kernel: lstm_cnn_forward.5
$region0: #{lstm_cnn_forward.5}
  #allocation0 [shape = 'u32[]', space=smem, size = 0x4, offset = 0x4, fixed_abs, tag = 'smem constant byte address 0x4 - core index']
  #allocation1 [shape = 'u32[144,128]{1,0:T(1,128)}', space=vmem, size = 0x12000, scoped, tag = 'internal scratch']
  %s0 = inlined_call_operand.vmem [shape: bf16[3584,75], index: 0, kind: input, shape index: {}]
  %s1 = inlined_call_operand.vmem [shape: bf16[75,16], index: 1, kind: input, shape index: {}]
  %s2 = inlined_call_operand.vmem [shape: f32[1,16], index: 2, kind: input, shape index: {}]
  %s3 = inlined_call_operand.vmem [shape: bf16[3584,16], index: 3, kind: output, shape index: {}]
  %s4 = sld [smem:[#allocation0]]
  $region45: #{lstm_cnn_forward.5} parent=0
    _
  %s6 = ssub.s32 1, %s4
  %s7 = scalar_select 0, %s6, %s4
  loop: start=0, step=1, limit=9
  $region2: #{lstm_cnn_forward.5} parent=0 // loop_pre_header
    _
  $region3: #{lstm_cnn_forward.5} parent=0 // loop_header
    %s9 = sphi 0, %s13
    %p10 = scmp.ge.s32.totalorder %s9, 9
    %s19 = sphi 0, %s21
    %s22 = sphi 0, %s19
    %s23 = sphi 0, %s22
    %s39 = sphi 0, %s23
    %s43 = sphi 0, %s43
    %s45 = sphi 0, %s43
    %s46 = sphi 0, %s45
    %s60 = sphi 0, %s46
    %s64 = sphi 0, %s64
    %s66 = sphi 0, %s64
    %s67 = sphi 0, %s66
    %s81 = sphi 0, %s67
    %s87 = sphi 0, %s89
    %s90 = sphi 0, %s87
    %s91 = sphi 0, %s90
    %s107 = sphi 0, %s91
  $region4: #{lstm_cnn_forward.5} parent=0 // loop_header_branch
    %12 = sbr.rel (%p10) target = $region8
  $region5: #{lstm_cnn_forward.5} parent=0 // loop_body
    %s14 = ssub.s32 %s9, 1
    %s15 = ssub.s32 %s9, 2
    %s16 = sadd.s32 %s9, 1
    %s17 = ssub.s32 %s9, %s16
    %p18 = scmp.eq.s32.totalorder %s17, 0
    %s20 = sadd.s32 %s19, 1
    %s21 = scalar_select %p18, %s19, %s20
    %p24 = pneg %p18
    %p25 = scmp.eq.s32.totalorder %s9, 6
    %p26 = por %p24, %p25
    %p27 = scmp.ne.s32.totalorder %s19, %s22
    %p28 = scmp.eq.s32.totalorder %s9, 0
    %p29 = por %p27, %p28
    %p30 = scmp.ne.s32.totalorder %s19, %s22
    %p31 = scmp.eq.s32.totalorder %s14, 6
    %p32 = por %p30, %p31
    %p33 = scmp.ne.s32.totalorder %s22, %s23
    %p34 = scmp.eq.s32.totalorder %s14, 0
    %p35 = por %p33, %p34
    %p36 = scmp.ne.s32.totalorder %s22, %s23
    %p37 = scmp.eq.s32.totalorder %s15, 6
    %p38 = por %p36, %p37
    %p40 = scmp.ne.s32.totalorder %s23, %s39
    %p41 = scmp.eq.s32.totalorder %s15, 0
    %p42 = por %p40, %p41
    %s44 = sadd.s32 %s43, 1
    %p47 = scmp.eq.s32.totalorder %s9, 6
    %p48 = scmp.ne.s32.totalorder %s43, %s45
    %p49 = scmp.eq.s32.totalorder %s9, 0
    %p50 = por %p48, %p49
    %p51 = scmp.ne.s32.totalorder %s43, %s45
    %p52 = scmp.eq.s32.totalorder %s14, 6
    %p53 = por %p51, %p52
    %p54 = scmp.ne.s32.totalorder %s45, %s46
    %p55 = scmp.eq.s32.totalorder %s14, 0
    %p56 = por %p54, %p55
    %p57 = scmp.ne.s32.totalorder %s45, %s46
    %p58 = scmp.eq.s32.totalorder %s15, 6
    %p59 = por %p57, %p58
    %p61 = scmp.ne.s32.totalorder %s46, %s60
    %p62 = scmp.eq.s32.totalorder %s15, 0
    %p63 = por %p61, %p62
    %s65 = sadd.s32 %s64, 1
    %p68 = scmp.eq.s32.totalorder %s9, 6
    %p69 = scmp.ne.s32.totalorder %s64, %s66
    %p70 = scmp.eq.s32.totalorder %s9, 0
    %p71 = por %p69, %p70
    %p72 = scmp.ne.s32.totalorder %s64, %s66
    %p73 = scmp.eq.s32.totalorder %s14, 6
    %p74 = por %p72, %p73
    %p75 = scmp.ne.s32.totalorder %s66, %s67
    %p76 = scmp.eq.s32.totalorder %s14, 0
    %p77 = por %p75, %p76
    %p78 = scmp.ne.s32.totalorder %s66, %s67
    %p79 = scmp.eq.s32.totalorder %s15, 6
    %p80 = por %p78, %p79
    %p82 = scmp.ne.s32.totalorder %s67, %s81
    %p83 = scmp.eq.s32.totalorder %s15, 0
    %p84 = por %p82, %p83
    %s85 = ssub.s32 %s9, %s16
    %p86 = scmp.eq.s32.totalorder %s85, 0
    %s88 = sadd.s32 %s87, 1
    %s89 = scalar_select %p86, %s87, %s88
    %p92 = pneg %p86
    %p93 = scmp.eq.s32.totalorder %s9, 6
    %p94 = por %p92, %p93
    %p95 = scmp.ne.s32.totalorder %s87, %s90
    %p96 = scmp.eq.s32.totalorder %s9, 0
    %p97 = por %p95, %p96
    %p98 = scmp.ne.s32.totalorder %s87, %s90
    %p99 = scmp.eq.s32.totalorder %s14, 6
    %p100 = por %p98, %p99
    %p101 = scmp.ne.s32.totalorder %s90, %s91
    %p102 = scmp.eq.s32.totalorder %s14, 0
    %p103 = por %p101, %p102
    %p104 = scmp.ne.s32.totalorder %s90, %s91
    %p105 = scmp.eq.s32.totalorder %s15, 6
    %p106 = por %p104, %p105
    %p108 = scmp.ne.s32.totalorder %s91, %s107
    %p109 = scmp.eq.s32.totalorder %s15, 0
    %p110 = por %p108, %p109
    %p111 = scmp.le.s32.totalorder 1, %s9
    %p112 = scmp.lt.s32.totalorder %s9, 8
    %p113 = pnand %p111, %p112
    %p114 = pneg %p113
    // Predicated region
    $region9: #{lstm_cnn_forward.5} parent=5 // pred_check
      _
    $region10: #{lstm_cnn_forward.5} parent=5 // pred_check_branch
      %116 = sbr.rel (%p113) target = $region12
    $region11: #{lstm_cnn_forward.5} parent=5 // pred_region
      %s117 = ssub.s32 %s9, 1
      // Predicated region
      $region13: #{lstm_cnn_forward.5} parent=11 // pred_check
        %p118 = pneg %p56
      $region14: #{lstm_cnn_forward.5} parent=11 // pred_check_branch
        %120 = sbr.rel (%p118) target = $region16
      $region15: #{lstm_cnn_forward.5} parent=11 // pred_region
        _
      $region16: #{lstm_cnn_forward.5} parent=11 // pred_fallthru
        _
      // Predicated region
      $region17: #{lstm_cnn_forward.5} parent=11 // pred_check
        %p121 = pneg %p77
      $region18: #{lstm_cnn_forward.5} parent=11 // pred_check_branch
        %123 = sbr.rel (%p121) target = $region20
      $region19: #{lstm_cnn_forward.5} parent=11 // pred_region
        _
      $region20: #{lstm_cnn_forward.5} parent=11 // pred_fallthru
        _
    $region12: #{lstm_cnn_forward.5} parent=5 // pred_fallthru
      _
    %p124 = scmp.lt.s32.totalorder %s9, 7
    // Predicated region
    $region21: #{lstm_cnn_forward.5} parent=5 // pred_check
      %p125 = pneg %p124
    $region22: #{lstm_cnn_forward.5} parent=5 // pred_check_branch
      %127 = sbr.rel (%p125) target = $region24
    $region23: #{lstm_cnn_forward.5} parent=5 // pred_region
      // Predicated region
      $region25: #{lstm_cnn_forward.5} parent=23 // pred_check
        %p128 = pneg %p29
      $region26: #{lstm_cnn_forward.5} parent=23 // pred_check_branch
        %130 = sbr.rel (%p128) target = $region28
      $region27: #{lstm_cnn_forward.5} parent=23 // pred_region
        %s131 = smul.u32 64, %s9
        %p132 = scmp.lt.s32.totalorder %s131, 447
        %s133 = scalar_select %p132, %s131, 447
        %s134 = smul.addr %s133, 4
        %s135 = scalar_lea.vmem %s0, %s134
        %s136 = smul.u32 64, %s9
      $region28: #{lstm_cnn_forward.5} parent=23 // pred_fallthru
        _
    $region24: #{lstm_cnn_forward.5} parent=5 // pred_fallthru
      _
    %p137 = scmp.le.s32.totalorder 1, %s9
    %p138 = scmp.lt.s32.totalorder %s9, 8
    %p139 = pnand %p137, %p138
    %p140 = pneg %p139
    // Predicated region
    $region29: #{lstm_cnn_forward.5} parent=5 // pred_check
      _
    $region30: #{lstm_cnn_forward.5} parent=5 // pred_check_branch
      %142 = sbr.rel (%p139) target = $region32
    $region31: #{lstm_cnn_forward.5} parent=5 // pred_region
      %s143 = ssub.s32 %s9, 1
      %s144 = smul.u32 64, %s14
      %p145 = scmp.lt.s32.totalorder %s144, 447
      %s146 = scalar_select %p145, %s144, 447
      %s147 = smul.addr %s146, 4
      %s148 = scalar_lea.vmem %s0, %s147
      %p149 = pneg %p35
      %p150 = pneg %p32
      %p151 = pneg %p56
      %p152 = pneg %p53
      %p153 = pneg %p77
      %p154 = pneg %p74
      %p155 = pneg %p103
      %p156 = pneg %p100
      %s157 = smul.u32 64, %s14
      %p158 = scmp.lt.s32.totalorder %s157, 447
      %s159 = scalar_select %p158, %s157, 447
      %s160 = smul.addr %s159, 4
      %s161 = scalar_lea.vmem %s3, %s160
      %s162 = smul.u32 64, %s14
      %p163 = scmp.lt.s32.totalorder %s162, 447
      %s164 = scalar_select %p163, %s162, 447
      %s165 = smul.addr %s164, 4
      %s166 = scalar_lea.vmem %s0, %s165
      %s167 = smul.u32 64, %s14
      %s168 = smul.u32 64, %s14
      %p169 = scmp.lt.s32.totalorder %s168, 447
      %s170 = scalar_select %p169, %s168, 447
      %s171 = smul.addr %s170, 4
      %s172 = scalar_lea.vmem %s3, %s171
      %s173 = smul.u32 64, %s14
      %v175 = vld [vmem:[%s166] sm:$0xf]
      %v176 = vld [vmem:[%s166 + $0x4] sm:$0xf]
      %v177 = vld [vmem:[%s166 + $0x8] sm:$0xf]
      %v178 = vld [vmem:[%s166 + $0xc] sm:$0xf]
      %v179 = vld [vmem:[%s166 + $0x10] sm:$0xf]
      %v180 = vld [vmem:[%s166 + $0x14] sm:$0xf]
      %v181 = vld [vmem:[%s166 + $0x18] sm:$0xf]
      %v182 = vld [vmem:[%s166 + $0x1c] sm:$0xf]
      %v183 = vld [vmem:[%s166 + $0x20] sm:$0xf]
      %v184 = vld [vmem:[%s166 + $0x24] sm:$0xf]
      %v185 = vld [vmem:[%s166 + $0x28] sm:$0xf]
      %v186 = vld [vmem:[%s166 + $0x2c] sm:$0xf]
      %v187 = vld [vmem:[%s166 + $0x30] sm:$0xf]
      %v188 = vld [vmem:[%s166 + $0x34] sm:$0xf]
      %v189 = vld [vmem:[%s166 + $0x38] sm:$0xf]
      %v190 = vld [vmem:[%s166 + $0x3c] sm:$0xf]
      %v191 = vld [vmem:[%s166 + $0x40] sm:$0xf]
      %v192 = vld [vmem:[%s166 + $0x44] sm:$0xf]
      %v193 = vld [vmem:[%s166 + $0x48] sm:$0xf]
      %v194 = vld [vmem:[%s166 + $0x4c] sm:$0xf]
      %v195 = vld [vmem:[%s166 + $0x50] sm:$0xf]
      %v196 = vld [vmem:[%s166 + $0x54] sm:$0xf]
      %v197 = vld [vmem:[%s166 + $0x58] sm:$0xf]
      %v198 = vld [vmem:[%s166 + $0x5c] sm:$0xf]
      %v199 = vld [vmem:[%s166 + $0x60] sm:$0xf]
      %v200 = vld [vmem:[%s166 + $0x64] sm:$0xf]
      %v201 = vld [vmem:[%s166 + $0x68] sm:$0xf]
      %v202 = vld [vmem:[%s166 + $0x6c] sm:$0xf]
      %v203 = vld [vmem:[%s166 + $0x70] sm:$0xf]
      %v204 = vld [vmem:[%s166 + $0x74] sm:$0xf]
      %v205 = vld [vmem:[%s166 + $0x78] sm:$0xf]
      %v206 = vld [vmem:[%s166 + $0x7c] sm:$0xf]
      %v207 = vld [vmem:[%s166 + $0x80] sm:$0xf]
      %v208 = vld [vmem:[%s166 + $0x84] sm:$0xf]
      %v209 = vld [vmem:[%s166 + $0x88] sm:$0xf]
      %v210 = vld [vmem:[%s166 + $0x8c] sm:$0xf]
      %v211 = vld [vmem:[%s166 + $0x90] sm:$0xf]
      %v212 = vld [vmem:[%s166 + $0x94] sm:$0xf]
      %v213 = vld [vmem:[%s166 + $0x98] sm:$0xf]
      %v214 = vld [vmem:[%s166 + $0x9c] sm:$0xf]
      %v215 = vld [vmem:[%s166 + $0xa0] sm:$0xf]
      %v216 = vld [vmem:[%s166 + $0xa4] sm:$0xf]
      %v217 = vld [vmem:[%s166 + $0xa8] sm:$0xf]
      %v218 = vld [vmem:[%s166 + $0xac] sm:$0xf]
      %v219 = vld [vmem:[%s166 + $0xb0] sm:$0xf]
      %v220 = vld [vmem:[%s166 + $0xb4] sm:$0xf]
      %v221 = vld [vmem:[%s166 + $0xb8] sm:$0xf]
      %v222 = vld [vmem:[%s166 + $0xbc] sm:$0xf]
      %v223 = vld [vmem:[%s166 + $0xc0] sm:$0xf]
      %v224 = vld [vmem:[%s166 + $0xc4] sm:$0xf]
      %v225 = vld [vmem:[%s166 + $0xc8] sm:$0xf]
      %v226 = vld [vmem:[%s166 + $0xcc] sm:$0xf]
      %v227 = vld [vmem:[%s166 + $0xd0] sm:$0xf]
      %v228 = vld [vmem:[%s166 + $0xd4] sm:$0xf]
      %v229 = vld [vmem:[%s166 + $0xd8] sm:$0xf]
      %v230 = vld [vmem:[%s166 + $0xdc] sm:$0xf]
      %v231 = vld [vmem:[%s166 + $0xe0] sm:$0xf]
      %v232 = vld [vmem:[%s166 + $0xe4] sm:$0xf]
      %v233 = vld [vmem:[%s166 + $0xe8] sm:$0xf]
      %v234 = vld [vmem:[%s166 + $0xec] sm:$0xf]
      %v235 = vld [vmem:[%s166 + $0xf0] sm:$0xf]
      %v236 = vld [vmem:[%s166 + $0xf4] sm:$0xf]
      %v237 = vld [vmem:[%s166 + $0xf8] sm:$0xf]
      %v238 = vld [vmem:[%s166 + $0xfc] sm:$0xf]
      %v239 = vld [vmem:[%s1] sm:$0xf]
      %v240 = vld [vmem:[%s1 + $0x4] sm:$0xf]
      %v241 = vld [vmem:[%s1 + $0x8] sm:$0xf]
      %v242 = vld [vmem:[%s1 + $0xc] sm:$0xf]
      %v243 = vld [vmem:[%s1 + $0x10] sm:$0xf]
      %v244 = vld [vmem:[%s1 + $0x14] sm:$0xf]
      %v245 = vld [vmem:[%s1 + $0x18] sm:$0xf]
      %v246 = vld [vmem:[%s1 + $0x1c] sm:$0xf]
      %v247 = vld [vmem:[%s1 + $0x20] sm:$0xf]
      %v248 = vld [vmem:[%s1 + $0x24] sm:$0x3]
      %v249 = vld [vmem:[%s2] sm:$0x1]
      %v251 = vlaneseq
      %v252 = vshrl.u32 %v251, 7
      %v253 = vsub.s32 0, %v252
      %v254 = vrot.slane %v249, %v253
      %v320 = vunpack.c.l.b16 %v175
      %v321 = vunpack.c.l.b16 %v176
      %v322 = vunpack.c.l.b16 %v177
      %v323 = vunpack.c.l.b16 %v178
      %v324 = vunpack.c.l.b16 %v179
      %v325 = vunpack.c.l.b16 %v180
      %v326 = vunpack.c.l.b16 %v181
      %v327 = vunpack.c.l.b16 %v182
      %v328 = vunpack.c.l.b16 %v183
      %v329 = vunpack.c.l.b16 %v184
      %v330 = vunpack.c.l.b16 %v185
      %v331 = vunpack.c.l.b16 %v186
      %v332 = vunpack.c.l.b16 %v187
      %v333 = vunpack.c.l.b16 %v188
      %v334 = vunpack.c.l.b16 %v189
      %v335 = vunpack.c.l.b16 %v190
      %v336 = vunpack.c.l.b16 %v191
      %v337 = vunpack.c.l.b16 %v192
      %v338 = vunpack.c.l.b16 %v193
      %v339 = vunpack.c.l.b16 %v194
      %v340 = vunpack.c.l.b16 %v195
      %v341 = vunpack.c.l.b16 %v196
      %v342 = vunpack.c.l.b16 %v197
      %v343 = vunpack.c.l.b16 %v198
      %v344 = vunpack.c.l.b16 %v199
      %v345 = vunpack.c.l.b16 %v200
      %v346 = vunpack.c.l.b16 %v201
      %v347 = vunpack.c.l.b16 %v202
      %v348 = vunpack.c.l.b16 %v203
      %v349 = vunpack.c.l.b16 %v204
      %v350 = vunpack.c.l.b16 %v205
      %v351 = vunpack.c.l.b16 %v206
      %v352 = vunpack.c.l.b16 %v207
      %v353 = vunpack.c.l.b16 %v208
      %v354 = vunpack.c.l.b16 %v209
      %v355 = vunpack.c.l.b16 %v210
      %v356 = vunpack.c.l.b16 %v211
      %v357 = vunpack.c.l.b16 %v212
      %v358 = vunpack.c.l.b16 %v213
      %v359 = vunpack.c.l.b16 %v214
      %v360 = vunpack.c.l.b16 %v215
      %v361 = vunpack.c.l.b16 %v216
      %v362 = vunpack.c.l.b16 %v217
      %v363 = vunpack.c.l.b16 %v218
      %v364 = vunpack.c.l.b16 %v219
      %v365 = vunpack.c.l.b16 %v220
      %v366 = vunpack.c.l.b16 %v221
      %v367 = vunpack.c.l.b16 %v222
      %v368 = vunpack.c.l.b16 %v223
      %v369 = vunpack.c.l.b16 %v224
      %v370 = vunpack.c.l.b16 %v225
      %v371 = vunpack.c.l.b16 %v226
      %v372 = vunpack.c.l.b16 %v227
      %v373 = vunpack.c.l.b16 %v228
      %v374 = vunpack.c.l.b16 %v229
      %v375 = vunpack.c.l.b16 %v230
      %v376 = vunpack.c.l.b16 %v231
      %v377 = vunpack.c.l.b16 %v232
      %v378 = vunpack.c.l.b16 %v233
      %v379 = vunpack.c.l.b16 %v234
      %v380 = vunpack.c.l.b16 %v235
      %v381 = vunpack.c.l.b16 %v236
      %v382 = vunpack.c.l.b16 %v237
      %v383 = vunpack.c.l.b16 %v238
      %v384 = vpack.c.b16 %v321, %v320
      %v385 = vpack.c.b16 %v323, %v322
      %v386 = vpack.c.b16 %v325, %v324
      %v387 = vpack.c.b16 %v327, %v326
      %v388 = vpack.c.b16 %v329, %v328
      %v389 = vpack.c.b16 %v331, %v330
      %v390 = vpack.c.b16 %v333, %v332
      %v391 = vpack.c.b16 %v335, %v334
      %v392 = vpack.c.b16 %v337, %v336
      %v393 = vpack.c.b16 %v339, %v338
      %v394 = vpack.c.b16 %v341, %v340
      %v395 = vpack.c.b16 %v343, %v342
      %v396 = vpack.c.b16 %v345, %v344
      %v397 = vpack.c.b16 %v347, %v346
      %v398 = vpack.c.b16 %v349, %v348
      %v399 = vpack.c.b16 %v351, %v350
      %v400 = vpack.c.b16 %v353, %v352
      %v401 = vpack.c.b16 %v355, %v354
      %v402 = vpack.c.b16 %v357, %v356
      %v403 = vpack.c.b16 %v359, %v358
      %v404 = vpack.c.b16 %v361, %v360
      %v405 = vpack.c.b16 %v363, %v362
      %v406 = vpack.c.b16 %v365, %v364
      %v407 = vpack.c.b16 %v367, %v366
      %v408 = vpack.c.b16 %v369, %v368
      %v409 = vpack.c.b16 %v371, %v370
      %v410 = vpack.c.b16 %v373, %v372
      %v411 = vpack.c.b16 %v375, %v374
      %v412 = vpack.c.b16 %v377, %v376
      %v413 = vpack.c.b16 %v379, %v378
      %v414 = vpack.c.b16 %v381, %v380
      %v415 = vpack.c.b16 %v383, %v382
      %v426 = vunpack.c.l.b16 %v239
      %v427 = vunpack.c.l.b16 %v240
      %v428 = vunpack.c.l.b16 %v241
      %v429 = vunpack.c.l.b16 %v242
      %v430 = vunpack.c.l.b16 %v243
      %v431 = vunpack.c.l.b16 %v244
      %v432 = vunpack.c.l.b16 %v245
      %v433 = vunpack.c.l.b16 %v246
      %v434 = vunpack.c.l.b16 %v247
      %v435 = vunpack.c.l.b16 %v248
      %v436 = vpack.c.b16 %v427, %v426
      %v437 = vpack.c.b16 %v429, %v428
      %v438 = vpack.c.b16 %v431, %v430
      %v439 = vpack.c.b16 %v433, %v432
      %v440 = vpack.c.b16 %v435, %v434
      %vm445 = vcmask 613376
      %v447 = vsel %vm445, %v384, 0
      %v450 = vsel %vm445, %v385, 0
      %v453 = vsel %vm445, %v386, 0
      %v456 = vsel %vm445, %v387, 0
      %v459 = vsel %vm445, %v388, 0
      %v462 = vsel %vm445, %v389, 0
      %v465 = vsel %vm445, %v390, 0
      %v468 = vsel %vm445, %v391, 0
      %v471 = vsel %vm445, %v392, 0
      %v474 = vsel %vm445, %v393, 0
      %v477 = vsel %vm445, %v394, 0
      %v480 = vsel %vm445, %v395, 0
      %v483 = vsel %vm445, %v396, 0
      %v486 = vsel %vm445, %v397, 0
      %v489 = vsel %vm445, %v398, 0
      %v492 = vsel %vm445, %v399, 0
      %v495 = vsel %vm445, %v400, 0
      %v498 = vsel %vm445, %v401, 0
      %v501 = vsel %vm445, %v402, 0
      %v504 = vsel %vm445, %v403, 0
      %v507 = vsel %vm445, %v404, 0
      %v510 = vsel %vm445, %v405, 0
      %v513 = vsel %vm445, %v406, 0
      %v516 = vsel %vm445, %v407, 0
      %v519 = vsel %vm445, %v408, 0
      %v522 = vsel %vm445, %v409, 0
      %v525 = vsel %vm445, %v410, 0
      %v528 = vsel %vm445, %v411, 0
      %v531 = vsel %vm445, %v412, 0
      %v534 = vsel %vm445, %v413, 0
      %v537 = vsel %vm445, %v414, 0
      %v540 = vsel %vm445, %v415, 0
      %vm542 = vcmask 1044480
      %vm543 = vcmask 1045504
      %v544 = vsel %vm542, 4294967295, 65535
      %v545 = vsel %vm543, %v544, 0
      %v547 = vand.u32 %v440, %v545
      %549 = vmatprep.subr.bf16.mxu0 0
      %550 = vmatpush1.bf16.msra.mxu0 %v436
      %551 = vmatprep.subr.bf16.mxu0 0
      %552 = vmatpush1.bf16.msra.mxu0 %v437
      %553 = vmatprep.subr.bf16.mxu0 0
      %554 = vmatpush1.bf16.msra.mxu0 %v438
      %555 = vmatprep.subr.bf16.mxu0 0
      %556 = vmatpush1.bf16.msra.mxu0 %v439
      %557 = vmatprep.subr.bf16.mxu0 0
      %558 = vmatpush1.bf16.msra.mxu0 %v547
      %559 = vmatprep.subr.bf16.mxu0 0
      %560 = vmatpush1.bf16.msra.mxu0 0
      %561 = vmatprep.subr.bf16.mxu0 0
      %562 = vmatpush1.bf16.msra.mxu0 0
      %563 = vmatprep.subr.bf16.mxu0 0
      %564 = vmatpush1.bf16.msra.mxu0 0
      %565 = vmatprep.subr.bf16.mxu0 0
      %566 = vmatpush1.bf16.msra.mxu0 0
      %567 = vmatprep.subr.bf16.mxu0 0
      %568 = vmatpush1.bf16.msra.mxu0 0
      %569 = vmatprep.subr.bf16.mxu0 0
      %570 = vmatpush1.bf16.msra.mxu0 0
      %571 = vmatprep.subr.bf16.mxu0 0
      %572 = vmatpush1.bf16.msra.mxu0 0
      %573 = vmatprep.subr.bf16.mxu0 0
      %574 = vmatpush1.bf16.msra.mxu0 0
      %575 = vmatprep.subr.bf16.mxu0 0
      %576 = vmatpush1.bf16.msra.mxu0 0
      %577 = vmatprep.subr.bf16.mxu0 0
      %578 = vmatpush1.bf16.msra.mxu0 0
      %579 = vmatprep.subr.bf16.mxu0 0
      %580 = vmatpush1.bf16.msra.mxu0 0
      %581 = vmatprep.mubr.bf16.mxu0 0
      %582 = vmatmul.mubr.bf16.gmra.mrb[0].mxu0 %v447
      %v583 = vpop.f32.mrb[0].mxu0
      %v584 = vadd.f32 %v254, %v583
      %v585 = vpop.f32.mrb[0].mxu0
      %v586 = vpop.f32.mrb[0].mxu0
      %v587 = vadd.f32 %v254, %v586
      %v588 = vpop.f32.mrb[0].mxu0
      %589 = vmatprep.mubr.bf16.mxu0 0
      %590 = vmatmul.mubr.bf16.gmra.mrb[0].mxu0 %v450
      %v591 = vpop.f32.mrb[0].mxu0
      %v592 = vadd.f32 %v254, %v591
      %v593 = vpop.f32.mrb[0].mxu0
      %v594 = vpop.f32.mrb[0].mxu0
      %v595 = vadd.f32 %v254, %v594
      %v596 = vpop.f32.mrb[0].mxu0
      %597 = vmatprep.mubr.bf16.mxu0 0
      %598 = vmatmul.mubr.bf16.gmra.mrb[0].mxu0 %v453
      %v599 = vpop.f32.mrb[0].mxu0
      %v600 = vadd.f32 %v254, %v599
      %v601 = vpop.f32.mrb[0].mxu0
      %v602 = vpop.f32.mrb[0].mxu0
      %v603 = vadd.f32 %v254, %v602
      %v604 = vpop.f32.mrb[0].mxu0
      %605 = vmatprep.mubr.bf16.mxu0 0
      %606 = vmatmul.mubr.bf16.gmra.mrb[0].mxu0 %v456
      %v607 = vpop.f32.mrb[0].mxu0
      %v608 = vadd.f32 %v254, %v607
      %v609 = vpop.f32.mrb[0].mxu0
      %v610 = vpop.f32.mrb[0].mxu0
      %v611 = vadd.f32 %v254, %v610
      %v612 = vpop.f32.mrb[0].mxu0
      %613 = vmatprep.mubr.bf16.mxu0 0
      %614 = vmatmul.mubr.bf16.gmra.mrb[0].mxu0 %v459
      %v615 = vpop.f32.mrb[0].mxu0
      %v616 = vadd.f32 %v254, %v615
      %v617 = vpop.f32.mrb[0].mxu0
      %v618 = vpop.f32.mrb[0].mxu0
      %v619 = vadd.f32 %v254, %v618
      %v620 = vpop.f32.mrb[0].mxu0
      %621 = vmatprep.mubr.bf16.mxu0 0
      %622 = vmatmul.mubr.bf16.gmra.mrb[0].mxu0 %v462
      %v623 = vpop.f32.mrb[0].mxu0
      %v624 = vadd.f32 %v254, %v623
      %v625 = vpop.f32.mrb[0].mxu0
      %v626 = vpop.f32.mrb[0].mxu0
      %v627 = vadd.f32 %v254, %v626
      %v628 = vpop.f32.mrb[0].mxu0
      %629 = vmatprep.mubr.bf16.mxu0 0
      %630 = vmatmul.mubr.bf16.gmra.mrb[0].mxu0 %v465
      %v631 = vpop.f32.mrb[0].mxu0
      %v632 = vadd.f32 %v254, %v631
      %v633 = vpop.f32.mrb[0].mxu0
      %v634 = vpop.f32.mrb[0].mxu0
      %v635 = vadd.f32 %v254, %v634
      %v636 = vpop.f32.mrb[0].mxu0
      %637 = vmatprep.mubr.bf16.mxu0 0
      %638 = vmatmul.mubr.bf16.gmra.mrb[0].mxu0 %v468
      %v639 = vpop.f32.mrb[0].mxu0
      %v640 = vadd.f32 %v254, %v639
      %v641 = vpop.f32.mrb[0].mxu0
      %v642 = vpop.f32.mrb[0].mxu0
      %v643 = vadd.f32 %v254, %v642
      %v644 = vpop.f32.mrb[0].mxu0
      %645 = vmatprep.mubr.bf16.mxu0 0
      %646 = vmatmul.mubr.bf16.gmra.mrb[0].mxu0 %v471
      %v647 = vpop.f32.mrb[0].mxu0
      %v648 = vadd.f32 %v254, %v647
      %v649 = vpop.f32.mrb[0].mxu0
      %v650 = vpop.f32.mrb[0].mxu0
      %v651 = vadd.f32 %v254, %v650
      %v652 = vpop.f32.mrb[0].mxu0
      %653 = vmatprep.mubr.bf16.mxu0 0
      %654 = vmatmul.mubr.bf16.gmra.mrb[0].mxu0 %v474
      %v655 = vpop.f32.mrb[0].mxu0
      %v656 = vadd.f32 %v254, %v655
      %v657 = vpop.f32.mrb[0].mxu0
      %v658 = vpop.f32.mrb[0].mxu0
      %v659 = vadd.f32 %v254, %v658
      %v660 = vpop.f32.mrb[0].mxu0
      %661 = vmatprep.mubr.bf16.mxu0 0
      %662 = vmatmul.mubr.bf16.gmra.mrb[0].mxu0 %v477
      %v663 = vpop.f32.mrb[0].mxu0
      %v664 = vadd.f32 %v254, %v663
      %v665 = vpop.f32.mrb[0].mxu0
      %v666 = vpop.f32.mrb[0].mxu0
      %v667 = vadd.f32 %v254, %v666
      %v668 = vpop.f32.mrb[0].mxu0
      %669 = vmatprep.mubr.bf16.mxu0 0
      %670 = vmatmul.mubr.bf16.gmra.mrb[0].mxu0 %v480
      %v671 = vpop.f32.mrb[0].mxu0
      %v672 = vadd.f32 %v254, %v671
      %v673 = vpop.f32.mrb[0].mxu0
      %v674 = vpop.f32.mrb[0].mxu0
      %v675 = vadd.f32 %v254, %v674
      %v676 = vpop.f32.mrb[0].mxu0
      %677 = vmatprep.mubr.bf16.mxu0 0
      %678 = vmatmul.mubr.bf16.gmra.mrb[0].mxu0 %v483
      %v679 = vpop.f32.mrb[0].mxu0
      %v680 = vadd.f32 %v254, %v679
      %v681 = vpop.f32.mrb[0].mxu0
      %v682 = vpop.f32.mrb[0].mxu0
      %v683 = vadd.f32 %v254, %v682
      %v684 = vpop.f32.mrb[0].mxu0
      %685 = vmatprep.mubr.bf16.mxu0 0
      %686 = vmatmul.mubr.bf16.gmra.mrb[0].mxu0 %v486
      %v687 = vpop.f32.mrb[0].mxu0
      %v688 = vadd.f32 %v254, %v687
      %v689 = vpop.f32.mrb[0].mxu0
      %v690 = vpop.f32.mrb[0].mxu0
      %v691 = vadd.f32 %v254, %v690
      %v692 = vpop.f32.mrb[0].mxu0
      %693 = vmatprep.mubr.bf16.mxu0 0
      %694 = vmatmul.mubr.bf16.gmra.mrb[0].mxu0 %v489
      %v695 = vpop.f32.mrb[0].mxu0
      %v696 = vadd.f32 %v254, %v695
      %v697 = vpop.f32.mrb[0].mxu0
      %v698 = vpop.f32.mrb[0].mxu0
      %v699 = vadd.f32 %v254, %v698
      %v700 = vpop.f32.mrb[0].mxu0
      %701 = vmatprep.mubr.bf16.mxu0 0
      %702 = vmatmul.mubr.bf16.gmra.mrb[0].mxu0 %v492
      %v703 = vpop.f32.mrb[0].mxu0
      %v704 = vadd.f32 %v254, %v703
      %v705 = vpop.f32.mrb[0].mxu0
      %v706 = vpop.f32.mrb[0].mxu0
      %v707 = vadd.f32 %v254, %v706
      %v708 = vpop.f32.mrb[0].mxu0
      %709 = vmatprep.mubr.bf16.mxu0 0
      %710 = vmatmul.mubr.bf16.gmra.mrb[0].mxu0 %v495
      %v711 = vpop.f32.mrb[0].mxu0
      %v712 = vadd.f32 %v254, %v711
      %v713 = vpop.f32.mrb[0].mxu0
      %v714 = vpop.f32.mrb[0].mxu0
      %v715 = vadd.f32 %v254, %v714
      %v716 = vpop.f32.mrb[0].mxu0
      %717 = vmatprep.mubr.bf16.mxu0 0
      %718 = vmatmul.mubr.bf16.gmra.mrb[0].mxu0 %v498
      %v719 = vpop.f32.mrb[0].mxu0
      %v720 = vadd.f32 %v254, %v719
      %v721 = vpop.f32.mrb[0].mxu0
      %v722 = vpop.f32.mrb[0].mxu0
      %v723 = vadd.f32 %v254, %v722
      %v724 = vpop.f32.mrb[0].mxu0
      %725 = vmatprep.mubr.bf16.mxu0 0
      %726 = vmatmul.mubr.bf16.gmra.mrb[0].mxu0 %v501
      %v727 = vpop.f32.mrb[0].mxu0
      %v728 = vadd.f32 %v254, %v727
      %v729 = vpop.f32.mrb[0].mxu0
      %v730 = vpop.f32.mrb[0].mxu0
      %v731 = vadd.f32 %v254, %v730
      %v732 = vpop.f32.mrb[0].mxu0
      %733 = vmatprep.mubr.bf16.mxu0 0
      %734 = vmatmul.mubr.bf16.gmra.mrb[0].mxu0 %v504
      %v735 = vpop.f32.mrb[0].mxu0
      %v736 = vadd.f32 %v254, %v735
      %v737 = vpop.f32.mrb[0].mxu0
      %v738 = vpop.f32.mrb[0].mxu0
      %v739 = vadd.f32 %v254, %v738
      %v740 = vpop.f32.mrb[0].mxu0
      %741 = vmatprep.mubr.bf16.mxu0 0
      %742 = vmatmul.mubr.bf16.gmra.mrb[0].mxu0 %v507
      %v743 = vpop.f32.mrb[0].mxu0
      %v744 = vadd.f32 %v254, %v743
      %v745 = vpop.f32.mrb[0].mxu0
      %v746 = vpop.f32.mrb[0].mxu0
      %v747 = vadd.f32 %v254, %v746
      %v748 = vpop.f32.mrb[0].mxu0
      %749 = vmatprep.mubr.bf16.mxu0 0
      %750 = vmatmul.mubr.bf16.gmra.mrb[0].mxu0 %v510
      %v751 = vpop.f32.mrb[0].mxu0
      %v752 = vadd.f32 %v254, %v751
      %v753 = vpop.f32.mrb[0].mxu0
      %v754 = vpop.f32.mrb[0].mxu0
      %v755 = vadd.f32 %v254, %v754
      %v756 = vpop.f32.mrb[0].mxu0
      %757 = vmatprep.mubr.bf16.mxu0 0
      %758 = vmatmul.mubr.bf16.gmra.mrb[0].mxu0 %v513
      %v759 = vpop.f32.mrb[0].mxu0
      %v760 = vadd.f32 %v254, %v759
      %v761 = vpop.f32.mrb[0].mxu0
      %v762 = vpop.f32.mrb[0].mxu0
      %v763 = vadd.f32 %v254, %v762
      %v764 = vpop.f32.mrb[0].mxu0
      %765 = vmatprep.mubr.bf16.mxu0 0
      %766 = vmatmul.mubr.bf16.gmra.mrb[0].mxu0 %v516
      %v767 = vpop.f32.mrb[0].mxu0
      %v768 = vadd.f32 %v254, %v767
      %v769 = vpop.f32.mrb[0].mxu0
      %v770 = vpop.f32.mrb[0].mxu0
      %v771 = vadd.f32 %v254, %v770
      %v772 = vpop.f32.mrb[0].mxu0
      %773 = vmatprep.mubr.bf16.mxu0 0
      %774 = vmatmul.mubr.bf16.gmra.mrb[0].mxu0 %v519
      %v775 = vpop.f32.mrb[0].mxu0
      %v776 = vadd.f32 %v254, %v775
      %v777 = vpop.f32.mrb[0].mxu0
      %v778 = vpop.f32.mrb[0].mxu0
      %v779 = vadd.f32 %v254, %v778
      %v780 = vpop.f32.mrb[0].mxu0
      %781 = vmatprep.mubr.bf16.mxu0 0
      %782 = vmatmul.mubr.bf16.gmra.mrb[0].mxu0 %v522
      %v783 = vpop.f32.mrb[0].mxu0
      %v784 = vadd.f32 %v254, %v783
      %v785 = vpop.f32.mrb[0].mxu0
      %v786 = vpop.f32.mrb[0].mxu0
      %v787 = vadd.f32 %v254, %v786
      %v788 = vpop.f32.mrb[0].mxu0
      %789 = vmatprep.mubr.bf16.mxu0 0
      %790 = vmatmul.mubr.bf16.gmra.mrb[0].mxu0 %v525
      %v791 = vpop.f32.mrb[0].mxu0
      %v792 = vadd.f32 %v254, %v791
      %v793 = vpop.f32.mrb[0].mxu0
      %v794 = vpop.f32.mrb[0].mxu0
      %v795 = vadd.f32 %v254, %v794
      %v796 = vpop.f32.mrb[0].mxu0
      %797 = vmatprep.mubr.bf16.mxu0 0
      %798 = vmatmul.mubr.bf16.gmra.mrb[0].mxu0 %v528
      %v799 = vpop.f32.mrb[0].mxu0
      %v800 = vadd.f32 %v254, %v799
      %v801 = vpop.f32.mrb[0].mxu0
      %v802 = vpop.f32.mrb[0].mxu0
      %v803 = vadd.f32 %v254, %v802
      %v804 = vpop.f32.mrb[0].mxu0
      %805 = vmatprep.mubr.bf16.mxu0 0
      %806 = vmatmul.mubr.bf16.gmra.mrb[0].mxu0 %v531
      %v807 = vpop.f32.mrb[0].mxu0
      %v808 = vadd.f32 %v254, %v807
      %v809 = vpop.f32.mrb[0].mxu0
      %v810 = vpop.f32.mrb[0].mxu0
      %v811 = vadd.f32 %v254, %v810
      %v812 = vpop.f32.mrb[0].mxu0
      %813 = vmatprep.mubr.bf16.mxu0 0
      %814 = vmatmul.mubr.bf16.gmra.mrb[0].mxu0 %v534
      %v815 = vpop.f32.mrb[0].mxu0
      %v816 = vadd.f32 %v254, %v815
      %v817 = vpop.f32.mrb[0].mxu0
      %v818 = vpop.f32.mrb[0].mxu0
      %v819 = vadd.f32 %v254, %v818
      %v820 = vpop.f32.mrb[0].mxu0
      %821 = vmatprep.mubr.bf16.mxu0 0
      %822 = vmatmul.mubr.bf16.gmra.mrb[0].mxu0 %v537
      %v823 = vpop.f32.mrb[0].mxu0
      %v824 = vadd.f32 %v254, %v823
      %v825 = vpop.f32.mrb[0].mxu0
      %v826 = vpop.f32.mrb[0].mxu0
      %v827 = vadd.f32 %v254, %v826
      %v828 = vpop.f32.mrb[0].mxu0
      %829 = vmatprep.mubr.bf16.mxu0 0
      %830 = vmatmul.mubr.bf16.gmra.mrb[0].mxu0 %v540
      %v831 = vpop.f32.mrb[0].mxu0
      %v832 = vadd.f32 %v254, %v831
      %v833 = vpop.f32.mrb[0].mxu0
      %v834 = vpop.f32.mrb[0].mxu0
      %v835 = vadd.f32 %v254, %v834
      %v836 = vpop.f32.mrb[0].mxu0
      %837 = vdwg.mxu0
      %v838 = vmax.f32 %v584, 0.0
      %v839 = vmax.f32 %v587, 0.0
      %v840 = vmax.f32 %v592, 0.0
      %v841 = vmax.f32 %v595, 0.0
      %v842 = vmax.f32 %v600, 0.0
      %v843 = vmax.f32 %v603, 0.0
      %v844 = vmax.f32 %v608, 0.0
      %v845 = vmax.f32 %v611, 0.0
      %v846 = vmax.f32 %v616, 0.0
      %v847 = vmax.f32 %v619, 0.0
      %v848 = vmax.f32 %v624, 0.0
      %v849 = vmax.f32 %v627, 0.0
      %v850 = vmax.f32 %v632, 0.0
      %v851 = vmax.f32 %v635, 0.0
      %v852 = vmax.f32 %v640, 0.0
      %v853 = vmax.f32 %v643, 0.0
      %v854 = vmax.f32 %v648, 0.0
      %v855 = vmax.f32 %v651, 0.0
      %v856 = vmax.f32 %v656, 0.0
      %v857 = vmax.f32 %v659, 0.0
      %v858 = vmax.f32 %v664, 0.0
      %v859 = vmax.f32 %v667, 0.0
      %v860 = vmax.f32 %v672, 0.0
      %v861 = vmax.f32 %v675, 0.0
      %v862 = vmax.f32 %v680, 0.0
      %v863 = vmax.f32 %v683, 0.0
      %v864 = vmax.f32 %v688, 0.0
      %v865 = vmax.f32 %v691, 0.0
      %v866 = vmax.f32 %v696, 0.0
      %v867 = vmax.f32 %v699, 0.0
      %v868 = vmax.f32 %v704, 0.0
      %v869 = vmax.f32 %v707, 0.0
      %v870 = vmax.f32 %v712, 0.0
      %v871 = vmax.f32 %v715, 0.0
      %v872 = vmax.f32 %v720, 0.0
      %v873 = vmax.f32 %v723, 0.0
      %v874 = vmax.f32 %v728, 0.0
      %v875 = vmax.f32 %v731, 0.0
      %v876 = vmax.f32 %v736, 0.0
      %v877 = vmax.f32 %v739, 0.0
      %v878 = vmax.f32 %v744, 0.0
      %v879 = vmax.f32 %v747, 0.0
      %v880 = vmax.f32 %v752, 0.0
      %v881 = vmax.f32 %v755, 0.0
      %v882 = vmax.f32 %v760, 0.0
      %v883 = vmax.f32 %v763, 0.0
      %v884 = vmax.f32 %v768, 0.0
      %v885 = vmax.f32 %v771, 0.0
      %v886 = vmax.f32 %v776, 0.0
      %v887 = vmax.f32 %v779, 0.0
      %v888 = vmax.f32 %v784, 0.0
      %v889 = vmax.f32 %v787, 0.0
      %v890 = vmax.f32 %v792, 0.0
      %v891 = vmax.f32 %v795, 0.0
      %v892 = vmax.f32 %v800, 0.0
      %v893 = vmax.f32 %v803, 0.0
      %v894 = vmax.f32 %v808, 0.0
      %v895 = vmax.f32 %v811, 0.0
      %v896 = vmax.f32 %v816, 0.0
      %v897 = vmax.f32 %v819, 0.0
      %v898 = vmax.f32 %v824, 0.0
      %v899 = vmax.f32 %v827, 0.0
      %v900 = vmax.f32 %v832, 0.0
      %v901 = vmax.f32 %v835, 0.0
      %v902 = vpack.c.bf16 %v839, %v838
      %v903 = vpack.c.bf16 %v841, %v840
      %v904 = vpack.c.bf16 %v843, %v842
      %v905 = vpack.c.bf16 %v845, %v844
      %v906 = vpack.c.bf16 %v847, %v846
      %v907 = vpack.c.bf16 %v849, %v848
      %v908 = vpack.c.bf16 %v851, %v850
      %v909 = vpack.c.bf16 %v853, %v852
      %v910 = vpack.c.bf16 %v855, %v854
      %v911 = vpack.c.bf16 %v857, %v856
      %v912 = vpack.c.bf16 %v859, %v858
      %v913 = vpack.c.bf16 %v861, %v860
      %v914 = vpack.c.bf16 %v863, %v862
      %v915 = vpack.c.bf16 %v865, %v864
      %v916 = vpack.c.bf16 %v867, %v866
      %v917 = vpack.c.bf16 %v869, %v868
      %v918 = vpack.c.bf16 %v871, %v870
      %v919 = vpack.c.bf16 %v873, %v872
      %v920 = vpack.c.bf16 %v875, %v874
      %v921 = vpack.c.bf16 %v877, %v876
      %v922 = vpack.c.bf16 %v879, %v878
      %v923 = vpack.c.bf16 %v881, %v880
      %v924 = vpack.c.bf16 %v883, %v882
      %v925 = vpack.c.bf16 %v885, %v884
      %v926 = vpack.c.bf16 %v887, %v886
      %v927 = vpack.c.bf16 %v889, %v888
      %v928 = vpack.c.bf16 %v891, %v890
      %v929 = vpack.c.bf16 %v893, %v892
      %v930 = vpack.c.bf16 %v895, %v894
      %v931 = vpack.c.bf16 %v897, %v896
      %v932 = vpack.c.bf16 %v899, %v898
      %v933 = vpack.c.bf16 %v901, %v900
      %v966 = vunpack.c.l.b16 %v902
      %v967 = vunpack.c.h.b16 %v902
      %v968 = vunpack.c.l.b16 %v903
      %v969 = vunpack.c.h.b16 %v903
      %v970 = vunpack.c.l.b16 %v904
      %v971 = vunpack.c.h.b16 %v904
      %v972 = vunpack.c.l.b16 %v905
      %v973 = vunpack.c.h.b16 %v905
      %v974 = vunpack.c.l.b16 %v906
      %v975 = vunpack.c.h.b16 %v906
      %v976 = vunpack.c.l.b16 %v907
      %v977 = vunpack.c.h.b16 %v907
      %v978 = vunpack.c.l.b16 %v908
      %v979 = vunpack.c.h.b16 %v908
      %v980 = vunpack.c.l.b16 %v909
      %v981 = vunpack.c.h.b16 %v909
      %v982 = vunpack.c.l.b16 %v910
      %v983 = vunpack.c.h.b16 %v910
      %v984 = vunpack.c.l.b16 %v911
      %v985 = vunpack.c.h.b16 %v911
      %v986 = vunpack.c.l.b16 %v912
      %v987 = vunpack.c.h.b16 %v912
      %v988 = vunpack.c.l.b16 %v913
      %v989 = vunpack.c.h.b16 %v913
      %v990 = vunpack.c.l.b16 %v914
      %v991 = vunpack.c.h.b16 %v914
      %v992 = vunpack.c.l.b16 %v915
      %v993 = vunpack.c.h.b16 %v915
      %v994 = vunpack.c.l.b16 %v916
      %v995 = vunpack.c.h.b16 %v916
      %v996 = vunpack.c.l.b16 %v917
      %v997 = vunpack.c.h.b16 %v917
      %v998 = vunpack.c.l.b16 %v918
      %v999 = vunpack.c.h.b16 %v918
      %v1000 = vunpack.c.l.b16 %v919
      %v1001 = vunpack.c.h.b16 %v919
      %v1002 = vunpack.c.l.b16 %v920
      %v1003 = vunpack.c.h.b16 %v920
      %v1004 = vunpack.c.l.b16 %v921
      %v1005 = vunpack.c.h.b16 %v921
      %v1006 = vunpack.c.l.b16 %v922
      %v1007 = vunpack.c.h.b16 %v922
      %v1008 = vunpack.c.l.b16 %v923
      %v1009 = vunpack.c.h.b16 %v923
      %v1010 = vunpack.c.l.b16 %v924
      %v1011 = vunpack.c.h.b16 %v924
      %v1012 = vunpack.c.l.b16 %v925
      %v1013 = vunpack.c.h.b16 %v925
      %v1014 = vunpack.c.l.b16 %v926
      %v1015 = vunpack.c.h.b16 %v926
      %v1016 = vunpack.c.l.b16 %v927
      %v1017 = vunpack.c.h.b16 %v927
      %v1018 = vunpack.c.l.b16 %v928
      %v1019 = vunpack.c.h.b16 %v928
      %v1020 = vunpack.c.l.b16 %v929
      %v1021 = vunpack.c.h.b16 %v929
      %v1022 = vunpack.c.l.b16 %v930
      %v1023 = vunpack.c.h.b16 %v930
      %v1024 = vunpack.c.l.b16 %v931
      %v1025 = vunpack.c.h.b16 %v931
      %v1026 = vunpack.c.l.b16 %v932
      %v1027 = vunpack.c.h.b16 %v932
      %v1028 = vunpack.c.l.b16 %v933
      %v1029 = vunpack.c.h.b16 %v933
      %v1030 = vpack.c.b16 %v966, %v966
      %v1031 = vpack.c.b16 %v967, %v967
      %v1032 = vpack.c.b16 %v968, %v968
      %v1033 = vpack.c.b16 %v969, %v969
      %v1034 = vpack.c.b16 %v970, %v970
      %v1035 = vpack.c.b16 %v971, %v971
      %v1036 = vpack.c.b16 %v972, %v972
      %v1037 = vpack.c.b16 %v973, %v973
      %v1038 = vpack.c.b16 %v974, %v974
      %v1039 = vpack.c.b16 %v975, %v975
      %v1040 = vpack.c.b16 %v976, %v976
      %v1041 = vpack.c.b16 %v977, %v977
      %v1042 = vpack.c.b16 %v978, %v978
      %v1043 = vpack.c.b16 %v979, %v979
      %v1044 = vpack.c.b16 %v980, %v980
      %v1045 = vpack.c.b16 %v981, %v981
      %v1046 = vpack.c.b16 %v982, %v982
      %v1047 = vpack.c.b16 %v983, %v983
      %v1048 = vpack.c.b16 %v984, %v984
      %v1049 = vpack.c.b16 %v985, %v985
      %v1050 = vpack.c.b16 %v986, %v986
      %v1051 = vpack.c.b16 %v987, %v987
      %v1052 = vpack.c.b16 %v988, %v988
      %v1053 = vpack.c.b16 %v989, %v989
      %v1054 = vpack.c.b16 %v990, %v990
      %v1055 = vpack.c.b16 %v991, %v991
      %v1056 = vpack.c.b16 %v992, %v992
      %v1057 = vpack.c.b16 %v993, %v993
      %v1058 = vpack.c.b16 %v994, %v994
      %v1059 = vpack.c.b16 %v995, %v995
      %v1060 = vpack.c.b16 %v996, %v996
      %v1061 = vpack.c.b16 %v997, %v997
      %v1062 = vpack.c.b16 %v998, %v998
      %v1063 = vpack.c.b16 %v999, %v999
      %v1064 = vpack.c.b16 %v1000, %v1000
      %v1065 = vpack.c.b16 %v1001, %v1001
      %v1066 = vpack.c.b16 %v1002, %v1002
      %v1067 = vpack.c.b16 %v1003, %v1003
      %v1068 = vpack.c.b16 %v1004, %v1004
      %v1069 = vpack.c.b16 %v1005, %v1005
      %v1070 = vpack.c.b16 %v1006, %v1006
      %v1071 = vpack.c.b16 %v1007, %v1007
      %v1072 = vpack.c.b16 %v1008, %v1008
      %v1073 = vpack.c.b16 %v1009, %v1009
      %v1074 = vpack.c.b16 %v1010, %v1010
      %v1075 = vpack.c.b16 %v1011, %v1011
      %v1076 = vpack.c.b16 %v1012, %v1012
      %v1077 = vpack.c.b16 %v1013, %v1013
      %v1078 = vpack.c.b16 %v1014, %v1014
      %v1079 = vpack.c.b16 %v1015, %v1015
      %v1080 = vpack.c.b16 %v1016, %v1016
      %v1081 = vpack.c.b16 %v1017, %v1017
      %v1082 = vpack.c.b16 %v1018, %v1018
      %v1083 = vpack.c.b16 %v1019, %v1019
      %v1084 = vpack.c.b16 %v1020, %v1020
      %v1085 = vpack.c.b16 %v1021, %v1021
      %v1086 = vpack.c.b16 %v1022, %v1022
      %v1087 = vpack.c.b16 %v1023, %v1023
      %v1088 = vpack.c.b16 %v1024, %v1024
      %v1089 = vpack.c.b16 %v1025, %v1025
      %v1090 = vpack.c.b16 %v1026, %v1026
      %v1091 = vpack.c.b16 %v1027, %v1027
      %v1092 = vpack.c.b16 %v1028, %v1028
      %v1093 = vpack.c.b16 %v1029, %v1029
      %vm1158 = vcmask 125952
      %1159 = vst.msk [vmem:[%s172] sm:$0xf] %vm1158, %v1030
      %1160 = vst.msk [vmem:[%s172 + $0x4] sm:$0xf] %vm1158, %v1031
      %1161 = vst.msk [vmem:[%s172 + $0x8] sm:$0xf] %vm1158, %v1032
      %1162 = vst.msk [vmem:[%s172 + $0xc] sm:$0xf] %vm1158, %v1033
      %1163 = vst.msk [vmem:[%s172 + $0x10] sm:$0xf] %vm1158, %v1034
      %1164 = vst.msk [vmem:[%s172 + $0x14] sm:$0xf] %vm1158, %v1035
      %1165 = vst.msk [vmem:[%s172 + $0x18] sm:$0xf] %vm1158, %v1036
      %1166 = vst.msk [vmem:[%s172 + $0x1c] sm:$0xf] %vm1158, %v1037
      %1167 = vst.msk [vmem:[%s172 + $0x20] sm:$0xf] %vm1158, %v1038
      %1168 = vst.msk [vmem:[%s172 + $0x24] sm:$0xf] %vm1158, %v1039
      %1169 = vst.msk [vmem:[%s172 + $0x28] sm:$0xf] %vm1158, %v1040
      %1170 = vst.msk [vmem:[%s172 + $0x2c] sm:$0xf] %vm1158, %v1041
      %1171 = vst.msk [vmem:[%s172 + $0x30] sm:$0xf] %vm1158, %v1042
      %1172 = vst.msk [vmem:[%s172 + $0x34] sm:$0xf] %vm1158, %v1043
      %1173 = vst.msk [vmem:[%s172 + $0x38] sm:$0xf] %vm1158, %v1044
      %1174 = vst.msk [vmem:[%s172 + $0x3c] sm:$0xf] %vm1158, %v1045
      %1175 = vst.msk [vmem:[%s172 + $0x40] sm:$0xf] %vm1158, %v1046
      %1176 = vst.msk [vmem:[%s172 + $0x44] sm:$0xf] %vm1158, %v1047
      %1177 = vst.msk [vmem:[%s172 + $0x48] sm:$0xf] %vm1158, %v1048
      %1178 = vst.msk [vmem:[%s172 + $0x4c] sm:$0xf] %vm1158, %v1049
      %1179 = vst.msk [vmem:[%s172 + $0x50] sm:$0xf] %vm1158, %v1050
      %1180 = vst.msk [vmem:[%s172 + $0x54] sm:$0xf] %vm1158, %v1051
      %1181 = vst.msk [vmem:[%s172 + $0x58] sm:$0xf] %vm1158, %v1052
      %1182 = vst.msk [vmem:[%s172 + $0x5c] sm:$0xf] %vm1158, %v1053
      %1183 = vst.msk [vmem:[%s172 + $0x60] sm:$0xf] %vm1158, %v1054
      %1184 = vst.msk [vmem:[%s172 + $0x64] sm:$0xf] %vm1158, %v1055
      %1185 = vst.msk [vmem:[%s172 + $0x68] sm:$0xf] %vm1158, %v1056
      %1186 = vst.msk [vmem:[%s172 + $0x6c] sm:$0xf] %vm1158, %v1057
      %1187 = vst.msk [vmem:[%s172 + $0x70] sm:$0xf] %vm1158, %v1058
      %1188 = vst.msk [vmem:[%s172 + $0x74] sm:$0xf] %vm1158, %v1059
      %1189 = vst.msk [vmem:[%s172 + $0x78] sm:$0xf] %vm1158, %v1060
      %1190 = vst.msk [vmem:[%s172 + $0x7c] sm:$0xf] %vm1158, %v1061
      %1191 = vst.msk [vmem:[%s172 + $0x80] sm:$0xf] %vm1158, %v1062
      %1192 = vst.msk [vmem:[%s172 + $0x84] sm:$0xf] %vm1158, %v1063
      %1193 = vst.msk [vmem:[%s172 + $0x88] sm:$0xf] %vm1158, %v1064
      %1194 = vst.msk [vmem:[%s172 + $0x8c] sm:$0xf] %vm1158, %v1065
      %1195 = vst.msk [vmem:[%s172 + $0x90] sm:$0xf] %vm1158, %v1066
      %1196 = vst.msk [vmem:[%s172 + $0x94] sm:$0xf] %vm1158, %v1067
      %1197 = vst.msk [vmem:[%s172 + $0x98] sm:$0xf] %vm1158, %v1068
      %1198 = vst.msk [vmem:[%s172 + $0x9c] sm:$0xf] %vm1158, %v1069
      %1199 = vst.msk [vmem:[%s172 + $0xa0] sm:$0xf] %vm1158, %v1070
      %1200 = vst.msk [vmem:[%s172 + $0xa4] sm:$0xf] %vm1158, %v1071
      %1201 = vst.msk [vmem:[%s172 + $0xa8] sm:$0xf] %vm1158, %v1072
      %1202 = vst.msk [vmem:[%s172 + $0xac] sm:$0xf] %vm1158, %v1073
      %1203 = vst.msk [vmem:[%s172 + $0xb0] sm:$0xf] %vm1158, %v1074
      %1204 = vst.msk [vmem:[%s172 + $0xb4] sm:$0xf] %vm1158, %v1075
      %1205 = vst.msk [vmem:[%s172 + $0xb8] sm:$0xf] %vm1158, %v1076
      %1206 = vst.msk [vmem:[%s172 + $0xbc] sm:$0xf] %vm1158, %v1077
      %1207 = vst.msk [vmem:[%s172 + $0xc0] sm:$0xf] %vm1158, %v1078
      %1208 = vst.msk [vmem:[%s172 + $0xc4] sm:$0xf] %vm1158, %v1079
      %1209 = vst.msk [vmem:[%s172 + $0xc8] sm:$0xf] %vm1158, %v1080
      %1210 = vst.msk [vmem:[%s172 + $0xcc] sm:$0xf] %vm1158, %v1081
      %1211 = vst.msk [vmem:[%s172 + $0xd0] sm:$0xf] %vm1158, %v1082
      %1212 = vst.msk [vmem:[%s172 + $0xd4] sm:$0xf] %vm1158, %v1083
      %1213 = vst.msk [vmem:[%s172 + $0xd8] sm:$0xf] %vm1158, %v1084
      %1214 = vst.msk [vmem:[%s172 + $0xdc] sm:$0xf] %vm1158, %v1085
      %1215 = vst.msk [vmem:[%s172 + $0xe0] sm:$0xf] %vm1158, %v1086
      %1216 = vst.msk [vmem:[%s172 + $0xe4] sm:$0xf] %vm1158, %v1087
      %1217 = vst.msk [vmem:[%s172 + $0xe8] sm:$0xf] %vm1158, %v1088
      %1218 = vst.msk [vmem:[%s172 + $0xec] sm:$0xf] %vm1158, %v1089
      %1219 = vst.msk [vmem:[%s172 + $0xf0] sm:$0xf] %vm1158, %v1090
      %1220 = vst.msk [vmem:[%s172 + $0xf4] sm:$0xf] %vm1158, %v1091
      %1221 = vst.msk [vmem:[%s172 + $0xf8] sm:$0xf] %vm1158, %v1092
      %1222 = vst.msk [vmem:[%s172 + $0xfc] sm:$0xf] %vm1158, %v1093
      %s1223 = smul.u32 64, %s14
      %p1224 = scmp.lt.s32.totalorder %s1223, 447
      %s1225 = scalar_select %p1224, %s1223, 447
      %s1226 = smul.addr %s1225, 4
      %s1227 = scalar_lea.vmem %s3, %s1226
      // Predicated region
      $region33: #{lstm_cnn_forward.5} parent=31 // pred_check
        %p1228 = pneg %p100
      $region34: #{lstm_cnn_forward.5} parent=31 // pred_check_branch
        %1230 = sbr.rel (%p1228) target = $region36
      $region35: #{lstm_cnn_forward.5} parent=31 // pred_region
        %s1231 = smul.u32 64, %s14
      $region36: #{lstm_cnn_forward.5} parent=31 // pred_fallthru
        _
    $region32: #{lstm_cnn_forward.5} parent=5 // pred_fallthru
      _
    %p1232 = scmp.le.s32.totalorder 2, %s9
    // Predicated region
    $region37: #{lstm_cnn_forward.5} parent=5 // pred_check
      %p1233 = pneg %p1232
    $region38: #{lstm_cnn_forward.5} parent=5 // pred_check_branch
      %1235 = sbr.rel (%p1233) target = $region40
    $region39: #{lstm_cnn_forward.5} parent=5 // pred_region
      %s1236 = ssub.s32 %s9, 2
      // Predicated region
      $region41: #{lstm_cnn_forward.5} parent=39 // pred_check
        %p1237 = pneg %p106
      $region42: #{lstm_cnn_forward.5} parent=39 // pred_check_branch
        %1239 = sbr.rel (%p1237) target = $region44
      $region43: #{lstm_cnn_forward.5} parent=39 // pred_region
        %s1240 = smul.u32 64, %s15
        %p1241 = scmp.lt.s32.totalorder %s1240, 447
        %s1242 = scalar_select %p1241, %s1240, 447
        %s1243 = smul.addr %s1242, 4
        %s1244 = scalar_lea.vmem %s3, %s1243
      $region44: #{lstm_cnn_forward.5} parent=39 // pred_fallthru
        _
    $region40: #{lstm_cnn_forward.5} parent=5 // pred_fallthru
      _
  $region6: #{lstm_cnn_forward.5} parent=0 // loop_footer
    %s13 = sadd.s32 1, %s9
  $region7: #{lstm_cnn_forward.5} parent=0 // loop_footer_branch
    %8 = sbr.rel target = $region3
  $region8: #{lstm_cnn_forward.5} parent=0 // loop_exit
    _

// kernel: lstm_cnn_forward.6
$region0: #{lstm_cnn_forward.6}
  #allocation0 [shape = 'u32[]', space=smem, size = 0x4, offset = 0x4, fixed_abs, tag = 'smem constant byte address 0x4 - core index']
  #allocation1 [shape = 'u32[144,128]{1,0:T(1,128)}', space=vmem, size = 0x12000, scoped, tag = 'internal scratch']
  %s0 = inlined_call_operand.vmem [shape: bf16[392,400], index: 0, kind: input, shape index: {}]
  %s1 = inlined_call_operand.vmem [shape: bf16[400,32], index: 1, kind: input, shape index: {}]
  %s2 = inlined_call_operand.vmem [shape: f32[1,32], index: 2, kind: input, shape index: {}]
  %s3 = inlined_call_operand.vmem [shape: bf16[392,32], index: 3, kind: output, shape index: {}]
  %s4 = sld [smem:[#allocation0]]
  $region22: #{lstm_cnn_forward.6} parent=0
    _
  %s6 = ssub.s32 1, %s4
  %s7 = scalar_select 0, %s6, %s4
  // Predicated region
  $region2: #{lstm_cnn_forward.6} parent=0 // pred_check
    _
  $region3: #{lstm_cnn_forward.6} parent=0 // pred_check_branch
    %9 = sbr.rel (0) target = $region5
  $region4: #{lstm_cnn_forward.6} parent=0 // pred_region
    _
  $region5: #{lstm_cnn_forward.6} parent=0 // pred_fallthru
    _
  // Predicated region
  $region6: #{lstm_cnn_forward.6} parent=0 // pred_check
    _
  $region7: #{lstm_cnn_forward.6} parent=0 // pred_check_branch
    %11 = sbr.rel (0) target = $region9
  $region8: #{lstm_cnn_forward.6} parent=0 // pred_region
    _
  $region9: #{lstm_cnn_forward.6} parent=0 // pred_fallthru
    _
  // Predicated region
  $region10: #{lstm_cnn_forward.6} parent=0 // pred_check
    _
  $region11: #{lstm_cnn_forward.6} parent=0 // pred_check_branch
    %13 = sbr.rel (0) target = $region13
  $region12: #{lstm_cnn_forward.6} parent=0 // pred_region
    _
  $region13: #{lstm_cnn_forward.6} parent=0 // pred_fallthru
    _
  %v15 = vld [vmem:[%s0] sm:$0xff]
  %v16 = vld [vmem:[%s0 + $0x8] sm:$0xff]
  %v17 = vld [vmem:[%s0 + $0x10] sm:$0xff]
  %v18 = vld [vmem:[%s0 + $0x18] sm:$0xff]
  %v19 = vld [vmem:[%s0 + $0x20] sm:$0xff]
  %v20 = vld [vmem:[%s0 + $0x28] sm:$0xff]
  %v21 = vld [vmem:[%s0 + $0x30] sm:$0xff]
  %v22 = vld [vmem:[%s0 + $0x38] sm:$0xff]
  %v23 = vld [vmem:[%s0 + $0x40] sm:$0xff]
  %v24 = vld [vmem:[%s0 + $0x48] sm:$0xff]
  %v25 = vld [vmem:[%s0 + $0x50] sm:$0xff]
  %v26 = vld [vmem:[%s0 + $0x58] sm:$0xff]
  %v27 = vld [vmem:[%s0 + $0x60] sm:$0xff]
  %v28 = vld [vmem:[%s0 + $0x68] sm:$0xff]
  %v29 = vld [vmem:[%s0 + $0x70] sm:$0xff]
  %v30 = vld [vmem:[%s0 + $0x78] sm:$0xff]
  %v31 = vld [vmem:[%s0 + $0x80] sm:$0xff]
  %v32 = vld [vmem:[%s0 + $0x88] sm:$0xff]
  %v33 = vld [vmem:[%s0 + $0x90] sm:$0xff]
  %v34 = vld [vmem:[%s0 + $0x98] sm:$0xff]
  %v35 = vld [vmem:[%s0 + $0xa0] sm:$0xff]
  %v36 = vld [vmem:[%s0 + $0xa8] sm:$0xff]
  %v37 = vld [vmem:[%s0 + $0xb0] sm:$0xff]
  %v38 = vld [vmem:[%s0 + $0xb8] sm:$0xff]
  %v39 = vld [vmem:[%s0 + $0xc0] sm:$0xff]
  %v40 = vld [vmem:[%s0 + $0xc8] sm:$0xff]
  %v41 = vld [vmem:[%s0 + $0xd0] sm:$0xff]
  %v42 = vld [vmem:[%s0 + $0xd8] sm:$0xff]
  %v43 = vld [vmem:[%s0 + $0xe0] sm:$0xff]
  %v44 = vld [vmem:[%s0 + $0xe8] sm:$0xff]
  %v45 = vld [vmem:[%s0 + $0xf0] sm:$0xff]
  %v46 = vld [vmem:[%s0 + $0xf8] sm:$0xff]
  %v47 = vld [vmem:[%s0 + $0x100] sm:$0xff]
  %v48 = vld [vmem:[%s0 + $0x108] sm:$0xff]
  %v49 = vld [vmem:[%s0 + $0x110] sm:$0xff]
  %v50 = vld [vmem:[%s0 + $0x118] sm:$0xff]
  %v51 = vld [vmem:[%s0 + $0x120] sm:$0xff]
  %v52 = vld [vmem:[%s0 + $0x128] sm:$0xff]
  %v53 = vld [vmem:[%s0 + $0x130] sm:$0xff]
  %v54 = vld [vmem:[%s0 + $0x138] sm:$0xff]
  %v55 = vld [vmem:[%s0 + $0x140] sm:$0xff]
  %v56 = vld [vmem:[%s0 + $0x148] sm:$0xff]
  %v57 = vld [vmem:[%s0 + $0x150] sm:$0xff]
  %v58 = vld [vmem:[%s0 + $0x158] sm:$0xff]
  %v59 = vld [vmem:[%s0 + $0x160] sm:$0xff]
  %v60 = vld [vmem:[%s0 + $0x168] sm:$0xff]
  %v61 = vld [vmem:[%s0 + $0x170] sm:$0xff]
  %v62 = vld [vmem:[%s0 + $0x178] sm:$0xff]
  %v63 = vld [vmem:[%s0 + $0x180] sm:$0xff]
  %v64 = vld [vmem:[%s0 + $0x188] sm:$0xff]
  %v65 = vld [vmem:[%s0 + $0x190] sm:$0xff]
  %v66 = vld [vmem:[%s0 + $0x198] sm:$0xff]
  %v67 = vld [vmem:[%s0 + $0x1a0] sm:$0xff]
  %v68 = vld [vmem:[%s0 + $0x1a8] sm:$0xff]
  %v69 = vld [vmem:[%s0 + $0x1b0] sm:$0xff]
  %v70 = vld [vmem:[%s0 + $0x1b8] sm:$0xff]
  %v71 = vld [vmem:[%s0 + $0x1c0] sm:$0xff]
  %v72 = vld [vmem:[%s0 + $0x1c8] sm:$0xff]
  %v73 = vld [vmem:[%s0 + $0x1d0] sm:$0xff]
  %v74 = vld [vmem:[%s0 + $0x1d8] sm:$0xff]
  %v75 = vld [vmem:[%s0 + $0x1e0] sm:$0xff]
  %v76 = vld [vmem:[%s0 + $0x1e8] sm:$0xff]
  %v77 = vld [vmem:[%s0 + $0x1f0] sm:$0xff]
  %v78 = vld [vmem:[%s0 + $0x1f8] sm:$0xff]
  %v79 = vld [vmem:[%s0 + $0x200] sm:$0xff]
  %v80 = vld [vmem:[%s0 + $0x208] sm:$0xff]
  %v81 = vld [vmem:[%s0 + $0x210] sm:$0xff]
  %v82 = vld [vmem:[%s0 + $0x218] sm:$0xff]
  %v83 = vld [vmem:[%s0 + $0x220] sm:$0xff]
  %v84 = vld [vmem:[%s0 + $0x228] sm:$0xff]
  %v85 = vld [vmem:[%s0 + $0x230] sm:$0xff]
  %v86 = vld [vmem:[%s0 + $0x238] sm:$0xff]
  %v87 = vld [vmem:[%s0 + $0x240] sm:$0xff]
  %v88 = vld [vmem:[%s0 + $0x248] sm:$0xff]
  %v89 = vld [vmem:[%s0 + $0x250] sm:$0xff]
  %v90 = vld [vmem:[%s0 + $0x258] sm:$0xff]
  %v91 = vld [vmem:[%s0 + $0x260] sm:$0xff]
  %v92 = vld [vmem:[%s0 + $0x268] sm:$0xff]
  %v93 = vld [vmem:[%s0 + $0x270] sm:$0xff]
  %v94 = vld [vmem:[%s0 + $0x278] sm:$0xff]
  %v95 = vld [vmem:[%s0 + $0x280] sm:$0xff]
  %v96 = vld [vmem:[%s0 + $0x288] sm:$0xff]
  %v97 = vld [vmem:[%s0 + $0x290] sm:$0xff]
  %v98 = vld [vmem:[%s0 + $0x298] sm:$0xff]
  %v99 = vld [vmem:[%s0 + $0x2a0] sm:$0xff]
  %v100 = vld [vmem:[%s0 + $0x2a8] sm:$0xff]
  %v101 = vld [vmem:[%s0 + $0x2b0] sm:$0xff]
  %v102 = vld [vmem:[%s0 + $0x2b8] sm:$0xff]
  %v103 = vld [vmem:[%s0 + $0x2c0] sm:$0xff]
  %v104 = vld [vmem:[%s0 + $0x2c8] sm:$0xff]
  %v105 = vld [vmem:[%s0 + $0x2d0] sm:$0xff]
  %v106 = vld [vmem:[%s0 + $0x2d8] sm:$0xff]
  %v107 = vld [vmem:[%s0 + $0x2e0] sm:$0xff]
  %v108 = vld [vmem:[%s0 + $0x2e8] sm:$0xff]
  %v109 = vld [vmem:[%s0 + $0x2f0] sm:$0xff]
  %v110 = vld [vmem:[%s0 + $0x2f8] sm:$0xff]
  %v111 = vld [vmem:[%s0 + $0x300] sm:$0xff]
  %v112 = vld [vmem:[%s0 + $0x308] sm:$0xff]
  %v113 = vld [vmem:[%s1] sm:$0xf]
  %v114 = vld [vmem:[%s1 + $0x4] sm:$0xf]
  %v115 = vld [vmem:[%s1 + $0x8] sm:$0xf]
  %v116 = vld [vmem:[%s1 + $0xc] sm:$0xf]
  %v117 = vld [vmem:[%s1 + $0x10] sm:$0xf]
  %v118 = vld [vmem:[%s1 + $0x14] sm:$0xf]
  %v119 = vld [vmem:[%s1 + $0x18] sm:$0xf]
  %v120 = vld [vmem:[%s1 + $0x1c] sm:$0xf]
  %v121 = vld [vmem:[%s1 + $0x20] sm:$0xf]
  %v122 = vld [vmem:[%s1 + $0x24] sm:$0xf]
  %v123 = vld [vmem:[%s1 + $0x28] sm:$0xf]
  %v124 = vld [vmem:[%s1 + $0x2c] sm:$0xf]
  %v125 = vld [vmem:[%s1 + $0x30] sm:$0xf]
  %v126 = vld [vmem:[%s1 + $0x34] sm:$0xf]
  %v127 = vld [vmem:[%s1 + $0x38] sm:$0xf]
  %v128 = vld [vmem:[%s1 + $0x3c] sm:$0xf]
  %v129 = vld [vmem:[%s1 + $0x40] sm:$0xf]
  %v130 = vld [vmem:[%s1 + $0x44] sm:$0xf]
  %v131 = vld [vmem:[%s1 + $0x48] sm:$0xf]
  %v132 = vld [vmem:[%s1 + $0x4c] sm:$0xf]
  %v133 = vld [vmem:[%s1 + $0x50] sm:$0xf]
  %v134 = vld [vmem:[%s1 + $0x54] sm:$0xf]
  %v135 = vld [vmem:[%s1 + $0x58] sm:$0xf]
  %v136 = vld [vmem:[%s1 + $0x5c] sm:$0xf]
  %v137 = vld [vmem:[%s1 + $0x60] sm:$0xf]
  %v138 = vld [vmem:[%s1 + $0x64] sm:$0xf]
  %v139 = vld [vmem:[%s1 + $0x68] sm:$0xf]
  %v140 = vld [vmem:[%s1 + $0x6c] sm:$0xf]
  %v141 = vld [vmem:[%s1 + $0x70] sm:$0xf]
  %v142 = vld [vmem:[%s1 + $0x74] sm:$0xf]
  %v143 = vld [vmem:[%s1 + $0x78] sm:$0xf]
  %v144 = vld [vmem:[%s1 + $0x7c] sm:$0xf]
  %v145 = vld [vmem:[%s1 + $0x80] sm:$0xf]
  %v146 = vld [vmem:[%s1 + $0x84] sm:$0xf]
  %v147 = vld [vmem:[%s1 + $0x88] sm:$0xf]
  %v148 = vld [vmem:[%s1 + $0x8c] sm:$0xf]
  %v149 = vld [vmem:[%s1 + $0x90] sm:$0xf]
  %v150 = vld [vmem:[%s1 + $0x94] sm:$0xf]
  %v151 = vld [vmem:[%s1 + $0x98] sm:$0xf]
  %v152 = vld [vmem:[%s1 + $0x9c] sm:$0xf]
  %v153 = vld [vmem:[%s1 + $0xa0] sm:$0xf]
  %v154 = vld [vmem:[%s1 + $0xa4] sm:$0xf]
  %v155 = vld [vmem:[%s1 + $0xa8] sm:$0xf]
  %v156 = vld [vmem:[%s1 + $0xac] sm:$0xf]
  %v157 = vld [vmem:[%s1 + $0xb0] sm:$0xf]
  %v158 = vld [vmem:[%s1 + $0xb4] sm:$0xf]
  %v159 = vld [vmem:[%s1 + $0xb8] sm:$0xf]
  %v160 = vld [vmem:[%s1 + $0xbc] sm:$0xf]
  %v161 = vld [vmem:[%s1 + $0xc0] sm:$0xf]
  %v162 = vld [vmem:[%s1 + $0xc4] sm:$0xf]
  %v163 = vld [vmem:[%s2] sm:$0x1]
  %v165 = vlaneseq
  %v166 = vshrl.u32 %v165, 7
  %v167 = vsub.s32 0, %v166
  %v168 = vrot.slane %v163, %v167
  %v268 = vunpack.c.l.b16 %v15
  %v269 = vunpack.c.h.b16 %v15
  %v270 = vunpack.c.l.b16 %v16
  %v271 = vunpack.c.h.b16 %v16
  %v272 = vunpack.c.l.b16 %v17
  %v273 = vunpack.c.h.b16 %v17
  %v274 = vunpack.c.l.b16 %v18
  %v275 = vunpack.c.h.b16 %v18
  %v276 = vunpack.c.l.b16 %v19
  %v277 = vunpack.c.h.b16 %v19
  %v278 = vunpack.c.l.b16 %v20
  %v279 = vunpack.c.h.b16 %v20
  %v280 = vunpack.c.l.b16 %v21
  %v281 = vunpack.c.h.b16 %v21
  %v282 = vunpack.c.l.b16 %v22
  %v283 = vunpack.c.h.b16 %v22
  %v284 = vunpack.c.l.b16 %v23
  %v285 = vunpack.c.h.b16 %v23
  %v286 = vunpack.c.l.b16 %v24
  %v287 = vunpack.c.h.b16 %v24
  %v288 = vunpack.c.l.b16 %v25
  %v289 = vunpack.c.h.b16 %v25
  %v290 = vunpack.c.l.b16 %v26
  %v291 = vunpack.c.h.b16 %v26
  %v292 = vunpack.c.l.b16 %v27
  %v293 = vunpack.c.h.b16 %v27
  %v294 = vunpack.c.l.b16 %v28
  %v295 = vunpack.c.h.b16 %v28
  %v296 = vunpack.c.l.b16 %v29
  %v297 = vunpack.c.h.b16 %v29
  %v298 = vunpack.c.l.b16 %v30
  %v299 = vunpack.c.h.b16 %v30
  %v300 = vunpack.c.l.b16 %v31
  %v301 = vunpack.c.h.b16 %v31
  %v302 = vunpack.c.l.b16 %v32
  %v303 = vunpack.c.h.b16 %v32
  %v304 = vunpack.c.l.b16 %v33
  %v305 = vunpack.c.h.b16 %v33
  %v306 = vunpack.c.l.b16 %v34
  %v307 = vunpack.c.h.b16 %v34
  %v308 = vunpack.c.l.b16 %v35
  %v309 = vunpack.c.h.b16 %v35
  %v310 = vunpack.c.l.b16 %v36
  %v311 = vunpack.c.h.b16 %v36
  %v312 = vunpack.c.l.b16 %v37
  %v313 = vunpack.c.h.b16 %v37
  %v314 = vunpack.c.l.b16 %v38
  %v315 = vunpack.c.h.b16 %v38
  %v316 = vunpack.c.l.b16 %v39
  %v317 = vunpack.c.h.b16 %v39
  %v318 = vunpack.c.l.b16 %v40
  %v319 = vunpack.c.h.b16 %v40
  %v320 = vunpack.c.l.b16 %v41
  %v321 = vunpack.c.h.b16 %v41
  %v322 = vunpack.c.l.b16 %v42
  %v323 = vunpack.c.h.b16 %v42
  %v324 = vunpack.c.l.b16 %v43
  %v325 = vunpack.c.h.b16 %v43
  %v326 = vunpack.c.l.b16 %v44
  %v327 = vunpack.c.h.b16 %v44
  %v328 = vunpack.c.l.b16 %v45
  %v329 = vunpack.c.h.b16 %v45
  %v330 = vunpack.c.l.b16 %v46
  %v331 = vunpack.c.h.b16 %v46
  %v332 = vunpack.c.l.b16 %v47
  %v333 = vunpack.c.h.b16 %v47
  %v334 = vunpack.c.l.b16 %v48
  %v335 = vunpack.c.h.b16 %v48
  %v336 = vunpack.c.l.b16 %v49
  %v337 = vunpack.c.h.b16 %v49
  %v338 = vunpack.c.l.b16 %v50
  %v339 = vunpack.c.h.b16 %v50
  %v340 = vunpack.c.l.b16 %v51
  %v341 = vunpack.c.h.b16 %v51
  %v342 = vunpack.c.l.b16 %v52
  %v343 = vunpack.c.h.b16 %v52
  %v344 = vunpack.c.l.b16 %v53
  %v345 = vunpack.c.h.b16 %v53
  %v346 = vunpack.c.l.b16 %v54
  %v347 = vunpack.c.h.b16 %v54
  %v348 = vunpack.c.l.b16 %v55
  %v349 = vunpack.c.h.b16 %v55
  %v350 = vunpack.c.l.b16 %v56
  %v351 = vunpack.c.h.b16 %v56
  %v352 = vunpack.c.l.b16 %v57
  %v353 = vunpack.c.h.b16 %v57
  %v354 = vunpack.c.l.b16 %v58
  %v355 = vunpack.c.h.b16 %v58
  %v356 = vunpack.c.l.b16 %v59
  %v357 = vunpack.c.h.b16 %v59
  %v358 = vunpack.c.l.b16 %v60
  %v359 = vunpack.c.h.b16 %v60
  %v360 = vunpack.c.l.b16 %v61
  %v361 = vunpack.c.h.b16 %v61
  %v362 = vunpack.c.l.b16 %v62
  %v363 = vunpack.c.h.b16 %v62
  %v364 = vunpack.c.l.b16 %v63
  %v365 = vunpack.c.h.b16 %v63
  %v366 = vunpack.c.l.b16 %v64
  %v367 = vunpack.c.h.b16 %v64
  %v368 = vunpack.c.l.b16 %v65
  %v369 = vunpack.c.h.b16 %v65
  %v370 = vunpack.c.l.b16 %v66
  %v371 = vunpack.c.h.b16 %v66
  %v372 = vunpack.c.l.b16 %v67
  %v373 = vunpack.c.h.b16 %v67
  %v374 = vunpack.c.l.b16 %v68
  %v375 = vunpack.c.h.b16 %v68
  %v376 = vunpack.c.l.b16 %v69
  %v377 = vunpack.c.h.b16 %v69
  %v378 = vunpack.c.l.b16 %v70
  %v379 = vunpack.c.h.b16 %v70
  %v380 = vunpack.c.l.b16 %v71
  %v381 = vunpack.c.h.b16 %v71
  %v382 = vunpack.c.l.b16 %v72
  %v383 = vunpack.c.h.b16 %v72
  %v384 = vunpack.c.l.b16 %v73
  %v385 = vunpack.c.h.b16 %v73
  %v386 = vunpack.c.l.b16 %v74
  %v387 = vunpack.c.h.b16 %v74
  %v388 = vunpack.c.l.b16 %v75
  %v389 = vunpack.c.h.b16 %v75
  %v390 = vunpack.c.l.b16 %v76
  %v391 = vunpack.c.h.b16 %v76
  %v392 = vunpack.c.l.b16 %v77
  %v393 = vunpack.c.h.b16 %v77
  %v394 = vunpack.c.l.b16 %v78
  %v395 = vunpack.c.h.b16 %v78
  %v396 = vunpack.c.l.b16 %v79
  %v397 = vunpack.c.h.b16 %v79
  %v398 = vunpack.c.l.b16 %v80
  %v399 = vunpack.c.h.b16 %v80
  %v400 = vunpack.c.l.b16 %v81
  %v401 = vunpack.c.h.b16 %v81
  %v402 = vunpack.c.l.b16 %v82
  %v403 = vunpack.c.h.b16 %v82
  %v404 = vunpack.c.l.b16 %v83
  %v405 = vunpack.c.h.b16 %v83
  %v406 = vunpack.c.l.b16 %v84
  %v407 = vunpack.c.h.b16 %v84
  %v408 = vunpack.c.l.b16 %v85
  %v409 = vunpack.c.h.b16 %v85
  %v410 = vunpack.c.l.b16 %v86
  %v411 = vunpack.c.h.b16 %v86
  %v412 = vunpack.c.l.b16 %v87
  %v413 = vunpack.c.h.b16 %v87
  %v414 = vunpack.c.l.b16 %v88
  %v415 = vunpack.c.h.b16 %v88
  %v416 = vunpack.c.l.b16 %v89
  %v417 = vunpack.c.h.b16 %v89
  %v418 = vunpack.c.l.b16 %v90
  %v419 = vunpack.c.h.b16 %v90
  %v420 = vunpack.c.l.b16 %v91
  %v421 = vunpack.c.h.b16 %v91
  %v422 = vunpack.c.l.b16 %v92
  %v423 = vunpack.c.h.b16 %v92
  %v424 = vunpack.c.l.b16 %v93
  %v425 = vunpack.c.h.b16 %v93
  %v426 = vunpack.c.l.b16 %v94
  %v427 = vunpack.c.h.b16 %v94
  %v428 = vunpack.c.l.b16 %v95
  %v429 = vunpack.c.h.b16 %v95
  %v430 = vunpack.c.l.b16 %v96
  %v431 = vunpack.c.h.b16 %v96
  %v432 = vunpack.c.l.b16 %v97
  %v433 = vunpack.c.h.b16 %v97
  %v434 = vunpack.c.l.b16 %v98
  %v435 = vunpack.c.h.b16 %v98
  %v436 = vunpack.c.l.b16 %v99
  %v437 = vunpack.c.h.b16 %v99
  %v438 = vunpack.c.l.b16 %v100
  %v439 = vunpack.c.h.b16 %v100
  %v440 = vunpack.c.l.b16 %v101
  %v441 = vunpack.c.h.b16 %v101
  %v442 = vunpack.c.l.b16 %v102
  %v443 = vunpack.c.h.b16 %v102
  %v444 = vunpack.c.l.b16 %v103
  %v445 = vunpack.c.h.b16 %v103
  %v446 = vunpack.c.l.b16 %v104
  %v447 = vunpack.c.h.b16 %v104
  %v448 = vunpack.c.l.b16 %v105
  %v449 = vunpack.c.h.b16 %v105
  %v450 = vunpack.c.l.b16 %v106
  %v451 = vunpack.c.h.b16 %v106
  %v452 = vunpack.c.l.b16 %v107
  %v453 = vunpack.c.h.b16 %v107
  %v454 = vunpack.c.l.b16 %v108
  %v455 = vunpack.c.h.b16 %v108
  %v456 = vunpack.c.l.b16 %v109
  %v457 = vunpack.c.h.b16 %v109
  %v458 = vunpack.c.l.b16 %v110
  %v459 = vunpack.c.h.b16 %v110
  %v460 = vunpack.c.l.b16 %v111
  %v461 = vunpack.c.h.b16 %v111
  %v462 = vunpack.c.l.b16 %v112
  %v463 = vunpack.c.h.b16 %v112
  %v464 = vpack.c.b16 %v272, %v268
  %v465 = vpack.c.b16 %v273, %v269
  %v466 = vpack.c.b16 %v274, %v270
  %v467 = vpack.c.b16 %v275, %v271
  %v468 = vpack.c.b16 %v280, %v276
  %v469 = vpack.c.b16 %v281, %v277
  %v470 = vpack.c.b16 %v282, %v278
  %v471 = vpack.c.b16 %v283, %v279
  %v472 = vpack.c.b16 %v288, %v284
  %v473 = vpack.c.b16 %v289, %v285
  %v474 = vpack.c.b16 %v290, %v286
  %v475 = vpack.c.b16 %v291, %v287
  %v476 = vpack.c.b16 %v296, %v292
  %v477 = vpack.c.b16 %v297, %v293
  %v478 = vpack.c.b16 %v298, %v294
  %v479 = vpack.c.b16 %v299, %v295
  %v480 = vpack.c.b16 %v304, %v300
  %v481 = vpack.c.b16 %v305, %v301
  %v482 = vpack.c.b16 %v306, %v302
  %v483 = vpack.c.b16 %v307, %v303
  %v484 = vpack.c.b16 %v312, %v308
  %v485 = vpack.c.b16 %v313, %v309
  %v486 = vpack.c.b16 %v314, %v310
  %v487 = vpack.c.b16 %v315, %v311
  %v488 = vpack.c.b16 %v320, %v316
  %v489 = vpack.c.b16 %v321, %v317
  %v490 = vpack.c.b16 %v322, %v318
  %v491 = vpack.c.b16 %v323, %v319
  %v492 = vpack.c.b16 %v328, %v324
  %v493 = vpack.c.b16 %v329, %v325
  %v494 = vpack.c.b16 %v330, %v326
  %v495 = vpack.c.b16 %v331, %v327
  %v496 = vpack.c.b16 %v336, %v332
  %v497 = vpack.c.b16 %v337, %v333
  %v498 = vpack.c.b16 %v338, %v334
  %v499 = vpack.c.b16 %v339, %v335
  %v500 = vpack.c.b16 %v344, %v340
  %v501 = vpack.c.b16 %v345, %v341
  %v502 = vpack.c.b16 %v346, %v342
  %v503 = vpack.c.b16 %v347, %v343
  %v504 = vpack.c.b16 %v352, %v348
  %v505 = vpack.c.b16 %v353, %v349
  %v506 = vpack.c.b16 %v354, %v350
  %v507 = vpack.c.b16 %v355, %v351
  %v508 = vpack.c.b16 %v360, %v356
  %v509 = vpack.c.b16 %v361, %v357
  %v510 = vpack.c.b16 %v362, %v358
  %v511 = vpack.c.b16 %v363, %v359
  %v512 = vpack.c.b16 %v368, %v364
  %v513 = vpack.c.b16 %v369, %v365
  %v514 = vpack.c.b16 %v370, %v366
  %v515 = vpack.c.b16 %v371, %v367
  %v516 = vpack.c.b16 %v376, %v372
  %v517 = vpack.c.b16 %v377, %v373
  %v518 = vpack.c.b16 %v378, %v374
  %v519 = vpack.c.b16 %v379, %v375
  %v520 = vpack.c.b16 %v384, %v380
  %v521 = vpack.c.b16 %v385, %v381
  %v522 = vpack.c.b16 %v386, %v382
  %v523 = vpack.c.b16 %v387, %v383
  %v524 = vpack.c.b16 %v392, %v388
  %v525 = vpack.c.b16 %v393, %v389
  %v526 = vpack.c.b16 %v394, %v390
  %v527 = vpack.c.b16 %v395, %v391
  %v528 = vpack.c.b16 %v400, %v396
  %v529 = vpack.c.b16 %v401, %v397
  %v530 = vpack.c.b16 %v402, %v398
  %v531 = vpack.c.b16 %v403, %v399
  %v532 = vpack.c.b16 %v408, %v404
  %v533 = vpack.c.b16 %v409, %v405
  %v534 = vpack.c.b16 %v410, %v406
  %v535 = vpack.c.b16 %v411, %v407
  %v536 = vpack.c.b16 %v416, %v412
  %v537 = vpack.c.b16 %v417, %v413
  %v538 = vpack.c.b16 %v418, %v414
  %v539 = vpack.c.b16 %v419, %v415
  %v540 = vpack.c.b16 %v424, %v420
  %v541 = vpack.c.b16 %v425, %v421
  %v542 = vpack.c.b16 %v426, %v422
  %v543 = vpack.c.b16 %v427, %v423
  %v544 = vpack.c.b16 %v432, %v428
  %v545 = vpack.c.b16 %v433, %v429
  %v546 = vpack.c.b16 %v434, %v430
  %v547 = vpack.c.b16 %v435, %v431
  %v548 = vpack.c.b16 %v440, %v436
  %v549 = vpack.c.b16 %v441, %v437
  %v550 = vpack.c.b16 %v442, %v438
  %v551 = vpack.c.b16 %v443, %v439
  %v552 = vpack.c.b16 %v448, %v444
  %v553 = vpack.c.b16 %v449, %v445
  %v554 = vpack.c.b16 %v450, %v446
  %v555 = vpack.c.b16 %v451, %v447
  %v556 = vpack.c.b16 %v456, %v452
  %v557 = vpack.c.b16 %v457, %v453
  %v558 = vpack.c.b16 %v458, %v454
  %v559 = vpack.c.b16 %v459, %v455
  %v560 = vpack.c.b16 %v460, %v460
  %v561 = vpack.c.b16 %v461, %v461
  %v562 = vpack.c.b16 %v462, %v462
  %v563 = vpack.c.b16 %v463, %v463
  %v689 = vunpack.c.l.b16 %v113
  %v690 = vunpack.c.l.b16 %v114
  %v691 = vunpack.c.l.b16 %v115
  %v692 = vunpack.c.l.b16 %v116
  %v693 = vunpack.c.l.b16 %v117
  %v694 = vunpack.c.l.b16 %v118
  %v695 = vunpack.c.l.b16 %v119
  %v696 = vunpack.c.l.b16 %v120
  %v697 = vunpack.c.l.b16 %v121
  %v698 = vunpack.c.l.b16 %v122
  %v699 = vunpack.c.l.b16 %v123
  %v700 = vunpack.c.l.b16 %v124
  %v701 = vunpack.c.l.b16 %v125
  %v702 = vunpack.c.l.b16 %v126
  %v703 = vunpack.c.l.b16 %v127
  %v704 = vunpack.c.l.b16 %v128
  %v705 = vunpack.c.l.b16 %v129
  %v706 = vunpack.c.l.b16 %v130
  %v707 = vunpack.c.l.b16 %v131
  %v708 = vunpack.c.l.b16 %v132
  %v709 = vunpack.c.l.b16 %v133
  %v710 = vunpack.c.l.b16 %v134
  %v711 = vunpack.c.l.b16 %v135
  %v712 = vunpack.c.l.b16 %v136
  %v713 = vunpack.c.l.b16 %v137
  %v714 = vunpack.c.l.b16 %v138
  %v715 = vunpack.c.l.b16 %v139
  %v716 = vunpack.c.l.b16 %v140
  %v717 = vunpack.c.l.b16 %v141
  %v718 = vunpack.c.l.b16 %v142
  %v719 = vunpack.c.l.b16 %v143
  %v720 = vunpack.c.l.b16 %v144
  %v721 = vunpack.c.l.b16 %v145
  %v722 = vunpack.c.l.b16 %v146
  %v723 = vunpack.c.l.b16 %v147
  %v724 = vunpack.c.l.b16 %v148
  %v725 = vunpack.c.l.b16 %v149
  %v726 = vunpack.c.l.b16 %v150
  %v727 = vunpack.c.l.b16 %v151
  %v728 = vunpack.c.l.b16 %v152
  %v729 = vunpack.c.l.b16 %v153
  %v730 = vunpack.c.l.b16 %v154
  %v731 = vunpack.c.l.b16 %v155
  %v732 = vunpack.c.l.b16 %v156
  %v733 = vunpack.c.l.b16 %v157
  %v734 = vunpack.c.l.b16 %v158
  %v735 = vunpack.c.l.b16 %v159
  %v736 = vunpack.c.l.b16 %v160
  %v737 = vunpack.c.l.b16 %v161
  %v738 = vunpack.c.l.b16 %v162
  %v739 = vpack.c.b16 %v690, %v689
  %v740 = vpack.c.b16 %v692, %v691
  %v741 = vpack.c.b16 %v694, %v693
  %v742 = vpack.c.b16 %v696, %v695
  %v743 = vpack.c.b16 %v698, %v697
  %v744 = vpack.c.b16 %v700, %v699
  %v745 = vpack.c.b16 %v702, %v701
  %v746 = vpack.c.b16 %v704, %v703
  %v747 = vpack.c.b16 %v706, %v705
  %v748 = vpack.c.b16 %v708, %v707
  %v749 = vpack.c.b16 %v710, %v709
  %v750 = vpack.c.b16 %v712, %v711
  %v751 = vpack.c.b16 %v714, %v713
  %v752 = vpack.c.b16 %v716, %v715
  %v753 = vpack.c.b16 %v718, %v717
  %v754 = vpack.c.b16 %v720, %v719
  %v755 = vpack.c.b16 %v722, %v721
  %v756 = vpack.c.b16 %v724, %v723
  %v757 = vpack.c.b16 %v726, %v725
  %v758 = vpack.c.b16 %v728, %v727
  %v759 = vpack.c.b16 %v730, %v729
  %v760 = vpack.c.b16 %v732, %v731
  %v761 = vpack.c.b16 %v734, %v733
  %v762 = vpack.c.b16 %v736, %v735
  %v763 = vpack.c.b16 %v738, %v737
  %vm789 = vcmask 130048
  %v791 = vsel %vm789, %v467, 0
  %v794 = vsel %vm789, %v471, 0
  %v797 = vsel %vm789, %v475, 0
  %v800 = vsel %vm789, %v479, 0
  %v803 = vsel %vm789, %v483, 0
  %v806 = vsel %vm789, %v487, 0
  %v809 = vsel %vm789, %v491, 0
  %v812 = vsel %vm789, %v495, 0
  %v815 = vsel %vm789, %v499, 0
  %v818 = vsel %vm789, %v503, 0
  %v821 = vsel %vm789, %v507, 0
  %v824 = vsel %vm789, %v511, 0
  %v827 = vsel %vm789, %v515, 0
  %v830 = vsel %vm789, %v519, 0
  %v833 = vsel %vm789, %v523, 0
  %v836 = vsel %vm789, %v527, 0
  %v839 = vsel %vm789, %v531, 0
  %v842 = vsel %vm789, %v535, 0
  %v845 = vsel %vm789, %v539, 0
  %v848 = vsel %vm789, %v543, 0
  %v851 = vsel %vm789, %v547, 0
  %v854 = vsel %vm789, %v551, 0
  %v857 = vsel %vm789, %v555, 0
  %v860 = vsel %vm789, %v559, 0
  %v863 = vsel %vm789, %v563, 0
  %865 = vmatprep.subr.bf16.mxu0 0
  %866 = vmatpush1.bf16.msra.mxu0 %v739
  %867 = vmatprep.subr.bf16.mxu0 0
  %868 = vmatpush1.bf16.msra.mxu0 %v740
  %869 = vmatprep.subr.bf16.mxu0 0
  %870 = vmatpush1.bf16.msra.mxu0 %v741
  %871 = vmatprep.subr.bf16.mxu0 0
  %872 = vmatpush1.bf16.msra.mxu0 %v742
  %873 = vmatprep.subr.bf16.mxu0 0
  %874 = vmatpush1.bf16.msra.mxu0 %v743
  %875 = vmatprep.subr.bf16.mxu0 0
  %876 = vmatpush1.bf16.msra.mxu0 %v744
  %877 = vmatprep.subr.bf16.mxu0 0
  %878 = vmatpush1.bf16.msra.mxu0 %v745
  %879 = vmatprep.subr.bf16.mxu0 0
  %880 = vmatpush1.bf16.msra.mxu0 %v746
  %881 = vmatprep.subr.bf16.mxu0 0
  %882 = vmatpush1.bf16.msra.mxu0 %v747
  %883 = vmatprep.subr.bf16.mxu0 0
  %884 = vmatpush1.bf16.msra.mxu0 %v748
  %885 = vmatprep.subr.bf16.mxu0 0
  %886 = vmatpush1.bf16.msra.mxu0 %v749
  %887 = vmatprep.subr.bf16.mxu0 0
  %888 = vmatpush1.bf16.msra.mxu0 %v750
  %889 = vmatprep.subr.bf16.mxu0 0
  %890 = vmatpush1.bf16.msra.mxu0 %v751
  %891 = vmatprep.subr.bf16.mxu0 0
  %892 = vmatpush1.bf16.msra.mxu0 %v752
  %893 = vmatprep.subr.bf16.mxu0 0
  %894 = vmatpush1.bf16.msra.mxu0 %v753
  %895 = vmatprep.subr.bf16.mxu0 0
  %896 = vmatpush1.bf16.msra.mxu0 %v754
  %897 = vmatprep.mubr.bf16.mxu0 %v465
  %898 = vmatmul.mubr.bf16.gmra.mrb[0].mxu0 %v464
  %v899 = vpop.f32.mrb[0].mxu0
  %v900 = vadd.f32 %v168, %v899
  %v901 = vpop.f32.mrb[0].mxu0
  %v902 = vpop.f32.mrb[0].mxu0
  %v903 = vadd.f32 %v168, %v902
  %v904 = vpop.f32.mrb[0].mxu0
  %905 = vmatprep.mubr.bf16.mxu0 %v469
  %906 = vmatmul.mubr.bf16.gmra.mrb[0].mxu0 %v468
  %v907 = vpop.f32.mrb[0].mxu0
  %v908 = vadd.f32 %v168, %v907
  %v909 = vpop.f32.mrb[0].mxu0
  %v910 = vpop.f32.mrb[0].mxu0
  %v911 = vadd.f32 %v168, %v910
  %v912 = vpop.f32.mrb[0].mxu0
  %913 = vmatprep.mubr.bf16.mxu0 %v473
  %914 = vmatmul.mubr.bf16.gmra.mrb[0].mxu0 %v472
  %v915 = vpop.f32.mrb[0].mxu0
  %v916 = vadd.f32 %v168, %v915
  %v917 = vpop.f32.mrb[0].mxu0
  %v918 = vpop.f32.mrb[0].mxu0
  %v919 = vadd.f32 %v168, %v918
  %v920 = vpop.f32.mrb[0].mxu0
  %921 = vmatprep.mubr.bf16.mxu0 %v477
  %922 = vmatmul.mubr.bf16.gmra.mrb[0].mxu0 %v476
  %v923 = vpop.f32.mrb[0].mxu0
  %v924 = vadd.f32 %v168, %v923
  %v925 = vpop.f32.mrb[0].mxu0
  %v926 = vpop.f32.mrb[0].mxu0
  %v927 = vadd.f32 %v168, %v926
  %v928 = vpop.f32.mrb[0].mxu0
  %929 = vmatprep.mubr.bf16.mxu0 %v481
  %930 = vmatmul.mubr.bf16.gmra.mrb[0].mxu0 %v480
  %v931 = vpop.f32.mrb[0].mxu0
  %v932 = vadd.f32 %v168, %v931
  %v933 = vpop.f32.mrb[0].mxu0
  %v934 = vpop.f32.mrb[0].mxu0
  %v935 = vadd.f32 %v168, %v934
  %v936 = vpop.f32.mrb[0].mxu0
  %937 = vmatprep.mubr.bf16.mxu0 %v485
  %938 = vmatmul.mubr.bf16.gmra.mrb[0].mxu0 %v484
  %v939 = vpop.f32.mrb[0].mxu0
  %v940 = vadd.f32 %v168, %v939
  %v941 = vpop.f32.mrb[0].mxu0
  %v942 = vpop.f32.mrb[0].mxu0
  %v943 = vadd.f32 %v168, %v942
  %v944 = vpop.f32.mrb[0].mxu0
  %945 = vmatprep.mubr.bf16.mxu0 %v489
  %946 = vmatmul.mubr.bf16.gmra.mrb[0].mxu0 %v488
  %v947 = vpop.f32.mrb[0].mxu0
  %v948 = vadd.f32 %v168, %v947
  %v949 = vpop.f32.mrb[0].mxu0
  %v950 = vpop.f32.mrb[0].mxu0
  %v951 = vadd.f32 %v168, %v950
  %v952 = vpop.f32.mrb[0].mxu0
  %953 = vmatprep.mubr.bf16.mxu0 %v493
  %954 = vmatmul.mubr.bf16.gmra.mrb[0].mxu0 %v492
  %v955 = vpop.f32.mrb[0].mxu0
  %v956 = vadd.f32 %v168, %v955
  %v957 = vpop.f32.mrb[0].mxu0
  %v958 = vpop.f32.mrb[0].mxu0
  %v959 = vadd.f32 %v168, %v958
  %v960 = vpop.f32.mrb[0].mxu0
  %961 = vmatprep.mubr.bf16.mxu0 %v497
  %962 = vmatmul.mubr.bf16.gmra.mrb[0].mxu0 %v496
  %v963 = vpop.f32.mrb[0].mxu0
  %v964 = vadd.f32 %v168, %v963
  %v965 = vpop.f32.mrb[0].mxu0
  %v966 = vpop.f32.mrb[0].mxu0
  %v967 = vadd.f32 %v168, %v966
  %v968 = vpop.f32.mrb[0].mxu0
  %969 = vmatprep.mubr.bf16.mxu0 %v501
  %970 = vmatmul.mubr.bf16.gmra.mrb[0].mxu0 %v500
  %v971 = vpop.f32.mrb[0].mxu0
  %v972 = vadd.f32 %v168, %v971
  %v973 = vpop.f32.mrb[0].mxu0
  %v974 = vpop.f32.mrb[0].mxu0
  %v975 = vadd.f32 %v168, %v974
  %v976 = vpop.f32.mrb[0].mxu0
  %977 = vmatprep.mubr.bf16.mxu0 %v505
  %978 = vmatmul.mubr.bf16.gmra.mrb[0].mxu0 %v504
  %v979 = vpop.f32.mrb[0].mxu0
  %v980 = vadd.f32 %v168, %v979
  %v981 = vpop.f32.mrb[0].mxu0
  %v982 = vpop.f32.mrb[0].mxu0
  %v983 = vadd.f32 %v168, %v982
  %v984 = vpop.f32.mrb[0].mxu0
  %985 = vmatprep.mubr.bf16.mxu0 %v509
  %986 = vmatmul.mubr.bf16.gmra.mrb[0].mxu0 %v508
  %v987 = vpop.f32.mrb[0].mxu0
  %v988 = vadd.f32 %v168, %v987
  %v989 = vpop.f32.mrb[0].mxu0
  %v990 = vpop.f32.mrb[0].mxu0
  %v991 = vadd.f32 %v168, %v990
  %v992 = vpop.f32.mrb[0].mxu0
  %993 = vmatprep.mubr.bf16.mxu0 %v513
  %994 = vmatmul.mubr.bf16.gmra.mrb[0].mxu0 %v512
  %v995 = vpop.f32.mrb[0].mxu0
  %v996 = vadd.f32 %v168, %v995
  %v997 = vpop.f32.mrb[0].mxu0
  %v998 = vpop.f32.mrb[0].mxu0
  %v999 = vadd.f32 %v168, %v998
  %v1000 = vpop.f32.mrb[0].mxu0
  %1001 = vmatprep.mubr.bf16.mxu0 %v517
  %1002 = vmatmul.mubr.bf16.gmra.mrb[0].mxu0 %v516
  %v1003 = vpop.f32.mrb[0].mxu0
  %v1004 = vadd.f32 %v168, %v1003
  %v1005 = vpop.f32.mrb[0].mxu0
  %v1006 = vpop.f32.mrb[0].mxu0
  %v1007 = vadd.f32 %v168, %v1006
  %v1008 = vpop.f32.mrb[0].mxu0
  %1009 = vmatprep.mubr.bf16.mxu0 %v521
  %1010 = vmatmul.mubr.bf16.gmra.mrb[0].mxu0 %v520
  %v1011 = vpop.f32.mrb[0].mxu0
  %v1012 = vadd.f32 %v168, %v1011
  %v1013 = vpop.f32.mrb[0].mxu0
  %v1014 = vpop.f32.mrb[0].mxu0
  %v1015 = vadd.f32 %v168, %v1014
  %v1016 = vpop.f32.mrb[0].mxu0
  %1017 = vmatprep.mubr.bf16.mxu0 %v525
  %1018 = vmatmul.mubr.bf16.gmra.mrb[0].mxu0 %v524
  %v1019 = vpop.f32.mrb[0].mxu0
  %v1020 = vadd.f32 %v168, %v1019
  %v1021 = vpop.f32.mrb[0].mxu0
  %v1022 = vpop.f32.mrb[0].mxu0
  %v1023 = vadd.f32 %v168, %v1022
  %v1024 = vpop.f32.mrb[0].mxu0
  %1025 = vmatprep.mubr.bf16.mxu0 %v529
  %1026 = vmatmul.mubr.bf16.gmra.mrb[0].mxu0 %v528
  %v1027 = vpop.f32.mrb[0].mxu0
  %v1028 = vadd.f32 %v168, %v1027
  %v1029 = vpop.f32.mrb[0].mxu0
  %v1030 = vpop.f32.mrb[0].mxu0
  %v1031 = vadd.f32 %v168, %v1030
  %v1032 = vpop.f32.mrb[0].mxu0
  %1033 = vmatprep.mubr.bf16.mxu0 %v533
  %1034 = vmatmul.mubr.bf16.gmra.mrb[0].mxu0 %v532
  %v1035 = vpop.f32.mrb[0].mxu0
  %v1036 = vadd.f32 %v168, %v1035
  %v1037 = vpop.f32.mrb[0].mxu0
  %v1038 = vpop.f32.mrb[0].mxu0
  %v1039 = vadd.f32 %v168, %v1038
  %v1040 = vpop.f32.mrb[0].mxu0
  %1041 = vmatprep.mubr.bf16.mxu0 %v537
  %1042 = vmatmul.mubr.bf16.gmra.mrb[0].mxu0 %v536
  %v1043 = vpop.f32.mrb[0].mxu0
  %v1044 = vadd.f32 %v168, %v1043
  %v1045 = vpop.f32.mrb[0].mxu0
  %v1046 = vpop.f32.mrb[0].mxu0
  %v1047 = vadd.f32 %v168, %v1046
  %v1048 = vpop.f32.mrb[0].mxu0
  %1049 = vmatprep.mubr.bf16.mxu0 %v541
  %1050 = vmatmul.mubr.bf16.gmra.mrb[0].mxu0 %v540
  %v1051 = vpop.f32.mrb[0].mxu0
  %v1052 = vadd.f32 %v168, %v1051
  %v1053 = vpop.f32.mrb[0].mxu0
  %v1054 = vpop.f32.mrb[0].mxu0
  %v1055 = vadd.f32 %v168, %v1054
  %v1056 = vpop.f32.mrb[0].mxu0
  %1057 = vmatprep.mubr.bf16.mxu0 %v545
  %1058 = vmatmul.mubr.bf16.gmra.mrb[0].mxu0 %v544
  %v1059 = vpop.f32.mrb[0].mxu0
  %v1060 = vadd.f32 %v168, %v1059
  %v1061 = vpop.f32.mrb[0].mxu0
  %v1062 = vpop.f32.mrb[0].mxu0
  %v1063 = vadd.f32 %v168, %v1062
  %v1064 = vpop.f32.mrb[0].mxu0
  %1065 = vmatprep.mubr.bf16.mxu0 %v549
  %1066 = vmatmul.mubr.bf16.gmra.mrb[0].mxu0 %v548
  %v1067 = vpop.f32.mrb[0].mxu0
  %v1068 = vadd.f32 %v168, %v1067
  %v1069 = vpop.f32.mrb[0].mxu0
  %v1070 = vpop.f32.mrb[0].mxu0
  %v1071 = vadd.f32 %v168, %v1070
  %v1072 = vpop.f32.mrb[0].mxu0
  %1073 = vmatprep.mubr.bf16.mxu0 %v553
  %1074 = vmatmul.mubr.bf16.gmra.mrb[0].mxu0 %v552
  %v1075 = vpop.f32.mrb[0].mxu0
  %v1076 = vadd.f32 %v168, %v1075
  %v1077 = vpop.f32.mrb[0].mxu0
  %v1078 = vpop.f32.mrb[0].mxu0
  %v1079 = vadd.f32 %v168, %v1078
  %v1080 = vpop.f32.mrb[0].mxu0
  %1081 = vmatprep.mubr.bf16.mxu0 %v557
  %1082 = vmatmul.mubr.bf16.gmra.mrb[0].mxu0 %v556
  %v1083 = vpop.f32.mrb[0].mxu0
  %v1084 = vadd.f32 %v168, %v1083
  %v1085 = vpop.f32.mrb[0].mxu0
  %v1086 = vpop.f32.mrb[0].mxu0
  %v1087 = vadd.f32 %v168, %v1086
  %v1088 = vpop.f32.mrb[0].mxu0
  %1089 = vmatprep.mubr.bf16.mxu0 %v561
  %1090 = vmatmul.mubr.bf16.gmra.mrb[0].mxu0 %v560
  %v1091 = vpop.f32.mrb[0].mxu0
  %v1092 = vadd.f32 %v168, %v1091
  %v1093 = vpop.f32.mrb[0].mxu0
  %v1094 = vpop.f32.mrb[0].mxu0
  %v1095 = vpop.f32.mrb[0].mxu0
  %1096 = vdwg.mxu0
  %1097 = vmatprep.subr.bf16.mxu0 0
  %1098 = vmatpush1.bf16.msra.mxu0 %v755
  %1099 = vmatprep.subr.bf16.mxu0 0
  %1100 = vmatpush1.bf16.msra.mxu0 %v756
  %1101 = vmatprep.subr.bf16.mxu0 0
  %1102 = vmatpush1.bf16.msra.mxu0 %v757
  %1103 = vmatprep.subr.bf16.mxu0 0
  %1104 = vmatpush1.bf16.msra.mxu0 %v758
  %1105 = vmatprep.subr.bf16.mxu0 0
  %1106 = vmatpush1.bf16.msra.mxu0 %v759
  %1107 = vmatprep.subr.bf16.mxu0 0
  %1108 = vmatpush1.bf16.msra.mxu0 %v760
  %1109 = vmatprep.subr.bf16.mxu0 0
  %1110 = vmatpush1.bf16.msra.mxu0 %v761
  %1111 = vmatprep.subr.bf16.mxu0 0
  %1112 = vmatpush1.bf16.msra.mxu0 %v762
  %1113 = vmatprep.subr.bf16.mxu0 0
  %1114 = vmatpush1.bf16.msra.mxu0 %v763
  %1115 = vmatprep.subr.bf16.mxu0 0
  %1116 = vmatpush1.bf16.msra.mxu0 0
  %1117 = vmatprep.subr.bf16.mxu0 0
  %1118 = vmatpush1.bf16.msra.mxu0 0
  %1119 = vmatprep.subr.bf16.mxu0 0
  %1120 = vmatpush1.bf16.msra.mxu0 0
  %1121 = vmatprep.subr.bf16.mxu0 0
  %1122 = vmatpush1.bf16.msra.mxu0 0
  %1123 = vmatprep.subr.bf16.mxu0 0
  %1124 = vmatpush1.bf16.msra.mxu0 0
  %1125 = vmatprep.subr.bf16.mxu0 0
  %1126 = vmatpush1.bf16.msra.mxu0 0
  %1127 = vmatprep.subr.bf16.mxu0 0
  %1128 = vmatpush1.bf16.msra.mxu0 0
  %1129 = vmatprep.mubr.bf16.mxu0 %v791
  %1130 = vmatmul.mubr.bf16.gmra.mrb[0].mxu0 %v466
  %v1131 = vpop.f32.mrb[0].mxu0
  %v1132 = vadd.f32 %v900, %v1131
  %v1133 = vpop.f32.mrb[0].mxu0
  %v1134 = vpop.f32.mrb[0].mxu0
  %v1135 = vadd.f32 %v903, %v1134
  %v1136 = vpop.f32.mrb[0].mxu0
  %1137 = vmatprep.mubr.bf16.mxu0 %v794
  %1138 = vmatmul.mubr.bf16.gmra.mrb[0].mxu0 %v470
  %v1139 = vpop.f32.mrb[0].mxu0
  %v1140 = vadd.f32 %v908, %v1139
  %v1141 = vpop.f32.mrb[0].mxu0
  %v1142 = vpop.f32.mrb[0].mxu0
  %v1143 = vadd.f32 %v911, %v1142
  %v1144 = vpop.f32.mrb[0].mxu0
  %1145 = vmatprep.mubr.bf16.mxu0 %v797
  %1146 = vmatmul.mubr.bf16.gmra.mrb[0].mxu0 %v474
  %v1147 = vpop.f32.mrb[0].mxu0
  %v1148 = vadd.f32 %v916, %v1147
  %v1149 = vpop.f32.mrb[0].mxu0
  %v1150 = vpop.f32.mrb[0].mxu0
  %v1151 = vadd.f32 %v919, %v1150
  %v1152 = vpop.f32.mrb[0].mxu0
  %1153 = vmatprep.mubr.bf16.mxu0 %v800
  %1154 = vmatmul.mubr.bf16.gmra.mrb[0].mxu0 %v478
  %v1155 = vpop.f32.mrb[0].mxu0
  %v1156 = vadd.f32 %v924, %v1155
  %v1157 = vpop.f32.mrb[0].mxu0
  %v1158 = vpop.f32.mrb[0].mxu0
  %v1159 = vadd.f32 %v927, %v1158
  %v1160 = vpop.f32.mrb[0].mxu0
  %1161 = vmatprep.mubr.bf16.mxu0 %v803
  %1162 = vmatmul.mubr.bf16.gmra.mrb[0].mxu0 %v482
  %v1163 = vpop.f32.mrb[0].mxu0
  %v1164 = vadd.f32 %v932, %v1163
  %v1165 = vpop.f32.mrb[0].mxu0
  %v1166 = vpop.f32.mrb[0].mxu0
  %v1167 = vadd.f32 %v935, %v1166
  %v1168 = vpop.f32.mrb[0].mxu0
  %1169 = vmatprep.mubr.bf16.mxu0 %v806
  %1170 = vmatmul.mubr.bf16.gmra.mrb[0].mxu0 %v486
  %v1171 = vpop.f32.mrb[0].mxu0
  %v1172 = vadd.f32 %v940, %v1171
  %v1173 = vpop.f32.mrb[0].mxu0
  %v1174 = vpop.f32.mrb[0].mxu0
  %v1175 = vadd.f32 %v943, %v1174
  %v1176 = vpop.f32.mrb[0].mxu0
  %1177 = vmatprep.mubr.bf16.mxu0 %v809
  %1178 = vmatmul.mubr.bf16.gmra.mrb[0].mxu0 %v490
  %v1179 = vpop.f32.mrb[0].mxu0
  %v1180 = vadd.f32 %v948, %v1179
  %v1181 = vpop.f32.mrb[0].mxu0
  %v1182 = vpop.f32.mrb[0].mxu0
  %v1183 = vadd.f32 %v951, %v1182
  %v1184 = vpop.f32.mrb[0].mxu0
  %1185 = vmatprep.mubr.bf16.mxu0 %v812
  %1186 = vmatmul.mubr.bf16.gmra.mrb[0].mxu0 %v494
  %v1187 = vpop.f32.mrb[0].mxu0
  %v1188 = vadd.f32 %v956, %v1187
  %v1189 = vpop.f32.mrb[0].mxu0
  %v1190 = vpop.f32.mrb[0].mxu0
  %v1191 = vadd.f32 %v959, %v1190
  %v1192 = vpop.f32.mrb[0].mxu0
  %1193 = vmatprep.mubr.bf16.mxu0 %v815
  %1194 = vmatmul.mubr.bf16.gmra.mrb[0].mxu0 %v498
  %v1195 = vpop.f32.mrb[0].mxu0
  %v1196 = vadd.f32 %v964, %v1195
  %v1197 = vpop.f32.mrb[0].mxu0
  %v1198 = vpop.f32.mrb[0].mxu0
  %v1199 = vadd.f32 %v967, %v1198
  %v1200 = vpop.f32.mrb[0].mxu0
  %1201 = vmatprep.mubr.bf16.mxu0 %v818
  %1202 = vmatmul.mubr.bf16.gmra.mrb[0].mxu0 %v502
  %v1203 = vpop.f32.mrb[0].mxu0
  %v1204 = vadd.f32 %v972, %v1203
  %v1205 = vpop.f32.mrb[0].mxu0
  %v1206 = vpop.f32.mrb[0].mxu0
  %v1207 = vadd.f32 %v975, %v1206
  %v1208 = vpop.f32.mrb[0].mxu0
  %1209 = vmatprep.mubr.bf16.mxu0 %v821
  %1210 = vmatmul.mubr.bf16.gmra.mrb[0].mxu0 %v506
  %v1211 = vpop.f32.mrb[0].mxu0
  %v1212 = vadd.f32 %v980, %v1211
  %v1213 = vpop.f32.mrb[0].mxu0
  %v1214 = vpop.f32.mrb[0].mxu0
  %v1215 = vadd.f32 %v983, %v1214
  %v1216 = vpop.f32.mrb[0].mxu0
  %1217 = vmatprep.mubr.bf16.mxu0 %v824
  %1218 = vmatmul.mubr.bf16.gmra.mrb[0].mxu0 %v510
  %v1219 = vpop.f32.mrb[0].mxu0
  %v1220 = vadd.f32 %v988, %v1219
  %v1221 = vpop.f32.mrb[0].mxu0
  %v1222 = vpop.f32.mrb[0].mxu0
  %v1223 = vadd.f32 %v991, %v1222
  %v1224 = vpop.f32.mrb[0].mxu0
  %1225 = vmatprep.mubr.bf16.mxu0 %v827
  %1226 = vmatmul.mubr.bf16.gmra.mrb[0].mxu0 %v514
  %v1227 = vpop.f32.mrb[0].mxu0
  %v1228 = vadd.f32 %v996, %v1227
  %v1229 = vpop.f32.mrb[0].mxu0
  %v1230 = vpop.f32.mrb[0].mxu0
  %v1231 = vadd.f32 %v999, %v1230
  %v1232 = vpop.f32.mrb[0].mxu0
  %1233 = vmatprep.mubr.bf16.mxu0 %v830
  %1234 = vmatmul.mubr.bf16.gmra.mrb[0].mxu0 %v518
  %v1235 = vpop.f32.mrb[0].mxu0
  %v1236 = vadd.f32 %v1004, %v1235
  %v1237 = vpop.f32.mrb[0].mxu0
  %v1238 = vpop.f32.mrb[0].mxu0
  %v1239 = vadd.f32 %v1007, %v1238
  %v1240 = vpop.f32.mrb[0].mxu0
  %1241 = vmatprep.mubr.bf16.mxu0 %v833
  %1242 = vmatmul.mubr.bf16.gmra.mrb[0].mxu0 %v522
  %v1243 = vpop.f32.mrb[0].mxu0
  %v1244 = vadd.f32 %v1012, %v1243
  %v1245 = vpop.f32.mrb[0].mxu0
  %v1246 = vpop.f32.mrb[0].mxu0
  %v1247 = vadd.f32 %v1015, %v1246
  %v1248 = vpop.f32.mrb[0].mxu0
  %1249 = vmatprep.mubr.bf16.mxu0 %v836
  %1250 = vmatmul.mubr.bf16.gmra.mrb[0].mxu0 %v526
  %v1251 = vpop.f32.mrb[0].mxu0
  %v1252 = vadd.f32 %v1020, %v1251
  %v1253 = vpop.f32.mrb[0].mxu0
  %v1254 = vpop.f32.mrb[0].mxu0
  %v1255 = vadd.f32 %v1023, %v1254
  %v1256 = vpop.f32.mrb[0].mxu0
  %1257 = vmatprep.mubr.bf16.mxu0 %v839
  %1258 = vmatmul.mubr.bf16.gmra.mrb[0].mxu0 %v530
  %v1259 = vpop.f32.mrb[0].mxu0
  %v1260 = vadd.f32 %v1028, %v1259
  %v1261 = vpop.f32.mrb[0].mxu0
  %v1262 = vpop.f32.mrb[0].mxu0
  %v1263 = vadd.f32 %v1031, %v1262
  %v1264 = vpop.f32.mrb[0].mxu0
  %1265 = vmatprep.mubr.bf16.mxu0 %v842
  %1266 = vmatmul.mubr.bf16.gmra.mrb[0].mxu0 %v534
  %v1267 = vpop.f32.mrb[0].mxu0
  %v1268 = vadd.f32 %v1036, %v1267
  %v1269 = vpop.f32.mrb[0].mxu0
  %v1270 = vpop.f32.mrb[0].mxu0
  %v1271 = vadd.f32 %v1039, %v1270
  %v1272 = vpop.f32.mrb[0].mxu0
  %1273 = vmatprep.mubr.bf16.mxu0 %v845
  %1274 = vmatmul.mubr.bf16.gmra.mrb[0].mxu0 %v538
  %v1275 = vpop.f32.mrb[0].mxu0
  %v1276 = vadd.f32 %v1044, %v1275
  %v1277 = vpop.f32.mrb[0].mxu0
  %v1278 = vpop.f32.mrb[0].mxu0
  %v1279 = vadd.f32 %v1047, %v1278
  %v1280 = vpop.f32.mrb[0].mxu0
  %1281 = vmatprep.mubr.bf16.mxu0 %v848
  %1282 = vmatmul.mubr.bf16.gmra.mrb[0].mxu0 %v542
  %v1283 = vpop.f32.mrb[0].mxu0
  %v1284 = vadd.f32 %v1052, %v1283
  %v1285 = vpop.f32.mrb[0].mxu0
  %v1286 = vpop.f32.mrb[0].mxu0
  %v1287 = vadd.f32 %v1055, %v1286
  %v1288 = vpop.f32.mrb[0].mxu0
  %1289 = vmatprep.mubr.bf16.mxu0 %v851
  %1290 = vmatmul.mubr.bf16.gmra.mrb[0].mxu0 %v546
  %v1291 = vpop.f32.mrb[0].mxu0
  %v1292 = vadd.f32 %v1060, %v1291
  %v1293 = vpop.f32.mrb[0].mxu0
  %v1294 = vpop.f32.mrb[0].mxu0
  %v1295 = vadd.f32 %v1063, %v1294
  %v1296 = vpop.f32.mrb[0].mxu0
  %1297 = vmatprep.mubr.bf16.mxu0 %v854
  %1298 = vmatmul.mubr.bf16.gmra.mrb[0].mxu0 %v550
  %v1299 = vpop.f32.mrb[0].mxu0
  %v1300 = vadd.f32 %v1068, %v1299
  %v1301 = vpop.f32.mrb[0].mxu0
  %v1302 = vpop.f32.mrb[0].mxu0
  %v1303 = vadd.f32 %v1071, %v1302
  %v1304 = vpop.f32.mrb[0].mxu0
  %1305 = vmatprep.mubr.bf16.mxu0 %v857
  %1306 = vmatmul.mubr.bf16.gmra.mrb[0].mxu0 %v554
  %v1307 = vpop.f32.mrb[0].mxu0
  %v1308 = vadd.f32 %v1076, %v1307
  %v1309 = vpop.f32.mrb[0].mxu0
  %v1310 = vpop.f32.mrb[0].mxu0
  %v1311 = vadd.f32 %v1079, %v1310
  %v1312 = vpop.f32.mrb[0].mxu0
  %1313 = vmatprep.mubr.bf16.mxu0 %v860
  %1314 = vmatmul.mubr.bf16.gmra.mrb[0].mxu0 %v558
  %v1315 = vpop.f32.mrb[0].mxu0
  %v1316 = vadd.f32 %v1084, %v1315
  %v1317 = vpop.f32.mrb[0].mxu0
  %v1318 = vpop.f32.mrb[0].mxu0
  %v1319 = vadd.f32 %v1087, %v1318
  %v1320 = vpop.f32.mrb[0].mxu0
  %1321 = vmatprep.mubr.bf16.mxu0 %v863
  %1322 = vmatmul.mubr.bf16.gmra.mrb[0].mxu0 %v562
  %v1323 = vpop.f32.mrb[0].mxu0
  %v1324 = vadd.f32 %v1092, %v1323
  %v1325 = vpop.f32.mrb[0].mxu0
  %v1326 = vpop.f32.mrb[0].mxu0
  %v1327 = vpop.f32.mrb[0].mxu0
  %1328 = vdwg.mxu0
  %v1329 = vmax.f32 %v1132, 0.0
  %v1330 = vmax.f32 %v1135, 0.0
  %v1331 = vmax.f32 %v1140, 0.0
  %v1332 = vmax.f32 %v1143, 0.0
  %v1333 = vmax.f32 %v1148, 0.0
  %v1334 = vmax.f32 %v1151, 0.0
  %v1335 = vmax.f32 %v1156, 0.0
  %v1336 = vmax.f32 %v1159, 0.0
  %v1337 = vmax.f32 %v1164, 0.0
  %v1338 = vmax.f32 %v1167, 0.0
  %v1339 = vmax.f32 %v1172, 0.0
  %v1340 = vmax.f32 %v1175, 0.0
  %v1341 = vmax.f32 %v1180, 0.0
  %v1342 = vmax.f32 %v1183, 0.0
  %v1343 = vmax.f32 %v1188, 0.0
  %v1344 = vmax.f32 %v1191, 0.0
  %v1345 = vmax.f32 %v1196, 0.0
  %v1346 = vmax.f32 %v1199, 0.0
  %v1347 = vmax.f32 %v1204, 0.0
  %v1348 = vmax.f32 %v1207, 0.0
  %v1349 = vmax.f32 %v1212, 0.0
  %v1350 = vmax.f32 %v1215, 0.0
  %v1351 = vmax.f32 %v1220, 0.0
  %v1352 = vmax.f32 %v1223, 0.0
  %v1353 = vmax.f32 %v1228, 0.0
  %v1354 = vmax.f32 %v1231, 0.0
  %v1355 = vmax.f32 %v1236, 0.0
  %v1356 = vmax.f32 %v1239, 0.0
  %v1357 = vmax.f32 %v1244, 0.0
  %v1358 = vmax.f32 %v1247, 0.0
  %v1359 = vmax.f32 %v1252, 0.0
  %v1360 = vmax.f32 %v1255, 0.0
  %v1361 = vmax.f32 %v1260, 0.0
  %v1362 = vmax.f32 %v1263, 0.0
  %v1363 = vmax.f32 %v1268, 0.0
  %v1364 = vmax.f32 %v1271, 0.0
  %v1365 = vmax.f32 %v1276, 0.0
  %v1366 = vmax.f32 %v1279, 0.0
  %v1367 = vmax.f32 %v1284, 0.0
  %v1368 = vmax.f32 %v1287, 0.0
  %v1369 = vmax.f32 %v1292, 0.0
  %v1370 = vmax.f32 %v1295, 0.0
  %v1371 = vmax.f32 %v1300, 0.0
  %v1372 = vmax.f32 %v1303, 0.0
  %v1373 = vmax.f32 %v1308, 0.0
  %v1374 = vmax.f32 %v1311, 0.0
  %v1375 = vmax.f32 %v1316, 0.0
  %v1376 = vmax.f32 %v1319, 0.0
  %v1377 = vmax.f32 %v1324, 0.0
  %v1378 = vpack.c.bf16 %v1330, %v1329
  %v1379 = vpack.c.bf16 %v1332, %v1331
  %v1380 = vpack.c.bf16 %v1334, %v1333
  %v1381 = vpack.c.bf16 %v1336, %v1335
  %v1382 = vpack.c.bf16 %v1338, %v1337
  %v1383 = vpack.c.bf16 %v1340, %v1339
  %v1384 = vpack.c.bf16 %v1342, %v1341
  %v1385 = vpack.c.bf16 %v1344, %v1343
  %v1386 = vpack.c.bf16 %v1346, %v1345
  %v1387 = vpack.c.bf16 %v1348, %v1347
  %v1388 = vpack.c.bf16 %v1350, %v1349
  %v1389 = vpack.c.bf16 %v1352, %v1351
  %v1390 = vpack.c.bf16 %v1354, %v1353
  %v1391 = vpack.c.bf16 %v1356, %v1355
  %v1392 = vpack.c.bf16 %v1358, %v1357
  %v1393 = vpack.c.bf16 %v1360, %v1359
  %v1394 = vpack.c.bf16 %v1362, %v1361
  %v1395 = vpack.c.bf16 %v1364, %v1363
  %v1396 = vpack.c.bf16 %v1366, %v1365
  %v1397 = vpack.c.bf16 %v1368, %v1367
  %v1398 = vpack.c.bf16 %v1370, %v1369
  %v1399 = vpack.c.bf16 %v1372, %v1371
  %v1400 = vpack.c.bf16 %v1374, %v1373
  %v1401 = vpack.c.bf16 %v1376, %v1375
  %v1402 = vpack.c.bf16 %v1377, %v1377
  %v1428 = vunpack.c.l.b16 %v1378
  %v1429 = vunpack.c.h.b16 %v1378
  %v1430 = vunpack.c.l.b16 %v1379
  %v1431 = vunpack.c.h.b16 %v1379
  %v1432 = vunpack.c.l.b16 %v1380
  %v1433 = vunpack.c.h.b16 %v1380
  %v1434 = vunpack.c.l.b16 %v1381
  %v1435 = vunpack.c.h.b16 %v1381
  %v1436 = vunpack.c.l.b16 %v1382
  %v1437 = vunpack.c.h.b16 %v1382
  %v1438 = vunpack.c.l.b16 %v1383
  %v1439 = vunpack.c.h.b16 %v1383
  %v1440 = vunpack.c.l.b16 %v1384
  %v1441 = vunpack.c.h.b16 %v1384
  %v1442 = vunpack.c.l.b16 %v1385
  %v1443 = vunpack.c.h.b16 %v1385
  %v1444 = vunpack.c.l.b16 %v1386
  %v1445 = vunpack.c.h.b16 %v1386
  %v1446 = vunpack.c.l.b16 %v1387
  %v1447 = vunpack.c.h.b16 %v1387
  %v1448 = vunpack.c.l.b16 %v1388
  %v1449 = vunpack.c.h.b16 %v1388
  %v1450 = vunpack.c.l.b16 %v1389
  %v1451 = vunpack.c.h.b16 %v1389
  %v1452 = vunpack.c.l.b16 %v1390
  %v1453 = vunpack.c.h.b16 %v1390
  %v1454 = vunpack.c.l.b16 %v1391
  %v1455 = vunpack.c.h.b16 %v1391
  %v1456 = vunpack.c.l.b16 %v1392
  %v1457 = vunpack.c.h.b16 %v1392
  %v1458 = vunpack.c.l.b16 %v1393
  %v1459 = vunpack.c.h.b16 %v1393
  %v1460 = vunpack.c.l.b16 %v1394
  %v1461 = vunpack.c.h.b16 %v1394
  %v1462 = vunpack.c.l.b16 %v1395
  %v1463 = vunpack.c.h.b16 %v1395
  %v1464 = vunpack.c.l.b16 %v1396
  %v1465 = vunpack.c.h.b16 %v1396
  %v1466 = vunpack.c.l.b16 %v1397
  %v1467 = vunpack.c.h.b16 %v1397
  %v1468 = vunpack.c.l.b16 %v1398
  %v1469 = vunpack.c.h.b16 %v1398
  %v1470 = vunpack.c.l.b16 %v1399
  %v1471 = vunpack.c.h.b16 %v1399
  %v1472 = vunpack.c.l.b16 %v1400
  %v1473 = vunpack.c.h.b16 %v1400
  %v1474 = vunpack.c.l.b16 %v1401
  %v1475 = vunpack.c.h.b16 %v1401
  %v1476 = vunpack.c.l.b16 %v1402
  %v1477 = vpack.c.b16 %v1428, %v1428
  %v1478 = vpack.c.b16 %v1429, %v1429
  %v1479 = vpack.c.b16 %v1430, %v1430
  %v1480 = vpack.c.b16 %v1431, %v1431
  %v1481 = vpack.c.b16 %v1432, %v1432
  %v1482 = vpack.c.b16 %v1433, %v1433
  %v1483 = vpack.c.b16 %v1434, %v1434
  %v1484 = vpack.c.b16 %v1435, %v1435
  %v1485 = vpack.c.b16 %v1436, %v1436
  %v1486 = vpack.c.b16 %v1437, %v1437
  %v1487 = vpack.c.b16 %v1438, %v1438
  %v1488 = vpack.c.b16 %v1439, %v1439
  %v1489 = vpack.c.b16 %v1440, %v1440
  %v1490 = vpack.c.b16 %v1441, %v1441
  %v1491 = vpack.c.b16 %v1442, %v1442
  %v1492 = vpack.c.b16 %v1443, %v1443
  %v1493 = vpack.c.b16 %v1444, %v1444
  %v1494 = vpack.c.b16 %v1445, %v1445
  %v1495 = vpack.c.b16 %v1446, %v1446
  %v1496 = vpack.c.b16 %v1447, %v1447
  %v1497 = vpack.c.b16 %v1448, %v1448
  %v1498 = vpack.c.b16 %v1449, %v1449
  %v1499 = vpack.c.b16 %v1450, %v1450
  %v1500 = vpack.c.b16 %v1451, %v1451
  %v1501 = vpack.c.b16 %v1452, %v1452
  %v1502 = vpack.c.b16 %v1453, %v1453
  %v1503 = vpack.c.b16 %v1454, %v1454
  %v1504 = vpack.c.b16 %v1455, %v1455
  %v1505 = vpack.c.b16 %v1456, %v1456
  %v1506 = vpack.c.b16 %v1457, %v1457
  %v1507 = vpack.c.b16 %v1458, %v1458
  %v1508 = vpack.c.b16 %v1459, %v1459
  %v1509 = vpack.c.b16 %v1460, %v1460
  %v1510 = vpack.c.b16 %v1461, %v1461
  %v1511 = vpack.c.b16 %v1462, %v1462
  %v1512 = vpack.c.b16 %v1463, %v1463
  %v1513 = vpack.c.b16 %v1464, %v1464
  %v1514 = vpack.c.b16 %v1465, %v1465
  %v1515 = vpack.c.b16 %v1466, %v1466
  %v1516 = vpack.c.b16 %v1467, %v1467
  %v1517 = vpack.c.b16 %v1468, %v1468
  %v1518 = vpack.c.b16 %v1469, %v1469
  %v1519 = vpack.c.b16 %v1470, %v1470
  %v1520 = vpack.c.b16 %v1471, %v1471
  %v1521 = vpack.c.b16 %v1472, %v1472
  %v1522 = vpack.c.b16 %v1473, %v1473
  %v1523 = vpack.c.b16 %v1474, %v1474
  %v1524 = vpack.c.b16 %v1475, %v1475
  %v1525 = vpack.c.b16 %v1476, %v1476
  %vm1575 = vcmask 257024
  %1576 = vst.msk [vmem:[%s3] sm:$0xf] %vm1575, %v1477
  %1577 = vst.msk [vmem:[%s3 + $0x4] sm:$0xf] %vm1575, %v1478
  %1578 = vst.msk [vmem:[%s3 + $0x8] sm:$0xf] %vm1575, %v1479
  %1579 = vst.msk [vmem:[%s3 + $0xc] sm:$0xf] %vm1575, %v1480
  %1580 = vst.msk [vmem:[%s3 + $0x10] sm:$0xf] %vm1575, %v1481
  %1581 = vst.msk [vmem:[%s3 + $0x14] sm:$0xf] %vm1575, %v1482
  %1582 = vst.msk [vmem:[%s3 + $0x18] sm:$0xf] %vm1575, %v1483
  %1583 = vst.msk [vmem:[%s3 + $0x1c] sm:$0xf] %vm1575, %v1484
  %1584 = vst.msk [vmem:[%s3 + $0x20] sm:$0xf] %vm1575, %v1485
  %1585 = vst.msk [vmem:[%s3 + $0x24] sm:$0xf] %vm1575, %v1486
  %1586 = vst.msk [vmem:[%s3 + $0x28] sm:$0xf] %vm1575, %v1487
  %1587 = vst.msk [vmem:[%s3 + $0x2c] sm:$0xf] %vm1575, %v1488
  %1588 = vst.msk [vmem:[%s3 + $0x30] sm:$0xf] %vm1575, %v1489
  %1589 = vst.msk [vmem:[%s3 + $0x34] sm:$0xf] %vm1575, %v1490
  %1590 = vst.msk [vmem:[%s3 + $0x38] sm:$0xf] %vm1575, %v1491
  %1591 = vst.msk [vmem:[%s3 + $0x3c] sm:$0xf] %vm1575, %v1492
  %1592 = vst.msk [vmem:[%s3 + $0x40] sm:$0xf] %vm1575, %v1493
  %1593 = vst.msk [vmem:[%s3 + $0x44] sm:$0xf] %vm1575, %v1494
  %1594 = vst.msk [vmem:[%s3 + $0x48] sm:$0xf] %vm1575, %v1495
  %1595 = vst.msk [vmem:[%s3 + $0x4c] sm:$0xf] %vm1575, %v1496
  %1596 = vst.msk [vmem:[%s3 + $0x50] sm:$0xf] %vm1575, %v1497
  %1597 = vst.msk [vmem:[%s3 + $0x54] sm:$0xf] %vm1575, %v1498
  %1598 = vst.msk [vmem:[%s3 + $0x58] sm:$0xf] %vm1575, %v1499
  %1599 = vst.msk [vmem:[%s3 + $0x5c] sm:$0xf] %vm1575, %v1500
  %1600 = vst.msk [vmem:[%s3 + $0x60] sm:$0xf] %vm1575, %v1501
  %1601 = vst.msk [vmem:[%s3 + $0x64] sm:$0xf] %vm1575, %v1502
  %1602 = vst.msk [vmem:[%s3 + $0x68] sm:$0xf] %vm1575, %v1503
  %1603 = vst.msk [vmem:[%s3 + $0x6c] sm:$0xf] %vm1575, %v1504
  %1604 = vst.msk [vmem:[%s3 + $0x70] sm:$0xf] %vm1575, %v1505
  %1605 = vst.msk [vmem:[%s3 + $0x74] sm:$0xf] %vm1575, %v1506
  %1606 = vst.msk [vmem:[%s3 + $0x78] sm:$0xf] %vm1575, %v1507
  %1607 = vst.msk [vmem:[%s3 + $0x7c] sm:$0xf] %vm1575, %v1508
  %1608 = vst.msk [vmem:[%s3 + $0x80] sm:$0xf] %vm1575, %v1509
  %1609 = vst.msk [vmem:[%s3 + $0x84] sm:$0xf] %vm1575, %v1510
  %1610 = vst.msk [vmem:[%s3 + $0x88] sm:$0xf] %vm1575, %v1511
  %1611 = vst.msk [vmem:[%s3 + $0x8c] sm:$0xf] %vm1575, %v1512
  %1612 = vst.msk [vmem:[%s3 + $0x90] sm:$0xf] %vm1575, %v1513
  %1613 = vst.msk [vmem:[%s3 + $0x94] sm:$0xf] %vm1575, %v1514
  %1614 = vst.msk [vmem:[%s3 + $0x98] sm:$0xf] %vm1575, %v1515
  %1615 = vst.msk [vmem:[%s3 + $0x9c] sm:$0xf] %vm1575, %v1516
  %1616 = vst.msk [vmem:[%s3 + $0xa0] sm:$0xf] %vm1575, %v1517
  %1617 = vst.msk [vmem:[%s3 + $0xa4] sm:$0xf] %vm1575, %v1518
  %1618 = vst.msk [vmem:[%s3 + $0xa8] sm:$0xf] %vm1575, %v1519
  %1619 = vst.msk [vmem:[%s3 + $0xac] sm:$0xf] %vm1575, %v1520
  %1620 = vst.msk [vmem:[%s3 + $0xb0] sm:$0xf] %vm1575, %v1521
  %1621 = vst.msk [vmem:[%s3 + $0xb4] sm:$0xf] %vm1575, %v1522
  %1622 = vst.msk [vmem:[%s3 + $0xb8] sm:$0xf] %vm1575, %v1523
  %1623 = vst.msk [vmem:[%s3 + $0xbc] sm:$0xf] %vm1575, %v1524
  %1624 = vst.msk [vmem:[%s3 + $0xc0] sm:$0xf] %vm1575, %v1525
  // Predicated region
  $region14: #{lstm_cnn_forward.6} parent=0 // pred_check
    _
  $region15: #{lstm_cnn_forward.6} parent=0 // pred_check_branch
    %1626 = sbr.rel (0) target = $region17
  $region16: #{lstm_cnn_forward.6} parent=0 // pred_region
    _
  $region17: #{lstm_cnn_forward.6} parent=0 // pred_fallthru
    _
  // Predicated region
  $region18: #{lstm_cnn_forward.6} parent=0 // pred_check
    _
  $region19: #{lstm_cnn_forward.6} parent=0 // pred_check_branch
    %1628 = sbr.rel (0) target = $region21
  $region20: #{lstm_cnn_forward.6} parent=0 // pred_region
    _
  $region21: #{lstm_cnn_forward.6} parent=0 // pred_fallthru
    _

// kernel: lstm_cnn_forward.7
$region0: #{lstm_cnn_forward.7}
  #allocation0 [shape = 'u32[]', space=smem, size = 0x4, offset = 0x4, fixed_abs, tag = 'smem constant byte address 0x4 - core index']
  #allocation1 [shape = 'u32[144,128]{1,0:T(1,128)}', space=vmem, size = 0x12000, scoped, tag = 'internal scratch']
  %s0 = inlined_call_operand.vmem [shape: bf16[32,800], index: 0, kind: input, shape index: {}]
  %s1 = inlined_call_operand.vmem [shape: bf16[800,64], index: 1, kind: input, shape index: {}]
  %s2 = inlined_call_operand.vmem [shape: f32[1,64], index: 2, kind: input, shape index: {}]
  %s3 = inlined_call_operand.vmem [shape: bf16[32,64], index: 3, kind: output, shape index: {}]
  %s4 = sld [smem:[#allocation0]]
  $region22: #{lstm_cnn_forward.7} parent=0
    _
  %s6 = ssub.s32 1, %s4
  %s7 = scalar_select 0, %s6, %s4
  // Predicated region
  $region2: #{lstm_cnn_forward.7} parent=0 // pred_check
    _
  $region3: #{lstm_cnn_forward.7} parent=0 // pred_check_branch
    %9 = sbr.rel (0) target = $region5
  $region4: #{lstm_cnn_forward.7} parent=0 // pred_region
    _
  $region5: #{lstm_cnn_forward.7} parent=0 // pred_fallthru
    _
  // Predicated region
  $region6: #{lstm_cnn_forward.7} parent=0 // pred_check
    _
  $region7: #{lstm_cnn_forward.7} parent=0 // pred_check_branch
    %11 = sbr.rel (0) target = $region9
  $region8: #{lstm_cnn_forward.7} parent=0 // pred_region
    _
  $region9: #{lstm_cnn_forward.7} parent=0 // pred_fallthru
    _
  // Predicated region
  $region10: #{lstm_cnn_forward.7} parent=0 // pred_check
    _
  $region11: #{lstm_cnn_forward.7} parent=0 // pred_check_branch
    %13 = sbr.rel (0) target = $region13
  $region12: #{lstm_cnn_forward.7} parent=0 // pred_region
    _
  $region13: #{lstm_cnn_forward.7} parent=0 // pred_fallthru
    _
  %v15 = vld [vmem:[%s0] sm:$0xff]
  %v16 = vld [vmem:[%s0 + $0x8] sm:$0xff]
  %v17 = vld [vmem:[%s0 + $0x10] sm:$0xff]
  %v18 = vld [vmem:[%s0 + $0x18] sm:$0xf]
  %v19 = vld [vmem:[%s0 + $0x1c] sm:$0xff]
  %v20 = vld [vmem:[%s0 + $0x24] sm:$0xff]
  %v21 = vld [vmem:[%s0 + $0x2c] sm:$0xff]
  %v22 = vld [vmem:[%s0 + $0x34] sm:$0xf]
  %v23 = vld [vmem:[%s0 + $0x38] sm:$0xff]
  %v24 = vld [vmem:[%s0 + $0x40] sm:$0xff]
  %v25 = vld [vmem:[%s0 + $0x48] sm:$0xff]
  %v26 = vld [vmem:[%s0 + $0x50] sm:$0xf]
  %v27 = vld [vmem:[%s0 + $0x54] sm:$0xff]
  %v28 = vld [vmem:[%s0 + $0x5c] sm:$0xff]
  %v29 = vld [vmem:[%s0 + $0x64] sm:$0xff]
  %v30 = vld [vmem:[%s0 + $0x6c] sm:$0xf]
  %v31 = vld [vmem:[%s1] sm:$0xf]
  %v32 = vld [vmem:[%s1 + $0x4] sm:$0xf]
  %v33 = vld [vmem:[%s1 + $0x8] sm:$0xf]
  %v34 = vld [vmem:[%s1 + $0xc] sm:$0xf]
  %v35 = vld [vmem:[%s1 + $0x10] sm:$0xf]
  %v36 = vld [vmem:[%s1 + $0x14] sm:$0xf]
  %v37 = vld [vmem:[%s1 + $0x18] sm:$0xf]
  %v38 = vld [vmem:[%s1 + $0x1c] sm:$0xf]
  %v39 = vld [vmem:[%s1 + $0x20] sm:$0xf]
  %v40 = vld [vmem:[%s1 + $0x24] sm:$0xf]
  %v41 = vld [vmem:[%s1 + $0x28] sm:$0xf]
  %v42 = vld [vmem:[%s1 + $0x2c] sm:$0xf]
  %v43 = vld [vmem:[%s1 + $0x30] sm:$0xf]
  %v44 = vld [vmem:[%s1 + $0x34] sm:$0xf]
  %v45 = vld [vmem:[%s1 + $0x38] sm:$0xf]
  %v46 = vld [vmem:[%s1 + $0x3c] sm:$0xf]
  %v47 = vld [vmem:[%s1 + $0x40] sm:$0xf]
  %v48 = vld [vmem:[%s1 + $0x44] sm:$0xf]
  %v49 = vld [vmem:[%s1 + $0x48] sm:$0xf]
  %v50 = vld [vmem:[%s1 + $0x4c] sm:$0xf]
  %v51 = vld [vmem:[%s1 + $0x50] sm:$0xf]
  %v52 = vld [vmem:[%s1 + $0x54] sm:$0xf]
  %v53 = vld [vmem:[%s1 + $0x58] sm:$0xf]
  %v54 = vld [vmem:[%s1 + $0x5c] sm:$0xf]
  %v55 = vld [vmem:[%s1 + $0x60] sm:$0xf]
  %v56 = vld [vmem:[%s1 + $0x64] sm:$0xf]
  %v57 = vld [vmem:[%s1 + $0x68] sm:$0xf]
  %v58 = vld [vmem:[%s1 + $0x6c] sm:$0xf]
  %v59 = vld [vmem:[%s1 + $0x70] sm:$0xf]
  %v60 = vld [vmem:[%s1 + $0x74] sm:$0xf]
  %v61 = vld [vmem:[%s1 + $0x78] sm:$0xf]
  %v62 = vld [vmem:[%s1 + $0x7c] sm:$0xf]
  %v63 = vld [vmem:[%s1 + $0x80] sm:$0xf]
  %v64 = vld [vmem:[%s1 + $0x84] sm:$0xf]
  %v65 = vld [vmem:[%s1 + $0x88] sm:$0xf]
  %v66 = vld [vmem:[%s1 + $0x8c] sm:$0xf]
  %v67 = vld [vmem:[%s1 + $0x90] sm:$0xf]
  %v68 = vld [vmem:[%s1 + $0x94] sm:$0xf]
  %v69 = vld [vmem:[%s1 + $0x98] sm:$0xf]
  %v70 = vld [vmem:[%s1 + $0x9c] sm:$0xf]
  %v71 = vld [vmem:[%s1 + $0xa0] sm:$0xf]
  %v72 = vld [vmem:[%s1 + $0xa4] sm:$0xf]
  %v73 = vld [vmem:[%s1 + $0xa8] sm:$0xf]
  %v74 = vld [vmem:[%s1 + $0xac] sm:$0xf]
  %v75 = vld [vmem:[%s1 + $0xb0] sm:$0xf]
  %v76 = vld [vmem:[%s1 + $0xb4] sm:$0xf]
  %v77 = vld [vmem:[%s1 + $0xb8] sm:$0xf]
  %v78 = vld [vmem:[%s1 + $0xbc] sm:$0xf]
  %v79 = vld [vmem:[%s1 + $0xc0] sm:$0xf]
  %v80 = vld [vmem:[%s1 + $0xc4] sm:$0xf]
  %v81 = vld [vmem:[%s1 + $0xc8] sm:$0xf]
  %v82 = vld [vmem:[%s1 + $0xcc] sm:$0xf]
  %v83 = vld [vmem:[%s1 + $0xd0] sm:$0xf]
  %v84 = vld [vmem:[%s1 + $0xd4] sm:$0xf]
  %v85 = vld [vmem:[%s1 + $0xd8] sm:$0xf]
  %v86 = vld [vmem:[%s1 + $0xdc] sm:$0xf]
  %v87 = vld [vmem:[%s1 + $0xe0] sm:$0xf]
  %v88 = vld [vmem:[%s1 + $0xe4] sm:$0xf]
  %v89 = vld [vmem:[%s1 + $0xe8] sm:$0xf]
  %v90 = vld [vmem:[%s1 + $0xec] sm:$0xf]
  %v91 = vld [vmem:[%s1 + $0xf0] sm:$0xf]
  %v92 = vld [vmem:[%s1 + $0xf4] sm:$0xf]
  %v93 = vld [vmem:[%s1 + $0xf8] sm:$0xf]
  %v94 = vld [vmem:[%s1 + $0xfc] sm:$0xf]
  %v95 = vld [vmem:[%s1 + $0x100] sm:$0xf]
  %v96 = vld [vmem:[%s1 + $0x104] sm:$0xf]
  %v97 = vld [vmem:[%s1 + $0x108] sm:$0xf]
  %v98 = vld [vmem:[%s1 + $0x10c] sm:$0xf]
  %v99 = vld [vmem:[%s1 + $0x110] sm:$0xf]
  %v100 = vld [vmem:[%s1 + $0x114] sm:$0xf]
  %v101 = vld [vmem:[%s1 + $0x118] sm:$0xf]
  %v102 = vld [vmem:[%s1 + $0x11c] sm:$0xf]
  %v103 = vld [vmem:[%s1 + $0x120] sm:$0xf]
  %v104 = vld [vmem:[%s1 + $0x124] sm:$0xf]
  %v105 = vld [vmem:[%s1 + $0x128] sm:$0xf]
  %v106 = vld [vmem:[%s1 + $0x12c] sm:$0xf]
  %v107 = vld [vmem:[%s1 + $0x130] sm:$0xf]
  %v108 = vld [vmem:[%s1 + $0x134] sm:$0xf]
  %v109 = vld [vmem:[%s1 + $0x138] sm:$0xf]
  %v110 = vld [vmem:[%s1 + $0x13c] sm:$0xf]
  %v111 = vld [vmem:[%s1 + $0x140] sm:$0xf]
  %v112 = vld [vmem:[%s1 + $0x144] sm:$0xf]
  %v113 = vld [vmem:[%s1 + $0x148] sm:$0xf]
  %v114 = vld [vmem:[%s1 + $0x14c] sm:$0xf]
  %v115 = vld [vmem:[%s1 + $0x150] sm:$0xf]
  %v116 = vld [vmem:[%s1 + $0x154] sm:$0xf]
  %v117 = vld [vmem:[%s1 + $0x158] sm:$0xf]
  %v118 = vld [vmem:[%s1 + $0x15c] sm:$0xf]
  %v119 = vld [vmem:[%s1 + $0x160] sm:$0xf]
  %v120 = vld [vmem:[%s1 + $0x164] sm:$0xf]
  %v121 = vld [vmem:[%s1 + $0x168] sm:$0xf]
  %v122 = vld [vmem:[%s1 + $0x16c] sm:$0xf]
  %v123 = vld [vmem:[%s1 + $0x170] sm:$0xf]
  %v124 = vld [vmem:[%s1 + $0x174] sm:$0xf]
  %v125 = vld [vmem:[%s1 + $0x178] sm:$0xf]
  %v126 = vld [vmem:[%s1 + $0x17c] sm:$0xf]
  %v127 = vld [vmem:[%s1 + $0x180] sm:$0xf]
  %v128 = vld [vmem:[%s1 + $0x184] sm:$0xf]
  %v129 = vld [vmem:[%s1 + $0x188] sm:$0xf]
  %v130 = vld [vmem:[%s1 + $0x18c] sm:$0xf]
  %v131 = vld [vmem:[%s2] sm:$0x1]
  %v133 = vlaneseq
  %v134 = vshrl.u32 %v133, 7
  %v135 = vsub.s32 0, %v134
  %v136 = vrot.slane %v131, %v135
  %v154 = vunpack.c.l.b16 %v15
  %v155 = vunpack.c.h.b16 %v15
  %v156 = vunpack.c.l.b16 %v16
  %v157 = vunpack.c.h.b16 %v16
  %v158 = vunpack.c.l.b16 %v17
  %v159 = vunpack.c.h.b16 %v17
  %v160 = vunpack.c.l.b16 %v18
  %v161 = vunpack.c.l.b16 %v19
  %v162 = vunpack.c.h.b16 %v19
  %v163 = vunpack.c.l.b16 %v20
  %v164 = vunpack.c.h.b16 %v20
  %v165 = vunpack.c.l.b16 %v21
  %v166 = vunpack.c.h.b16 %v21
  %v167 = vunpack.c.l.b16 %v22
  %v168 = vunpack.c.l.b16 %v23
  %v169 = vunpack.c.h.b16 %v23
  %v170 = vunpack.c.l.b16 %v24
  %v171 = vunpack.c.h.b16 %v24
  %v172 = vunpack.c.l.b16 %v25
  %v173 = vunpack.c.h.b16 %v25
  %v174 = vunpack.c.l.b16 %v26
  %v175 = vunpack.c.l.b16 %v27
  %v176 = vunpack.c.h.b16 %v27
  %v177 = vunpack.c.l.b16 %v28
  %v178 = vunpack.c.h.b16 %v28
  %v179 = vunpack.c.l.b16 %v29
  %v180 = vunpack.c.h.b16 %v29
  %v181 = vunpack.c.l.b16 %v30
  %v182 = vpack.c.b16 %v161, %v154
  %v183 = vpack.c.b16 %v162, %v155
  %v184 = vpack.c.b16 %v163, %v156
  %v185 = vpack.c.b16 %v164, %v157
  %v186 = vpack.c.b16 %v165, %v158
  %v187 = vpack.c.b16 %v166, %v159
  %v188 = vpack.c.b16 %v167, %v160
  %v189 = vpack.c.b16 %v175, %v168
  %v190 = vpack.c.b16 %v176, %v169
  %v191 = vpack.c.b16 %v177, %v170
  %v192 = vpack.c.b16 %v178, %v171
  %v193 = vpack.c.b16 %v179, %v172
  %v194 = vpack.c.b16 %v180, %v173
  %v195 = vpack.c.b16 %v181, %v174
  %v308 = vunpack.c.l.b16 %v31
  %v309 = vunpack.c.l.b16 %v32
  %v310 = vunpack.c.l.b16 %v33
  %v311 = vunpack.c.l.b16 %v34
  %v312 = vunpack.c.l.b16 %v35
  %v313 = vunpack.c.l.b16 %v36
  %v314 = vunpack.c.l.b16 %v37
  %v315 = vunpack.c.l.b16 %v38
  %v316 = vunpack.c.l.b16 %v39
  %v317 = vunpack.c.l.b16 %v40
  %v318 = vunpack.c.l.b16 %v41
  %v319 = vunpack.c.l.b16 %v42
  %v320 = vunpack.c.l.b16 %v43
  %v321 = vunpack.c.l.b16 %v44
  %v322 = vunpack.c.l.b16 %v45
  %v323 = vunpack.c.l.b16 %v46
  %v324 = vunpack.c.l.b16 %v47
  %v325 = vunpack.c.l.b16 %v48
  %v326 = vunpack.c.l.b16 %v49
  %v327 = vunpack.c.l.b16 %v50
  %v328 = vunpack.c.l.b16 %v51
  %v329 = vunpack.c.l.b16 %v52
  %v330 = vunpack.c.l.b16 %v53
  %v331 = vunpack.c.l.b16 %v54
  %v332 = vunpack.c.l.b16 %v55
  %v333 = vunpack.c.l.b16 %v56
  %v334 = vunpack.c.l.b16 %v57
  %v335 = vunpack.c.l.b16 %v58
  %v336 = vunpack.c.l.b16 %v59
  %v337 = vunpack.c.l.b16 %v60
  %v338 = vunpack.c.l.b16 %v61
  %v339 = vunpack.c.l.b16 %v62
  %v340 = vunpack.c.l.b16 %v63
  %v341 = vunpack.c.l.b16 %v64
  %v342 = vunpack.c.l.b16 %v65
  %v343 = vunpack.c.l.b16 %v66
  %v344 = vunpack.c.l.b16 %v67
  %v345 = vunpack.c.l.b16 %v68
  %v346 = vunpack.c.l.b16 %v69
  %v347 = vunpack.c.l.b16 %v70
  %v348 = vunpack.c.l.b16 %v71
  %v349 = vunpack.c.l.b16 %v72
  %v350 = vunpack.c.l.b16 %v73
  %v351 = vunpack.c.l.b16 %v74
  %v352 = vunpack.c.l.b16 %v75
  %v353 = vunpack.c.l.b16 %v76
  %v354 = vunpack.c.l.b16 %v77
  %v355 = vunpack.c.l.b16 %v78
  %v356 = vunpack.c.l.b16 %v79
  %v357 = vunpack.c.l.b16 %v80
  %v358 = vunpack.c.l.b16 %v81
  %v359 = vunpack.c.l.b16 %v82
  %v360 = vunpack.c.l.b16 %v83
  %v361 = vunpack.c.l.b16 %v84
  %v362 = vunpack.c.l.b16 %v85
  %v363 = vunpack.c.l.b16 %v86
  %v364 = vunpack.c.l.b16 %v87
  %v365 = vunpack.c.l.b16 %v88
  %v366 = vunpack.c.l.b16 %v89
  %v367 = vunpack.c.l.b16 %v90
  %v368 = vunpack.c.l.b16 %v91
  %v369 = vunpack.c.l.b16 %v92
  %v370 = vunpack.c.l.b16 %v93
  %v371 = vunpack.c.l.b16 %v94
  %v372 = vunpack.c.l.b16 %v95
  %v373 = vunpack.c.l.b16 %v96
  %v374 = vunpack.c.l.b16 %v97
  %v375 = vunpack.c.l.b16 %v98
  %v376 = vunpack.c.l.b16 %v99
  %v377 = vunpack.c.l.b16 %v100
  %v378 = vunpack.c.l.b16 %v101
  %v379 = vunpack.c.l.b16 %v102
  %v380 = vunpack.c.l.b16 %v103
  %v381 = vunpack.c.l.b16 %v104
  %v382 = vunpack.c.l.b16 %v105
  %v383 = vunpack.c.l.b16 %v106
  %v384 = vunpack.c.l.b16 %v107
  %v385 = vunpack.c.l.b16 %v108
  %v386 = vunpack.c.l.b16 %v109
  %v387 = vunpack.c.l.b16 %v110
  %v388 = vunpack.c.l.b16 %v111
  %v389 = vunpack.c.l.b16 %v112
  %v390 = vunpack.c.l.b16 %v113
  %v391 = vunpack.c.l.b16 %v114
  %v392 = vunpack.c.l.b16 %v115
  %v393 = vunpack.c.l.b16 %v116
  %v394 = vunpack.c.l.b16 %v117
  %v395 = vunpack.c.l.b16 %v118
  %v396 = vunpack.c.l.b16 %v119
  %v397 = vunpack.c.l.b16 %v120
  %v398 = vunpack.c.l.b16 %v121
  %v399 = vunpack.c.l.b16 %v122
  %v400 = vunpack.c.l.b16 %v123
  %v401 = vunpack.c.l.b16 %v124
  %v402 = vunpack.c.l.b16 %v125
  %v403 = vunpack.c.l.b16 %v126
  %v404 = vunpack.c.l.b16 %v127
  %v405 = vunpack.c.l.b16 %v128
  %v406 = vunpack.c.l.b16 %v129
  %v407 = vunpack.c.l.b16 %v130
  %v408 = vpack.c.b16 %v309, %v308
  %v409 = vpack.c.b16 %v311, %v310
  %v410 = vpack.c.b16 %v313, %v312
  %v411 = vpack.c.b16 %v315, %v314
  %v412 = vpack.c.b16 %v317, %v316
  %v413 = vpack.c.b16 %v319, %v318
  %v414 = vpack.c.b16 %v321, %v320
  %v415 = vpack.c.b16 %v323, %v322
  %v416 = vpack.c.b16 %v325, %v324
  %v417 = vpack.c.b16 %v327, %v326
  %v418 = vpack.c.b16 %v329, %v328
  %v419 = vpack.c.b16 %v331, %v330
  %v420 = vpack.c.b16 %v333, %v332
  %v421 = vpack.c.b16 %v335, %v334
  %v422 = vpack.c.b16 %v337, %v336
  %v423 = vpack.c.b16 %v339, %v338
  %v424 = vpack.c.b16 %v341, %v340
  %v425 = vpack.c.b16 %v343, %v342
  %v426 = vpack.c.b16 %v345, %v344
  %v427 = vpack.c.b16 %v347, %v346
  %v428 = vpack.c.b16 %v349, %v348
  %v429 = vpack.c.b16 %v351, %v350
  %v430 = vpack.c.b16 %v353, %v352
  %v431 = vpack.c.b16 %v355, %v354
  %v432 = vpack.c.b16 %v357, %v356
  %v433 = vpack.c.b16 %v359, %v358
  %v434 = vpack.c.b16 %v361, %v360
  %v435 = vpack.c.b16 %v363, %v362
  %v436 = vpack.c.b16 %v365, %v364
  %v437 = vpack.c.b16 %v367, %v366
  %v438 = vpack.c.b16 %v369, %v368
  %v439 = vpack.c.b16 %v371, %v370
  %v440 = vpack.c.b16 %v373, %v372
  %v441 = vpack.c.b16 %v375, %v374
  %v442 = vpack.c.b16 %v377, %v376
  %v443 = vpack.c.b16 %v379, %v378
  %v444 = vpack.c.b16 %v381, %v380
  %v445 = vpack.c.b16 %v383, %v382
  %v446 = vpack.c.b16 %v385, %v384
  %v447 = vpack.c.b16 %v387, %v386
  %v448 = vpack.c.b16 %v389, %v388
  %v449 = vpack.c.b16 %v391, %v390
  %v450 = vpack.c.b16 %v393, %v392
  %v451 = vpack.c.b16 %v395, %v394
  %v452 = vpack.c.b16 %v397, %v396
  %v453 = vpack.c.b16 %v399, %v398
  %v454 = vpack.c.b16 %v401, %v400
  %v455 = vpack.c.b16 %v403, %v402
  %v456 = vpack.c.b16 %v405, %v404
  %v457 = vpack.c.b16 %v407, %v406
  %vm508 = vcmask 261120
  %v510 = vsel %vm508, %v188, 0
  %v513 = vsel %vm508, %v195, 0
  %515 = vmatprep.subr.bf16.mxu0 0
  %516 = vmatpush1.bf16.msra.mxu0 %v408
  %517 = vmatprep.subr.bf16.mxu0 0
  %518 = vmatpush1.bf16.msra.mxu0 %v409
  %519 = vmatprep.subr.bf16.mxu0 0
  %520 = vmatpush1.bf16.msra.mxu0 %v410
  %521 = vmatprep.subr.bf16.mxu0 0
  %522 = vmatpush1.bf16.msra.mxu0 %v411
  %523 = vmatprep.subr.bf16.mxu0 0
  %524 = vmatpush1.bf16.msra.mxu0 %v412
  %525 = vmatprep.subr.bf16.mxu0 0
  %526 = vmatpush1.bf16.msra.mxu0 %v413
  %527 = vmatprep.subr.bf16.mxu0 0
  %528 = vmatpush1.bf16.msra.mxu0 %v414
  %529 = vmatprep.subr.bf16.mxu0 0
  %530 = vmatpush1.bf16.msra.mxu0 %v415
  %531 = vmatprep.subr.bf16.mxu0 0
  %532 = vmatpush1.bf16.msra.mxu0 %v416
  %533 = vmatprep.subr.bf16.mxu0 0
  %534 = vmatpush1.bf16.msra.mxu0 %v417
  %535 = vmatprep.subr.bf16.mxu0 0
  %536 = vmatpush1.bf16.msra.mxu0 %v418
  %537 = vmatprep.subr.bf16.mxu0 0
  %538 = vmatpush1.bf16.msra.mxu0 %v419
  %539 = vmatprep.subr.bf16.mxu0 0
  %540 = vmatpush1.bf16.msra.mxu0 %v420
  %541 = vmatprep.subr.bf16.mxu0 0
  %542 = vmatpush1.bf16.msra.mxu0 %v421
  %543 = vmatprep.subr.bf16.mxu0 0
  %544 = vmatpush1.bf16.msra.mxu0 %v422
  %545 = vmatprep.subr.bf16.mxu0 0
  %546 = vmatpush1.bf16.msra.mxu0 %v423
  %547 = vmatprep.mubr.bf16.mxu0 %v183
  %548 = vmatmul.mubr.bf16.gmra.mrb[0].mxu0 %v182
  %v549 = vpop.f32.mrb[0].mxu0
  %v550 = vadd.f32 %v136, %v549
  %v551 = vpop.f32.mrb[0].mxu0
  %v552 = vpop.f32.mrb[0].mxu0
  %v553 = vadd.f32 %v136, %v552
  %v554 = vpop.f32.mrb[0].mxu0
  %555 = vmatprep.mubr.bf16.mxu0 %v190
  %556 = vmatmul.mubr.bf16.gmra.mrb[0].mxu0 %v189
  %v557 = vpop.f32.mrb[0].mxu0
  %v558 = vadd.f32 %v136, %v557
  %v559 = vpop.f32.mrb[0].mxu0
  %v560 = vpop.f32.mrb[0].mxu0
  %v561 = vadd.f32 %v136, %v560
  %v562 = vpop.f32.mrb[0].mxu0
  %563 = vdwg.mxu0
  %564 = vmatprep.subr.bf16.mxu0 0
  %565 = vmatpush1.bf16.msra.mxu0 %v424
  %566 = vmatprep.subr.bf16.mxu0 0
  %567 = vmatpush1.bf16.msra.mxu0 %v425
  %568 = vmatprep.subr.bf16.mxu0 0
  %569 = vmatpush1.bf16.msra.mxu0 %v426
  %570 = vmatprep.subr.bf16.mxu0 0
  %571 = vmatpush1.bf16.msra.mxu0 %v427
  %572 = vmatprep.subr.bf16.mxu0 0
  %573 = vmatpush1.bf16.msra.mxu0 %v428
  %574 = vmatprep.subr.bf16.mxu0 0
  %575 = vmatpush1.bf16.msra.mxu0 %v429
  %576 = vmatprep.subr.bf16.mxu0 0
  %577 = vmatpush1.bf16.msra.mxu0 %v430
  %578 = vmatprep.subr.bf16.mxu0 0
  %579 = vmatpush1.bf16.msra.mxu0 %v431
  %580 = vmatprep.subr.bf16.mxu0 0
  %581 = vmatpush1.bf16.msra.mxu0 %v432
  %582 = vmatprep.subr.bf16.mxu0 0
  %583 = vmatpush1.bf16.msra.mxu0 %v433
  %584 = vmatprep.subr.bf16.mxu0 0
  %585 = vmatpush1.bf16.msra.mxu0 %v434
  %586 = vmatprep.subr.bf16.mxu0 0
  %587 = vmatpush1.bf16.msra.mxu0 %v435
  %588 = vmatprep.subr.bf16.mxu0 0
  %589 = vmatpush1.bf16.msra.mxu0 %v436
  %590 = vmatprep.subr.bf16.mxu0 0
  %591 = vmatpush1.bf16.msra.mxu0 %v437
  %592 = vmatprep.subr.bf16.mxu0 0
  %593 = vmatpush1.bf16.msra.mxu0 %v438
  %594 = vmatprep.subr.bf16.mxu0 0
  %595 = vmatpush1.bf16.msra.mxu0 %v439
  %596 = vmatprep.mubr.bf16.mxu0 %v185
  %597 = vmatmul.mubr.bf16.gmra.mrb[0].mxu0 %v184
  %v598 = vpop.f32.mrb[0].mxu0
  %v599 = vadd.f32 %v550, %v598
  %v600 = vpop.f32.mrb[0].mxu0
  %v601 = vpop.f32.mrb[0].mxu0
  %v602 = vadd.f32 %v553, %v601
  %v603 = vpop.f32.mrb[0].mxu0
  %604 = vmatprep.mubr.bf16.mxu0 %v192
  %605 = vmatmul.mubr.bf16.gmra.mrb[0].mxu0 %v191
  %v606 = vpop.f32.mrb[0].mxu0
  %v607 = vadd.f32 %v558, %v606
  %v608 = vpop.f32.mrb[0].mxu0
  %v609 = vpop.f32.mrb[0].mxu0
  %v610 = vadd.f32 %v561, %v609
  %v611 = vpop.f32.mrb[0].mxu0
  %612 = vdwg.mxu0
  %613 = vmatprep.subr.bf16.mxu0 0
  %614 = vmatpush1.bf16.msra.mxu0 %v440
  %615 = vmatprep.subr.bf16.mxu0 0
  %616 = vmatpush1.bf16.msra.mxu0 %v441
  %617 = vmatprep.subr.bf16.mxu0 0
  %618 = vmatpush1.bf16.msra.mxu0 %v442
  %619 = vmatprep.subr.bf16.mxu0 0
  %620 = vmatpush1.bf16.msra.mxu0 %v443
  %621 = vmatprep.subr.bf16.mxu0 0
  %622 = vmatpush1.bf16.msra.mxu0 %v444
  %623 = vmatprep.subr.bf16.mxu0 0
  %624 = vmatpush1.bf16.msra.mxu0 %v445
  %625 = vmatprep.subr.bf16.mxu0 0
  %626 = vmatpush1.bf16.msra.mxu0 %v446
  %627 = vmatprep.subr.bf16.mxu0 0
  %628 = vmatpush1.bf16.msra.mxu0 %v447
  %629 = vmatprep.subr.bf16.mxu0 0
  %630 = vmatpush1.bf16.msra.mxu0 %v448
  %631 = vmatprep.subr.bf16.mxu0 0
  %632 = vmatpush1.bf16.msra.mxu0 %v449
  %633 = vmatprep.subr.bf16.mxu0 0
  %634 = vmatpush1.bf16.msra.mxu0 %v450
  %635 = vmatprep.subr.bf16.mxu0 0
  %636 = vmatpush1.bf16.msra.mxu0 %v451
  %637 = vmatprep.subr.bf16.mxu0 0
  %638 = vmatpush1.bf16.msra.mxu0 %v452
  %639 = vmatprep.subr.bf16.mxu0 0
  %640 = vmatpush1.bf16.msra.mxu0 %v453
  %641 = vmatprep.subr.bf16.mxu0 0
  %642 = vmatpush1.bf16.msra.mxu0 %v454
  %643 = vmatprep.subr.bf16.mxu0 0
  %644 = vmatpush1.bf16.msra.mxu0 %v455
  %645 = vmatprep.mubr.bf16.mxu0 %v187
  %646 = vmatmul.mubr.bf16.gmra.mrb[0].mxu0 %v186
  %v647 = vpop.f32.mrb[0].mxu0
  %v648 = vadd.f32 %v599, %v647
  %v649 = vpop.f32.mrb[0].mxu0
  %v650 = vpop.f32.mrb[0].mxu0
  %v651 = vadd.f32 %v602, %v650
  %v652 = vpop.f32.mrb[0].mxu0
  %653 = vmatprep.mubr.bf16.mxu0 %v194
  %654 = vmatmul.mubr.bf16.gmra.mrb[0].mxu0 %v193
  %v655 = vpop.f32.mrb[0].mxu0
  %v656 = vadd.f32 %v607, %v655
  %v657 = vpop.f32.mrb[0].mxu0
  %v658 = vpop.f32.mrb[0].mxu0
  %v659 = vadd.f32 %v610, %v658
  %v660 = vpop.f32.mrb[0].mxu0
  %661 = vdwg.mxu0
  %662 = vmatprep.subr.bf16.mxu0 0
  %663 = vmatpush1.bf16.msra.mxu0 %v456
  %664 = vmatprep.subr.bf16.mxu0 0
  %665 = vmatpush1.bf16.msra.mxu0 %v457
  %666 = vmatprep.subr.bf16.mxu0 0
  %667 = vmatpush1.bf16.msra.mxu0 0
  %668 = vmatprep.subr.bf16.mxu0 0
  %669 = vmatpush1.bf16.msra.mxu0 0
  %670 = vmatprep.subr.bf16.mxu0 0
  %671 = vmatpush1.bf16.msra.mxu0 0
  %672 = vmatprep.subr.bf16.mxu0 0
  %673 = vmatpush1.bf16.msra.mxu0 0
  %674 = vmatprep.subr.bf16.mxu0 0
  %675 = vmatpush1.bf16.msra.mxu0 0
  %676 = vmatprep.subr.bf16.mxu0 0
  %677 = vmatpush1.bf16.msra.mxu0 0
  %678 = vmatprep.subr.bf16.mxu0 0
  %679 = vmatpush1.bf16.msra.mxu0 0
  %680 = vmatprep.subr.bf16.mxu0 0
  %681 = vmatpush1.bf16.msra.mxu0 0
  %682 = vmatprep.subr.bf16.mxu0 0
  %683 = vmatpush1.bf16.msra.mxu0 0
  %684 = vmatprep.subr.bf16.mxu0 0
  %685 = vmatpush1.bf16.msra.mxu0 0
  %686 = vmatprep.subr.bf16.mxu0 0
  %687 = vmatpush1.bf16.msra.mxu0 0
  %688 = vmatprep.subr.bf16.mxu0 0
  %689 = vmatpush1.bf16.msra.mxu0 0
  %690 = vmatprep.subr.bf16.mxu0 0
  %691 = vmatpush1.bf16.msra.mxu0 0
  %692 = vmatprep.subr.bf16.mxu0 0
  %693 = vmatpush1.bf16.msra.mxu0 0
  %694 = vmatprep.mubr.bf16.mxu0 0
  %695 = vmatmul.mubr.bf16.gmra.mrb[0].mxu0 %v510
  %v696 = vpop.f32.mrb[0].mxu0
  %v697 = vadd.f32 %v648, %v696
  %v698 = vpop.f32.mrb[0].mxu0
  %v699 = vpop.f32.mrb[0].mxu0
  %v700 = vadd.f32 %v651, %v699
  %v701 = vpop.f32.mrb[0].mxu0
  %702 = vmatprep.mubr.bf16.mxu0 0
  %703 = vmatmul.mubr.bf16.gmra.mrb[0].mxu0 %v513
  %v704 = vpop.f32.mrb[0].mxu0
  %v705 = vadd.f32 %v656, %v704
  %v706 = vpop.f32.mrb[0].mxu0
  %v707 = vpop.f32.mrb[0].mxu0
  %v708 = vadd.f32 %v659, %v707
  %v709 = vpop.f32.mrb[0].mxu0
  %710 = vdwg.mxu0
  %v711 = vmax.f32 %v697, 0.0
  %v712 = vmax.f32 %v700, 0.0
  %v713 = vmax.f32 %v705, 0.0
  %v714 = vmax.f32 %v708, 0.0
  %v715 = vpack.c.bf16 %v712, %v711
  %v716 = vpack.c.bf16 %v714, %v713
  %v719 = vunpack.c.l.b16 %v715
  %v720 = vunpack.c.h.b16 %v715
  %v721 = vunpack.c.l.b16 %v716
  %v722 = vunpack.c.h.b16 %v716
  %v723 = vpack.c.b16 %v719, %v719
  %v724 = vpack.c.b16 %v720, %v720
  %v725 = vpack.c.b16 %v721, %v721
  %v726 = vpack.c.b16 %v722, %v722
  %vm731 = vcmask 519168
  %732 = vst.msk [vmem:[%s3] sm:$0xf] %vm731, %v723
  %733 = vst.msk [vmem:[%s3 + $0x4] sm:$0xf] %vm731, %v724
  %734 = vst.msk [vmem:[%s3 + $0x8] sm:$0xf] %vm731, %v725
  %735 = vst.msk [vmem:[%s3 + $0xc] sm:$0xf] %vm731, %v726
  // Predicated region
  $region14: #{lstm_cnn_forward.7} parent=0 // pred_check
    _
  $region15: #{lstm_cnn_forward.7} parent=0 // pred_check_branch
    %737 = sbr.rel (0) target = $region17
  $region16: #{lstm_cnn_forward.7} parent=0 // pred_region
    _
  $region17: #{lstm_cnn_forward.7} parent=0 // pred_fallthru
    _
  // Predicated region
  $region18: #{lstm_cnn_forward.7} parent=0 // pred_check
    _
  $region19: #{lstm_cnn_forward.7} parent=0 // pred_check_branch
    %739 = sbr.rel (0) target = $region21
  $region20: #{lstm_cnn_forward.7} parent=0 // pred_region
    _
  $region21: #{lstm_cnn_forward.7} parent=0 // pred_fallthru
    _

// kernel: lstm_cnn_forward.8
$region0: #{lstm_cnn_forward.8}
  #allocation0 [shape = 'u32[]', space=smem, size = 0x4, offset = 0x4, fixed_abs, tag = 'smem constant byte address 0x4 - core index']
  #allocation1 [shape = 'u32[144,128]{1,0:T(1,128)}', space=vmem, size = 0x12000, scoped, tag = 'internal scratch']
  %s0 = inlined_call_operand.vmem [shape: f32[8,256], index: 0, kind: input, shape index: {}]
  %s1 = inlined_call_operand.vmem [shape: f32[256,64], index: 1, kind: input, shape index: {}]
  %s2 = inlined_call_operand.vmem [shape: f32[1,64], index: 2, kind: input, shape index: {}]
  %s3 = inlined_call_operand.vmem [shape: f32[64,32], index: 3, kind: input, shape index: {}]
  %s4 = inlined_call_operand.vmem [shape: f32[1,32], index: 4, kind: input, shape index: {}]
  %s5 = inlined_call_operand.vmem [shape: f32[32,128], index: 5, kind: input, shape index: {}]
  %s6 = inlined_call_operand.vmem [shape: f32[1,128], index: 6, kind: input, shape index: {}]
  %s7 = inlined_call_operand.vmem [shape: f32[8,128], index: 7, kind: output, shape index: {}]
  %s8 = sld [smem:[#allocation0]]
  $region38: #{lstm_cnn_forward.8} parent=0
    _
  %s10 = ssub.s32 1, %s8
  %s11 = scalar_select 0, %s10, %s8
  // Predicated region
  $region2: #{lstm_cnn_forward.8} parent=0 // pred_check
    _
  $region3: #{lstm_cnn_forward.8} parent=0 // pred_check_branch
    %13 = sbr.rel (0) target = $region5
  $region4: #{lstm_cnn_forward.8} parent=0 // pred_region
    _
  $region5: #{lstm_cnn_forward.8} parent=0 // pred_fallthru
    _
  // Predicated region
  $region6: #{lstm_cnn_forward.8} parent=0 // pred_check
    _
  $region7: #{lstm_cnn_forward.8} parent=0 // pred_check_branch
    %15 = sbr.rel (0) target = $region9
  $region8: #{lstm_cnn_forward.8} parent=0 // pred_region
    _
  $region9: #{lstm_cnn_forward.8} parent=0 // pred_fallthru
    _
  // Predicated region
  $region10: #{lstm_cnn_forward.8} parent=0 // pred_check
    _
  $region11: #{lstm_cnn_forward.8} parent=0 // pred_check_branch
    %17 = sbr.rel (0) target = $region13
  $region12: #{lstm_cnn_forward.8} parent=0 // pred_region
    _
  $region13: #{lstm_cnn_forward.8} parent=0 // pred_fallthru
    _
  // Predicated region
  $region14: #{lstm_cnn_forward.8} parent=0 // pred_check
    _
  $region15: #{lstm_cnn_forward.8} parent=0 // pred_check_branch
    %19 = sbr.rel (0) target = $region17
  $region16: #{lstm_cnn_forward.8} parent=0 // pred_region
    _
  $region17: #{lstm_cnn_forward.8} parent=0 // pred_fallthru
    _
  // Predicated region
  $region18: #{lstm_cnn_forward.8} parent=0 // pred_check
    _
  $region19: #{lstm_cnn_forward.8} parent=0 // pred_check_branch
    %21 = sbr.rel (0) target = $region21
  $region20: #{lstm_cnn_forward.8} parent=0 // pred_region
    _
  $region21: #{lstm_cnn_forward.8} parent=0 // pred_fallthru
    _
  // Predicated region
  $region22: #{lstm_cnn_forward.8} parent=0 // pred_check
    _
  $region23: #{lstm_cnn_forward.8} parent=0 // pred_check_branch
    %23 = sbr.rel (0) target = $region25
  $region24: #{lstm_cnn_forward.8} parent=0 // pred_region
    _
  $region25: #{lstm_cnn_forward.8} parent=0 // pred_fallthru
    _
  // Predicated region
  $region26: #{lstm_cnn_forward.8} parent=0 // pred_check
    _
  $region27: #{lstm_cnn_forward.8} parent=0 // pred_check_branch
    %25 = sbr.rel (0) target = $region29
  $region28: #{lstm_cnn_forward.8} parent=0 // pred_region
    _
  $region29: #{lstm_cnn_forward.8} parent=0 // pred_fallthru
    _
  %v26 = vld [vmem:[%s0] sm:$0xff]
  %v27 = vld [vmem:[%s0 + $0x8] sm:$0xff]
  %v28 = vld [vmem:[%s1] sm:$0xff]
  %v29 = vld [vmem:[%s1 + $0x8] sm:$0xff]
  %v30 = vld [vmem:[%s1 + $0x10] sm:$0xff]
  %v31 = vld [vmem:[%s1 + $0x18] sm:$0xff]
  %v32 = vld [vmem:[%s1 + $0x20] sm:$0xff]
  %v33 = vld [vmem:[%s1 + $0x28] sm:$0xff]
  %v34 = vld [vmem:[%s1 + $0x30] sm:$0xff]
  %v35 = vld [vmem:[%s1 + $0x38] sm:$0xff]
  %v36 = vld [vmem:[%s1 + $0x40] sm:$0xff]
  %v37 = vld [vmem:[%s1 + $0x48] sm:$0xff]
  %v38 = vld [vmem:[%s1 + $0x50] sm:$0xff]
  %v39 = vld [vmem:[%s1 + $0x58] sm:$0xff]
  %v40 = vld [vmem:[%s1 + $0x60] sm:$0xff]
  %v41 = vld [vmem:[%s1 + $0x68] sm:$0xff]
  %v42 = vld [vmem:[%s1 + $0x70] sm:$0xff]
  %v43 = vld [vmem:[%s1 + $0x78] sm:$0xff]
  %v44 = vld [vmem:[%s1 + $0x80] sm:$0xff]
  %v45 = vld [vmem:[%s1 + $0x88] sm:$0xff]
  %v46 = vld [vmem:[%s1 + $0x90] sm:$0xff]
  %v47 = vld [vmem:[%s1 + $0x98] sm:$0xff]
  %v48 = vld [vmem:[%s1 + $0xa0] sm:$0xff]
  %v49 = vld [vmem:[%s1 + $0xa8] sm:$0xff]
  %v50 = vld [vmem:[%s1 + $0xb0] sm:$0xff]
  %v51 = vld [vmem:[%s1 + $0xb8] sm:$0xff]
  %v52 = vld [vmem:[%s1 + $0xc0] sm:$0xff]
  %v53 = vld [vmem:[%s1 + $0xc8] sm:$0xff]
  %v54 = vld [vmem:[%s1 + $0xd0] sm:$0xff]
  %v55 = vld [vmem:[%s1 + $0xd8] sm:$0xff]
  %v56 = vld [vmem:[%s1 + $0xe0] sm:$0xff]
  %v57 = vld [vmem:[%s1 + $0xe8] sm:$0xff]
  %v58 = vld [vmem:[%s1 + $0xf0] sm:$0xff]
  %v59 = vld [vmem:[%s1 + $0xf8] sm:$0xff]
  %v60 = vld [vmem:[%s2] sm:$0x1]
  %v62 = vlaneseq
  %v63 = vshrl.u32 %v62, 7
  %v64 = vsub.s32 0, %v63
  %v65 = vrot.slane %v60, %v64
  %67 = vmatprep.subr.mxu0 0.0
  %68 = vmatpush1.msra.mxu0 %v28
  %69 = vmatprep.subr.mxu0 0.0
  %70 = vmatpush1.msra.mxu0 %v29
  %71 = vmatprep.subr.mxu0 0.0
  %72 = vmatpush1.msra.mxu0 %v30
  %73 = vmatprep.subr.mxu0 0.0
  %74 = vmatpush1.msra.mxu0 %v31
  %75 = vmatprep.subr.mxu0 0.0
  %76 = vmatpush1.msra.mxu0 %v32
  %77 = vmatprep.subr.mxu0 0.0
  %78 = vmatpush1.msra.mxu0 %v33
  %79 = vmatprep.subr.mxu0 0.0
  %80 = vmatpush1.msra.mxu0 %v34
  %81 = vmatprep.subr.mxu0 0.0
  %82 = vmatpush1.msra.mxu0 %v35
  %83 = vmatprep.subr.mxu0 0.0
  %84 = vmatpush1.msra.mxu0 %v36
  %85 = vmatprep.subr.mxu0 0.0
  %86 = vmatpush1.msra.mxu0 %v37
  %87 = vmatprep.subr.mxu0 0.0
  %88 = vmatpush1.msra.mxu0 %v38
  %89 = vmatprep.subr.mxu0 0.0
  %90 = vmatpush1.msra.mxu0 %v39
  %91 = vmatprep.subr.mxu0 0.0
  %92 = vmatpush1.msra.mxu0 %v40
  %93 = vmatprep.subr.mxu0 0.0
  %94 = vmatpush1.msra.mxu0 %v41
  %95 = vmatprep.subr.mxu0 0.0
  %96 = vmatpush1.msra.mxu0 %v42
  %97 = vmatprep.subr.mxu0 0.0
  %98 = vmatpush1.msra.mxu0 %v43
  %99 = vmatprep.subr.mxu0 0.0
  %100 = vmatpush1.msra.mxu0 %v44
  %101 = vmatprep.subr.mxu0 0.0
  %102 = vmatpush1.msra.mxu0 %v45
  %103 = vmatprep.subr.mxu0 0.0
  %104 = vmatpush1.msra.mxu0 %v46
  %105 = vmatprep.subr.mxu0 0.0
  %106 = vmatpush1.msra.mxu0 %v47
  %107 = vmatprep.subr.mxu0 0.0
  %108 = vmatpush1.msra.mxu0 %v48
  %109 = vmatprep.subr.mxu0 0.0
  %110 = vmatpush1.msra.mxu0 %v49
  %111 = vmatprep.subr.mxu0 0.0
  %112 = vmatpush1.msra.mxu0 %v50
  %113 = vmatprep.subr.mxu0 0.0
  %114 = vmatpush1.msra.mxu0 %v51
  %115 = vmatprep.subr.mxu0 0.0
  %116 = vmatpush1.msra.mxu0 %v52
  %117 = vmatprep.subr.mxu0 0.0
  %118 = vmatpush1.msra.mxu0 %v53
  %119 = vmatprep.subr.mxu0 0.0
  %120 = vmatpush1.msra.mxu0 %v54
  %121 = vmatprep.subr.mxu0 0.0
  %122 = vmatpush1.msra.mxu0 %v55
  %123 = vmatprep.subr.mxu0 0.0
  %124 = vmatpush1.msra.mxu0 %v56
  %125 = vmatprep.subr.mxu0 0.0
  %126 = vmatpush1.msra.mxu0 %v57
  %127 = vmatprep.subr.mxu0 0.0
  %128 = vmatpush1.msra.mxu0 %v58
  %129 = vmatprep.subr.mxu0 0.0
  %130 = vmatpush1.msra.mxu0 %v59
  %131 = vmatprep.mubr.f32.mxu0 %v27
  %132 = vmatmul.mubr.f32.gmra.mrb[0].mxu0 %v26
  %v133 = vpop.f32.mrb[0].mxu0
  %v134 = vadd.f32 %v65, %v133
  %v135 = vpop.f32.mrb[0].mxu0
  %136 = vdwg.mxu0
  %v137 = vmax.f32 %v134, 0.0
  %v138 = vld [vmem:[%s3] sm:$0xff]
  %v139 = vld [vmem:[%s3 + $0x8] sm:$0xff]
  %v140 = vld [vmem:[%s3 + $0x10] sm:$0xff]
  %v141 = vld [vmem:[%s3 + $0x18] sm:$0xff]
  %v142 = vld [vmem:[%s3 + $0x20] sm:$0xff]
  %v143 = vld [vmem:[%s3 + $0x28] sm:$0xff]
  %v144 = vld [vmem:[%s3 + $0x30] sm:$0xff]
  %v145 = vld [vmem:[%s3 + $0x38] sm:$0xff]
  %v146 = vld [vmem:[%s4] sm:$0x1]
  %v148 = vlaneseq
  %v149 = vshrl.u32 %v148, 7
  %v150 = vsub.s32 0, %v149
  %v151 = vrot.slane %v146, %v150
  %vm153 = vcmask 523264
  %v155 = vsel %vm153, %v137, 0
  %157 = vmatprep.subr.mxu0 0.0
  %158 = vmatpush1.msra.mxu0 %v138
  %159 = vmatprep.subr.mxu0 0.0
  %160 = vmatpush1.msra.mxu0 %v139
  %161 = vmatprep.subr.mxu0 0.0
  %162 = vmatpush1.msra.mxu0 %v140
  %163 = vmatprep.subr.mxu0 0.0
  %164 = vmatpush1.msra.mxu0 %v141
  %165 = vmatprep.subr.mxu0 0.0
  %166 = vmatpush1.msra.mxu0 %v142
  %167 = vmatprep.subr.mxu0 0.0
  %168 = vmatpush1.msra.mxu0 %v143
  %169 = vmatprep.subr.mxu0 0.0
  %170 = vmatpush1.msra.mxu0 %v144
  %171 = vmatprep.subr.mxu0 0.0
  %172 = vmatpush1.msra.mxu0 %v145
  %173 = vmatprep.subr.mxu0 0.0
  %174 = vmatpush1.msra.mxu0 0.0
  %175 = vmatprep.subr.mxu0 0.0
  %176 = vmatpush1.msra.mxu0 0.0
  %177 = vmatprep.subr.mxu0 0.0
  %178 = vmatpush1.msra.mxu0 0.0
  %179 = vmatprep.subr.mxu0 0.0
  %180 = vmatpush1.msra.mxu0 0.0
  %181 = vmatprep.subr.mxu0 0.0
  %182 = vmatpush1.msra.mxu0 0.0
  %183 = vmatprep.subr.mxu0 0.0
  %184 = vmatpush1.msra.mxu0 0.0
  %185 = vmatprep.subr.mxu0 0.0
  %186 = vmatpush1.msra.mxu0 0.0
  %187 = vmatprep.subr.mxu0 0.0
  %188 = vmatpush1.msra.mxu0 0.0
  %189 = vmatprep.subr.mxu0 0.0
  %190 = vmatpush1.msra.mxu0 0.0
  %191 = vmatprep.subr.mxu0 0.0
  %192 = vmatpush1.msra.mxu0 0.0
  %193 = vmatprep.subr.mxu0 0.0
  %194 = vmatpush1.msra.mxu0 0.0
  %195 = vmatprep.subr.mxu0 0.0
  %196 = vmatpush1.msra.mxu0 0.0
  %197 = vmatprep.subr.mxu0 0.0
  %198 = vmatpush1.msra.mxu0 0.0
  %199 = vmatprep.subr.mxu0 0.0
  %200 = vmatpush1.msra.mxu0 0.0
  %201 = vmatprep.subr.mxu0 0.0
  %202 = vmatpush1.msra.mxu0 0.0
  %203 = vmatprep.subr.mxu0 0.0
  %204 = vmatpush1.msra.mxu0 0.0
  %205 = vmatprep.subr.mxu0 0.0
  %206 = vmatpush1.msra.mxu0 0.0
  %207 = vmatprep.subr.mxu0 0.0
  %208 = vmatpush1.msra.mxu0 0.0
  %209 = vmatprep.subr.mxu0 0.0
  %210 = vmatpush1.msra.mxu0 0.0
  %211 = vmatprep.subr.mxu0 0.0
  %212 = vmatpush1.msra.mxu0 0.0
  %213 = vmatprep.subr.mxu0 0.0
  %214 = vmatpush1.msra.mxu0 0.0
  %215 = vmatprep.subr.mxu0 0.0
  %216 = vmatpush1.msra.mxu0 0.0
  %217 = vmatprep.subr.mxu0 0.0
  %218 = vmatpush1.msra.mxu0 0.0
  %219 = vmatprep.subr.mxu0 0.0
  %220 = vmatpush1.msra.mxu0 0.0
  %221 = vmatprep.mubr.f32.mxu0 0.0
  %222 = vmatmul.mubr.f32.gmra.mrb[0].mxu0 %v155
  %v223 = vpop.f32.mrb[0].mxu0
  %v224 = vadd.f32 %v151, %v223
  %v225 = vpop.f32.mrb[0].mxu0
  %226 = vdwg.mxu0
  %v227 = vld [vmem:[%s5] sm:$0xff]
  %v228 = vld [vmem:[%s5 + $0x8] sm:$0xff]
  %v229 = vld [vmem:[%s5 + $0x10] sm:$0xff]
  %v230 = vld [vmem:[%s5 + $0x18] sm:$0xff]
  %v231 = vld [vmem:[%s6] sm:$0x1]
  %v233 = vlaneseq
  %v234 = vshrl.u32 %v233, 7
  %v235 = vsub.s32 0, %v234
  %v236 = vrot.slane %v231, %v235
  %vm238 = vcmask 261120
  %v240 = vsel %vm238, %v224, 0
  %242 = vmatprep.subr.mxu0 0.0
  %243 = vmatpush1.msra.mxu0 %v227
  %244 = vmatprep.subr.mxu0 0.0
  %245 = vmatpush1.msra.mxu0 %v228
  %246 = vmatprep.subr.mxu0 0.0
  %247 = vmatpush1.msra.mxu0 %v229
  %248 = vmatprep.subr.mxu0 0.0
  %249 = vmatpush1.msra.mxu0 %v230
  %250 = vmatprep.subr.mxu0 0.0
  %251 = vmatpush1.msra.mxu0 0.0
  %252 = vmatprep.subr.mxu0 0.0
  %253 = vmatpush1.msra.mxu0 0.0
  %254 = vmatprep.subr.mxu0 0.0
  %255 = vmatpush1.msra.mxu0 0.0
  %256 = vmatprep.subr.mxu0 0.0
  %257 = vmatpush1.msra.mxu0 0.0
  %258 = vmatprep.subr.mxu0 0.0
  %259 = vmatpush1.msra.mxu0 0.0
  %260 = vmatprep.subr.mxu0 0.0
  %261 = vmatpush1.msra.mxu0 0.0
  %262 = vmatprep.subr.mxu0 0.0
  %263 = vmatpush1.msra.mxu0 0.0
  %264 = vmatprep.subr.mxu0 0.0
  %265 = vmatpush1.msra.mxu0 0.0
  %266 = vmatprep.subr.mxu0 0.0
  %267 = vmatpush1.msra.mxu0 0.0
  %268 = vmatprep.subr.mxu0 0.0
  %269 = vmatpush1.msra.mxu0 0.0
  %270 = vmatprep.subr.mxu0 0.0
  %271 = vmatpush1.msra.mxu0 0.0
  %272 = vmatprep.subr.mxu0 0.0
  %273 = vmatpush1.msra.mxu0 0.0
  %274 = vmatprep.subr.mxu0 0.0
  %275 = vmatpush1.msra.mxu0 0.0
  %276 = vmatprep.subr.mxu0 0.0
  %277 = vmatpush1.msra.mxu0 0.0
  %278 = vmatprep.subr.mxu0 0.0
  %279 = vmatpush1.msra.mxu0 0.0
  %280 = vmatprep.subr.mxu0 0.0
  %281 = vmatpush1.msra.mxu0 0.0
  %282 = vmatprep.subr.mxu0 0.0
  %283 = vmatpush1.msra.mxu0 0.0
  %284 = vmatprep.subr.mxu0 0.0
  %285 = vmatpush1.msra.mxu0 0.0
  %286 = vmatprep.subr.mxu0 0.0
  %287 = vmatpush1.msra.mxu0 0.0
  %288 = vmatprep.subr.mxu0 0.0
  %289 = vmatpush1.msra.mxu0 0.0
  %290 = vmatprep.subr.mxu0 0.0
  %291 = vmatpush1.msra.mxu0 0.0
  %292 = vmatprep.subr.mxu0 0.0
  %293 = vmatpush1.msra.mxu0 0.0
  %294 = vmatprep.subr.mxu0 0.0
  %295 = vmatpush1.msra.mxu0 0.0
  %296 = vmatprep.subr.mxu0 0.0
  %297 = vmatpush1.msra.mxu0 0.0
  %298 = vmatprep.subr.mxu0 0.0
  %299 = vmatpush1.msra.mxu0 0.0
  %300 = vmatprep.subr.mxu0 0.0
  %301 = vmatpush1.msra.mxu0 0.0
  %302 = vmatprep.subr.mxu0 0.0
  %303 = vmatpush1.msra.mxu0 0.0
  %304 = vmatprep.subr.mxu0 0.0
  %305 = vmatpush1.msra.mxu0 0.0
  %306 = vmatprep.mubr.f32.mxu0 0.0
  %307 = vmatmul.mubr.f32.gmra.mrb[0].mxu0 %v240
  %v308 = vpop.f32.mrb[0].mxu0
  %v309 = vadd.f32 %v236, %v308
  %v310 = vpop.f32.mrb[0].mxu0
  %311 = vdwg.mxu0
  %312 = vst [vmem:[%s7] sm:$0xff] %v309
  // Predicated region
  $region30: #{lstm_cnn_forward.8} parent=0 // pred_check
    _
  $region31: #{lstm_cnn_forward.8} parent=0 // pred_check_branch
    %314 = sbr.rel (0) target = $region33
  $region32: #{lstm_cnn_forward.8} parent=0 // pred_region
    _
  $region33: #{lstm_cnn_forward.8} parent=0 // pred_fallthru
    _
  // Predicated region
  $region34: #{lstm_cnn_forward.8} parent=0 // pred_check
    _
  $region35: #{lstm_cnn_forward.8} parent=0 // pred_check_branch
    %316 = sbr.rel (0) target = $region37
  $region36: #{lstm_cnn_forward.8} parent=0 // pred_region
    _
  $region37: #{lstm_cnn_forward.8} parent=0 // pred_fallthru
    _

// kernel: lstm_cnn_forward.9
$region0: #{lstm_cnn_forward.9}
  #allocation0 [shape = 'u32[]', space=smem, size = 0x4, offset = 0x4, fixed_abs, tag = 'smem constant byte address 0x4 - core index']
  #allocation1 [shape = 'u32[144,128]{1,0:T(1,128)}', space=vmem, size = 0x12000, scoped, tag = 'internal scratch']
  %s0 = inlined_call_operand.vmem [shape: f32[4,2,128], index: 0, kind: input, shape index: {}]
  %s1 = inlined_call_operand.vmem [shape: f32[32,128], index: 1, kind: input, shape index: {}]
  %s2 = inlined_call_operand.vmem [shape: f32[32,6], index: 2, kind: input, shape index: {}]
  %s3 = inlined_call_operand.vmem [shape: f32[1,6], index: 3, kind: input, shape index: {}]
  %s4 = inlined_call_operand.vmem [shape: f32[4,2,6], index: 4, kind: output, shape index: {}]
  %s5 = sld [smem:[#allocation0]]
  $region26: #{lstm_cnn_forward.9} parent=0
    _
  %s7 = ssub.s32 1, %s5
  %s8 = scalar_select 0, %s7, %s5
  // Predicated region
  $region2: #{lstm_cnn_forward.9} parent=0 // pred_check
    _
  $region3: #{lstm_cnn_forward.9} parent=0 // pred_check_branch
    %10 = sbr.rel (0) target = $region5
  $region4: #{lstm_cnn_forward.9} parent=0 // pred_region
    _
  $region5: #{lstm_cnn_forward.9} parent=0 // pred_fallthru
    _
  // Predicated region
  $region6: #{lstm_cnn_forward.9} parent=0 // pred_check
    _
  $region7: #{lstm_cnn_forward.9} parent=0 // pred_check_branch
    %12 = sbr.rel (0) target = $region9
  $region8: #{lstm_cnn_forward.9} parent=0 // pred_region
    _
  $region9: #{lstm_cnn_forward.9} parent=0 // pred_fallthru
    _
  // Predicated region
  $region10: #{lstm_cnn_forward.9} parent=0 // pred_check
    _
  $region11: #{lstm_cnn_forward.9} parent=0 // pred_check_branch
    %14 = sbr.rel (0) target = $region13
  $region12: #{lstm_cnn_forward.9} parent=0 // pred_region
    _
  $region13: #{lstm_cnn_forward.9} parent=0 // pred_fallthru
    _
  // Predicated region
  $region14: #{lstm_cnn_forward.9} parent=0 // pred_check
    _
  $region15: #{lstm_cnn_forward.9} parent=0 // pred_check_branch
    %16 = sbr.rel (0) target = $region17
  $region16: #{lstm_cnn_forward.9} parent=0 // pred_region
    _
  $region17: #{lstm_cnn_forward.9} parent=0 // pred_fallthru
    _
  %v17 = vld [vmem:[%s0] sm:$0x3]
  %v18 = vld [vmem:[%s1] sm:$0xff]
  %v19 = vld [vmem:[%s1 + $0x8] sm:$0xff]
  %v20 = vld [vmem:[%s1 + $0x10] sm:$0xff]
  %v21 = vld [vmem:[%s1 + $0x18] sm:$0xff]
  %vm22 = vcmask 261120
  %v24 = vsel %vm22, 0.0, 0
  %26 = vmatprep.subr.mxu0 0.0
  %27 = vmatpush1.msra.mxu0 %v18
  %28 = vmatprep.subr.mxu0 0.0
  %29 = vmatpush1.msra.mxu0 %v19
  %30 = vmatprep.subr.mxu0 0.0
  %31 = vmatpush1.msra.mxu0 %v20
  %32 = vmatprep.subr.mxu0 0.0
  %33 = vmatpush1.msra.mxu0 %v21
  %34 = vmatprep.subr.mxu0 0.0
  %35 = vmatpush1.msra.mxu0 0.0
  %36 = vmatprep.subr.mxu0 0.0
  %37 = vmatpush1.msra.mxu0 0.0
  %38 = vmatprep.subr.mxu0 0.0
  %39 = vmatpush1.msra.mxu0 0.0
  %40 = vmatprep.subr.mxu0 0.0
  %41 = vmatpush1.msra.mxu0 0.0
  %42 = vmatprep.subr.mxu0 0.0
  %43 = vmatpush1.msra.mxu0 0.0
  %44 = vmatprep.subr.mxu0 0.0
  %45 = vmatpush1.msra.mxu0 0.0
  %46 = vmatprep.subr.mxu0 0.0
  %47 = vmatpush1.msra.mxu0 0.0
  %48 = vmatprep.subr.mxu0 0.0
  %49 = vmatpush1.msra.mxu0 0.0
  %50 = vmatprep.subr.mxu0 0.0
  %51 = vmatpush1.msra.mxu0 0.0
  %52 = vmatprep.subr.mxu0 0.0
  %53 = vmatpush1.msra.mxu0 0.0
  %54 = vmatprep.subr.mxu0 0.0
  %55 = vmatpush1.msra.mxu0 0.0
  %56 = vmatprep.subr.mxu0 0.0
  %57 = vmatpush1.msra.mxu0 0.0
  %58 = vmatprep.subr.mxu0 0.0
  %59 = vmatpush1.msra.mxu0 0.0
  %60 = vmatprep.subr.mxu0 0.0
  %61 = vmatpush1.msra.mxu0 0.0
  %62 = vmatprep.subr.mxu0 0.0
  %63 = vmatpush1.msra.mxu0 0.0
  %64 = vmatprep.subr.mxu0 0.0
  %65 = vmatpush1.msra.mxu0 0.0
  %66 = vmatprep.subr.mxu0 0.0
  %67 = vmatpush1.msra.mxu0 0.0
  %68 = vmatprep.subr.mxu0 0.0
  %69 = vmatpush1.msra.mxu0 0.0
  %70 = vmatprep.subr.mxu0 0.0
  %71 = vmatpush1.msra.mxu0 0.0
  %72 = vmatprep.subr.mxu0 0.0
  %73 = vmatpush1.msra.mxu0 0.0
  %74 = vmatprep.subr.mxu0 0.0
  %75 = vmatpush1.msra.mxu0 0.0
  %76 = vmatprep.subr.mxu0 0.0
  %77 = vmatpush1.msra.mxu0 0.0
  %78 = vmatprep.subr.mxu0 0.0
  %79 = vmatpush1.msra.mxu0 0.0
  %80 = vmatprep.subr.mxu0 0.0
  %81 = vmatpush1.msra.mxu0 0.0
  %82 = vmatprep.subr.mxu0 0.0
  %83 = vmatpush1.msra.mxu0 0.0
  %84 = vmatprep.subr.mxu0 0.0
  %85 = vmatpush1.msra.mxu0 0.0
  %86 = vmatprep.subr.mxu0 0.0
  %87 = vmatpush1.msra.mxu0 0.0
  %88 = vmatprep.subr.mxu0 0.0
  %89 = vmatpush1.msra.mxu0 0.0
  %90 = vmatprep.mubr.f32.mxu0 0.0
  %91 = vmatmul.mubr.f32.gmra.mrb[0].mxu0 %v24
  %v92 = vpop.f32.mrb[0].mxu0
  %v93 = vadd.f32 0.0, %v92
  %v94 = vpop.f32.mrb[0].mxu0
  %95 = vdwg.mxu0
  %v96 = vadd.f32 %v17, %v93
  %v97 = vxor.u32 %v96, 2147483648
  %v98 = vmul.f32 %v97, 1.442695
  %v99 = vpow.pop %v98
  %v100 = vadd.f32 %v99, 1.0
  %v101 = vrcp.pop %v100
  %v102 = vmul.f32 1.0, %v101
  %v103 = vtanh.pop %v96
  %v104 = vmul.f32 %v102, 0.0
  %106 = vrot.lane.b32.xlu0 %v103, 64
  %v107 = vpop.permute.xlu0 %106
  %v109 = vmul.f32 %v102, %v107
  %111 = vrot.lane.b32.xlu0 %v109, 32
  %v112 = vpop.permute.xlu0 %111
  %v114 = vadd.f32 %v104, %v112
  %v115 = vtanh.pop %v114
  %117 = vrot.lane.b32.xlu0 %v115, 64
  %v118 = vpop.permute.xlu0 %117
  %v120 = vmul.f32 %v102, %v118
  %v121 = vld [vmem:[%s2] sm:$0xff]
  %v122 = vld [vmem:[%s2 + $0x8] sm:$0xff]
  %v123 = vld [vmem:[%s2 + $0x10] sm:$0xff]
  %v124 = vld [vmem:[%s2 + $0x18] sm:$0xff]
  %v125 = vld [vmem:[%s3] sm:$0x1]
  %v127 = vlaneseq
  %v128 = vshrl.u32 %v127, 7
  %v129 = vsub.s32 0, %v128
  %v130 = vrot.slane %v125, %v129
  %133 = vrot.lane.b32.xlu0 %v120, 32
  %v134 = vpop.permute.xlu0 %133
  %v135 = vsel %vm22, %v134, 0
  %137 = vmatprep.subr.mxu0 0.0
  %138 = vmatpush1.msra.mxu0 %v121
  %139 = vmatprep.subr.mxu0 0.0
  %140 = vmatpush1.msra.mxu0 %v122
  %141 = vmatprep.subr.mxu0 0.0
  %142 = vmatpush1.msra.mxu0 %v123
  %143 = vmatprep.subr.mxu0 0.0
  %144 = vmatpush1.msra.mxu0 %v124
  %145 = vmatprep.subr.mxu0 0.0
  %146 = vmatpush1.msra.mxu0 0.0
  %147 = vmatprep.subr.mxu0 0.0
  %148 = vmatpush1.msra.mxu0 0.0
  %149 = vmatprep.subr.mxu0 0.0
  %150 = vmatpush1.msra.mxu0 0.0
  %151 = vmatprep.subr.mxu0 0.0
  %152 = vmatpush1.msra.mxu0 0.0
  %153 = vmatprep.subr.mxu0 0.0
  %154 = vmatpush1.msra.mxu0 0.0
  %155 = vmatprep.subr.mxu0 0.0
  %156 = vmatpush1.msra.mxu0 0.0
  %157 = vmatprep.subr.mxu0 0.0
  %158 = vmatpush1.msra.mxu0 0.0
  %159 = vmatprep.subr.mxu0 0.0
  %160 = vmatpush1.msra.mxu0 0.0
  %161 = vmatprep.subr.mxu0 0.0
  %162 = vmatpush1.msra.mxu0 0.0
  %163 = vmatprep.subr.mxu0 0.0
  %164 = vmatpush1.msra.mxu0 0.0
  %165 = vmatprep.subr.mxu0 0.0
  %166 = vmatpush1.msra.mxu0 0.0
  %167 = vmatprep.subr.mxu0 0.0
  %168 = vmatpush1.msra.mxu0 0.0
  %169 = vmatprep.subr.mxu0 0.0
  %170 = vmatpush1.msra.mxu0 0.0
  %171 = vmatprep.subr.mxu0 0.0
  %172 = vmatpush1.msra.mxu0 0.0
  %173 = vmatprep.subr.mxu0 0.0
  %174 = vmatpush1.msra.mxu0 0.0
  %175 = vmatprep.subr.mxu0 0.0
  %176 = vmatpush1.msra.mxu0 0.0
  %177 = vmatprep.subr.mxu0 0.0
  %178 = vmatpush1.msra.mxu0 0.0
  %179 = vmatprep.subr.mxu0 0.0
  %180 = vmatpush1.msra.mxu0 0.0
  %181 = vmatprep.subr.mxu0 0.0
  %182 = vmatpush1.msra.mxu0 0.0
  %183 = vmatprep.subr.mxu0 0.0
  %184 = vmatpush1.msra.mxu0 0.0
  %185 = vmatprep.subr.mxu0 0.0
  %186 = vmatpush1.msra.mxu0 0.0
  %187 = vmatprep.subr.mxu0 0.0
  %188 = vmatpush1.msra.mxu0 0.0
  %189 = vmatprep.subr.mxu0 0.0
  %190 = vmatpush1.msra.mxu0 0.0
  %191 = vmatprep.subr.mxu0 0.0
  %192 = vmatpush1.msra.mxu0 0.0
  %193 = vmatprep.subr.mxu0 0.0
  %194 = vmatpush1.msra.mxu0 0.0
  %195 = vmatprep.subr.mxu0 0.0
  %196 = vmatpush1.msra.mxu0 0.0
  %197 = vmatprep.subr.mxu0 0.0
  %198 = vmatpush1.msra.mxu0 0.0
  %199 = vmatprep.subr.mxu0 0.0
  %200 = vmatpush1.msra.mxu0 0.0
  %201 = vmatprep.mubr.f32.mxu0 0.0
  %202 = vmatmul.mubr.f32.gmra.mrb[0].mxu0 %v135
  %v203 = vpop.f32.mrb[0].mxu0
  %v204 = vadd.f32 %v130, %v203
  %v205 = vpop.f32.mrb[0].mxu0
  %206 = vdwg.mxu0
  %vm207 = vcmask 41984
  %208 = vst.msk [vmem:[%s4] sm:$0x3] %vm207, %v204
  %s209 = scalar_lea.vmem %s0, 2
  %v210 = vld [vmem:[%s209] sm:$0x3]
  %v211 = vld [vmem:[%s1] sm:$0xff]
  %v212 = vld [vmem:[%s1 + $0x8] sm:$0xff]
  %v213 = vld [vmem:[%s1 + $0x10] sm:$0xff]
  %v214 = vld [vmem:[%s1 + $0x18] sm:$0xff]
  %215 = vmatprep.subr.mxu0 0.0
  %216 = vmatpush1.msra.mxu0 %v211
  %217 = vmatprep.subr.mxu0 0.0
  %218 = vmatpush1.msra.mxu0 %v212
  %219 = vmatprep.subr.mxu0 0.0
  %220 = vmatpush1.msra.mxu0 %v213
  %221 = vmatprep.subr.mxu0 0.0
  %222 = vmatpush1.msra.mxu0 %v214
  %223 = vmatprep.subr.mxu0 0.0
  %224 = vmatpush1.msra.mxu0 0.0
  %225 = vmatprep.subr.mxu0 0.0
  %226 = vmatpush1.msra.mxu0 0.0
  %227 = vmatprep.subr.mxu0 0.0
  %228 = vmatpush1.msra.mxu0 0.0
  %229 = vmatprep.subr.mxu0 0.0
  %230 = vmatpush1.msra.mxu0 0.0
  %231 = vmatprep.subr.mxu0 0.0
  %232 = vmatpush1.msra.mxu0 0.0
  %233 = vmatprep.subr.mxu0 0.0
  %234 = vmatpush1.msra.mxu0 0.0
  %235 = vmatprep.subr.mxu0 0.0
  %236 = vmatpush1.msra.mxu0 0.0
  %237 = vmatprep.subr.mxu0 0.0
  %238 = vmatpush1.msra.mxu0 0.0
  %239 = vmatprep.subr.mxu0 0.0
  %240 = vmatpush1.msra.mxu0 0.0
  %241 = vmatprep.subr.mxu0 0.0
  %242 = vmatpush1.msra.mxu0 0.0
  %243 = vmatprep.subr.mxu0 0.0
  %244 = vmatpush1.msra.mxu0 0.0
  %245 = vmatprep.subr.mxu0 0.0
  %246 = vmatpush1.msra.mxu0 0.0
  %247 = vmatprep.subr.mxu0 0.0
  %248 = vmatpush1.msra.mxu0 0.0
  %249 = vmatprep.subr.mxu0 0.0
  %250 = vmatpush1.msra.mxu0 0.0
  %251 = vmatprep.subr.mxu0 0.0
  %252 = vmatpush1.msra.mxu0 0.0
  %253 = vmatprep.subr.mxu0 0.0
  %254 = vmatpush1.msra.mxu0 0.0
  %255 = vmatprep.subr.mxu0 0.0
  %256 = vmatpush1.msra.mxu0 0.0
  %257 = vmatprep.subr.mxu0 0.0
  %258 = vmatpush1.msra.mxu0 0.0
  %259 = vmatprep.subr.mxu0 0.0
  %260 = vmatpush1.msra.mxu0 0.0
  %261 = vmatprep.subr.mxu0 0.0
  %262 = vmatpush1.msra.mxu0 0.0
  %263 = vmatprep.subr.mxu0 0.0
  %264 = vmatpush1.msra.mxu0 0.0
  %265 = vmatprep.subr.mxu0 0.0
  %266 = vmatpush1.msra.mxu0 0.0
  %267 = vmatprep.subr.mxu0 0.0
  %268 = vmatpush1.msra.mxu0 0.0
  %269 = vmatprep.subr.mxu0 0.0
  %270 = vmatpush1.msra.mxu0 0.0
  %271 = vmatprep.subr.mxu0 0.0
  %272 = vmatpush1.msra.mxu0 0.0
  %273 = vmatprep.subr.mxu0 0.0
  %274 = vmatpush1.msra.mxu0 0.0
  %275 = vmatprep.subr.mxu0 0.0
  %276 = vmatpush1.msra.mxu0 0.0
  %277 = vmatprep.subr.mxu0 0.0
  %278 = vmatpush1.msra.mxu0 0.0
  %279 = vmatprep.mubr.f32.mxu0 0.0
  %280 = vmatmul.mubr.f32.gmra.mrb[0].mxu0 %v135
  %v281 = vpop.f32.mrb[0].mxu0
  %v282 = vadd.f32 0.0, %v281
  %v283 = vpop.f32.mrb[0].mxu0
  %284 = vdwg.mxu0
  %v285 = vadd.f32 %v210, %v282
  %v286 = vxor.u32 %v285, 2147483648
  %v287 = vmul.f32 %v286, 1.442695
  %v288 = vpow.pop %v287
  %v289 = vadd.f32 %v288, 1.0
  %v290 = vrcp.pop %v289
  %v291 = vmul.f32 1.0, %v290
  %v292 = vtanh.pop %v285
  %v293 = vmul.f32 %v291, %v114
  %295 = vrot.lane.b32.xlu0 %v292, 64
  %v296 = vpop.permute.xlu0 %295
  %v298 = vmul.f32 %v291, %v296
  %300 = vrot.lane.b32.xlu0 %v298, 32
  %v301 = vpop.permute.xlu0 %300
  %v303 = vadd.f32 %v293, %v301
  %v304 = vtanh.pop %v303
  %306 = vrot.lane.b32.xlu0 %v304, 64
  %v307 = vpop.permute.xlu0 %306
  %v309 = vmul.f32 %v291, %v307
  %v310 = vld [vmem:[%s2] sm:$0xff]
  %v311 = vld [vmem:[%s2 + $0x8] sm:$0xff]
  %v312 = vld [vmem:[%s2 + $0x10] sm:$0xff]
  %v313 = vld [vmem:[%s2 + $0x18] sm:$0xff]
  %v314 = vld [vmem:[%s3] sm:$0x1]
  %v316 = vlaneseq
  %v317 = vshrl.u32 %v316, 7
  %v318 = vsub.s32 0, %v317
  %v319 = vrot.slane %v314, %v318
  %322 = vrot.lane.b32.xlu0 %v309, 32
  %v323 = vpop.permute.xlu0 %322
  %v324 = vsel %vm22, %v323, 0
  %326 = vmatprep.subr.mxu0 0.0
  %327 = vmatpush1.msra.mxu0 %v310
  %328 = vmatprep.subr.mxu0 0.0
  %329 = vmatpush1.msra.mxu0 %v311
  %330 = vmatprep.subr.mxu0 0.0
  %331 = vmatpush1.msra.mxu0 %v312
  %332 = vmatprep.subr.mxu0 0.0
  %333 = vmatpush1.msra.mxu0 %v313
  %334 = vmatprep.subr.mxu0 0.0
  %335 = vmatpush1.msra.mxu0 0.0
  %336 = vmatprep.subr.mxu0 0.0
  %337 = vmatpush1.msra.mxu0 0.0
  %338 = vmatprep.subr.mxu0 0.0
  %339 = vmatpush1.msra.mxu0 0.0
  %340 = vmatprep.subr.mxu0 0.0
  %341 = vmatpush1.msra.mxu0 0.0
  %342 = vmatprep.subr.mxu0 0.0
  %343 = vmatpush1.msra.mxu0 0.0
  %344 = vmatprep.subr.mxu0 0.0
  %345 = vmatpush1.msra.mxu0 0.0
  %346 = vmatprep.subr.mxu0 0.0
  %347 = vmatpush1.msra.mxu0 0.0
  %348 = vmatprep.subr.mxu0 0.0
  %349 = vmatpush1.msra.mxu0 0.0
  %350 = vmatprep.subr.mxu0 0.0
  %351 = vmatpush1.msra.mxu0 0.0
  %352 = vmatprep.subr.mxu0 0.0
  %353 = vmatpush1.msra.mxu0 0.0
  %354 = vmatprep.subr.mxu0 0.0
  %355 = vmatpush1.msra.mxu0 0.0
  %356 = vmatprep.subr.mxu0 0.0
  %357 = vmatpush1.msra.mxu0 0.0
  %358 = vmatprep.subr.mxu0 0.0
  %359 = vmatpush1.msra.mxu0 0.0
  %360 = vmatprep.subr.mxu0 0.0
  %361 = vmatpush1.msra.mxu0 0.0
  %362 = vmatprep.subr.mxu0 0.0
  %363 = vmatpush1.msra.mxu0 0.0
  %364 = vmatprep.subr.mxu0 0.0
  %365 = vmatpush1.msra.mxu0 0.0
  %366 = vmatprep.subr.mxu0 0.0
  %367 = vmatpush1.msra.mxu0 0.0
  %368 = vmatprep.subr.mxu0 0.0
  %369 = vmatpush1.msra.mxu0 0.0
  %370 = vmatprep.subr.mxu0 0.0
  %371 = vmatpush1.msra.mxu0 0.0
  %372 = vmatprep.subr.mxu0 0.0
  %373 = vmatpush1.msra.mxu0 0.0
  %374 = vmatprep.subr.mxu0 0.0
  %375 = vmatpush1.msra.mxu0 0.0
  %376 = vmatprep.subr.mxu0 0.0
  %377 = vmatpush1.msra.mxu0 0.0
  %378 = vmatprep.subr.mxu0 0.0
  %379 = vmatpush1.msra.mxu0 0.0
  %380 = vmatprep.subr.mxu0 0.0
  %381 = vmatpush1.msra.mxu0 0.0
  %382 = vmatprep.subr.mxu0 0.0
  %383 = vmatpush1.msra.mxu0 0.0
  %384 = vmatprep.subr.mxu0 0.0
  %385 = vmatpush1.msra.mxu0 0.0
  %386 = vmatprep.subr.mxu0 0.0
  %387 = vmatpush1.msra.mxu0 0.0
  %388 = vmatprep.subr.mxu0 0.0
  %389 = vmatpush1.msra.mxu0 0.0
  %390 = vmatprep.mubr.f32.mxu0 0.0
  %391 = vmatmul.mubr.f32.gmra.mrb[0].mxu0 %v324
  %v392 = vpop.f32.mrb[0].mxu0
  %v393 = vadd.f32 %v319, %v392
  %v394 = vpop.f32.mrb[0].mxu0
  %395 = vdwg.mxu0
  %s396 = scalar_lea.vmem %s4, 2
  %397 = vst.msk [vmem:[%s396] sm:$0x3] %vm207, %v393
  %s398 = scalar_lea.vmem %s0, 4
  %v399 = vld [vmem:[%s398] sm:$0x3]
  %v400 = vld [vmem:[%s1] sm:$0xff]
  %v401 = vld [vmem:[%s1 + $0x8] sm:$0xff]
  %v402 = vld [vmem:[%s1 + $0x10] sm:$0xff]
  %v403 = vld [vmem:[%s1 + $0x18] sm:$0xff]
  %404 = vmatprep.subr.mxu0 0.0
  %405 = vmatpush1.msra.mxu0 %v400
  %406 = vmatprep.subr.mxu0 0.0
  %407 = vmatpush1.msra.mxu0 %v401
  %408 = vmatprep.subr.mxu0 0.0
  %409 = vmatpush1.msra.mxu0 %v402
  %410 = vmatprep.subr.mxu0 0.0
  %411 = vmatpush1.msra.mxu0 %v403
  %412 = vmatprep.subr.mxu0 0.0
  %413 = vmatpush1.msra.mxu0 0.0
  %414 = vmatprep.subr.mxu0 0.0
  %415 = vmatpush1.msra.mxu0 0.0
  %416 = vmatprep.subr.mxu0 0.0
  %417 = vmatpush1.msra.mxu0 0.0
  %418 = vmatprep.subr.mxu0 0.0
  %419 = vmatpush1.msra.mxu0 0.0
  %420 = vmatprep.subr.mxu0 0.0
  %421 = vmatpush1.msra.mxu0 0.0
  %422 = vmatprep.subr.mxu0 0.0
  %423 = vmatpush1.msra.mxu0 0.0
  %424 = vmatprep.subr.mxu0 0.0
  %425 = vmatpush1.msra.mxu0 0.0
  %426 = vmatprep.subr.mxu0 0.0
  %427 = vmatpush1.msra.mxu0 0.0
  %428 = vmatprep.subr.mxu0 0.0
  %429 = vmatpush1.msra.mxu0 0.0
  %430 = vmatprep.subr.mxu0 0.0
  %431 = vmatpush1.msra.mxu0 0.0
  %432 = vmatprep.subr.mxu0 0.0
  %433 = vmatpush1.msra.mxu0 0.0
  %434 = vmatprep.subr.mxu0 0.0
  %435 = vmatpush1.msra.mxu0 0.0
  %436 = vmatprep.subr.mxu0 0.0
  %437 = vmatpush1.msra.mxu0 0.0
  %438 = vmatprep.subr.mxu0 0.0
  %439 = vmatpush1.msra.mxu0 0.0
  %440 = vmatprep.subr.mxu0 0.0
  %441 = vmatpush1.msra.mxu0 0.0
  %442 = vmatprep.subr.mxu0 0.0
  %443 = vmatpush1.msra.mxu0 0.0
  %444 = vmatprep.subr.mxu0 0.0
  %445 = vmatpush1.msra.mxu0 0.0
  %446 = vmatprep.subr.mxu0 0.0
  %447 = vmatpush1.msra.mxu0 0.0
  %448 = vmatprep.subr.mxu0 0.0
  %449 = vmatpush1.msra.mxu0 0.0
  %450 = vmatprep.subr.mxu0 0.0
  %451 = vmatpush1.msra.mxu0 0.0
  %452 = vmatprep.subr.mxu0 0.0
  %453 = vmatpush1.msra.mxu0 0.0
  %454 = vmatprep.subr.mxu0 0.0
  %455 = vmatpush1.msra.mxu0 0.0
  %456 = vmatprep.subr.mxu0 0.0
  %457 = vmatpush1.msra.mxu0 0.0
  %458 = vmatprep.subr.mxu0 0.0
  %459 = vmatpush1.msra.mxu0 0.0
  %460 = vmatprep.subr.mxu0 0.0
  %461 = vmatpush1.msra.mxu0 0.0
  %462 = vmatprep.subr.mxu0 0.0
  %463 = vmatpush1.msra.mxu0 0.0
  %464 = vmatprep.subr.mxu0 0.0
  %465 = vmatpush1.msra.mxu0 0.0
  %466 = vmatprep.subr.mxu0 0.0
  %467 = vmatpush1.msra.mxu0 0.0
  %468 = vmatprep.mubr.f32.mxu0 0.0
  %469 = vmatmul.mubr.f32.gmra.mrb[0].mxu0 %v324
  %v470 = vpop.f32.mrb[0].mxu0
  %v471 = vadd.f32 0.0, %v470
  %v472 = vpop.f32.mrb[0].mxu0
  %473 = vdwg.mxu0
  %v474 = vadd.f32 %v399, %v471
  %v475 = vxor.u32 %v474, 2147483648
  %v476 = vmul.f32 %v475, 1.442695
  %v477 = vpow.pop %v476
  %v478 = vadd.f32 %v477, 1.0
  %v479 = vrcp.pop %v478
  %v480 = vmul.f32 1.0, %v479
  %v481 = vtanh.pop %v474
  %v482 = vmul.f32 %v480, %v303
  %484 = vrot.lane.b32.xlu0 %v481, 64
  %v485 = vpop.permute.xlu0 %484
  %v487 = vmul.f32 %v480, %v485
  %489 = vrot.lane.b32.xlu0 %v487, 32
  %v490 = vpop.permute.xlu0 %489
  %v492 = vadd.f32 %v482, %v490
  %v493 = vtanh.pop %v492
  %495 = vrot.lane.b32.xlu0 %v493, 64
  %v496 = vpop.permute.xlu0 %495
  %v498 = vmul.f32 %v480, %v496
  %v499 = vld [vmem:[%s2] sm:$0xff]
  %v500 = vld [vmem:[%s2 + $0x8] sm:$0xff]
  %v501 = vld [vmem:[%s2 + $0x10] sm:$0xff]
  %v502 = vld [vmem:[%s2 + $0x18] sm:$0xff]
  %v503 = vld [vmem:[%s3] sm:$0x1]
  %v505 = vlaneseq
  %v506 = vshrl.u32 %v505, 7
  %v507 = vsub.s32 0, %v506
  %v508 = vrot.slane %v503, %v507
  %511 = vrot.lane.b32.xlu0 %v498, 32
  %v512 = vpop.permute.xlu0 %511
  %v513 = vsel %vm22, %v512, 0
  %515 = vmatprep.subr.mxu0 0.0
  %516 = vmatpush1.msra.mxu0 %v499
  %517 = vmatprep.subr.mxu0 0.0
  %518 = vmatpush1.msra.mxu0 %v500
  %519 = vmatprep.subr.mxu0 0.0
  %520 = vmatpush1.msra.mxu0 %v501
  %521 = vmatprep.subr.mxu0 0.0
  %522 = vmatpush1.msra.mxu0 %v502
  %523 = vmatprep.subr.mxu0 0.0
  %524 = vmatpush1.msra.mxu0 0.0
  %525 = vmatprep.subr.mxu0 0.0
  %526 = vmatpush1.msra.mxu0 0.0
  %527 = vmatprep.subr.mxu0 0.0
  %528 = vmatpush1.msra.mxu0 0.0
  %529 = vmatprep.subr.mxu0 0.0
  %530 = vmatpush1.msra.mxu0 0.0
  %531 = vmatprep.subr.mxu0 0.0
  %532 = vmatpush1.msra.mxu0 0.0
  %533 = vmatprep.subr.mxu0 0.0
  %534 = vmatpush1.msra.mxu0 0.0
  %535 = vmatprep.subr.mxu0 0.0
  %536 = vmatpush1.msra.mxu0 0.0
  %537 = vmatprep.subr.mxu0 0.0
  %538 = vmatpush1.msra.mxu0 0.0
  %539 = vmatprep.subr.mxu0 0.0
  %540 = vmatpush1.msra.mxu0 0.0
  %541 = vmatprep.subr.mxu0 0.0
  %542 = vmatpush1.msra.mxu0 0.0
  %543 = vmatprep.subr.mxu0 0.0
  %544 = vmatpush1.msra.mxu0 0.0
  %545 = vmatprep.subr.mxu0 0.0
  %546 = vmatpush1.msra.mxu0 0.0
  %547 = vmatprep.subr.mxu0 0.0
  %548 = vmatpush1.msra.mxu0 0.0
  %549 = vmatprep.subr.mxu0 0.0
  %550 = vmatpush1.msra.mxu0 0.0
  %551 = vmatprep.subr.mxu0 0.0
  %552 = vmatpush1.msra.mxu0 0.0
  %553 = vmatprep.subr.mxu0 0.0
  %554 = vmatpush1.msra.mxu0 0.0
  %555 = vmatprep.subr.mxu0 0.0
  %556 = vmatpush1.msra.mxu0 0.0
  %557 = vmatprep.subr.mxu0 0.0
  %558 = vmatpush1.msra.mxu0 0.0
  %559 = vmatprep.subr.mxu0 0.0
  %560 = vmatpush1.msra.mxu0 0.0
  %561 = vmatprep.subr.mxu0 0.0
  %562 = vmatpush1.msra.mxu0 0.0
  %563 = vmatprep.subr.mxu0 0.0
  %564 = vmatpush1.msra.mxu0 0.0
  %565 = vmatprep.subr.mxu0 0.0
  %566 = vmatpush1.msra.mxu0 0.0
  %567 = vmatprep.subr.mxu0 0.0
  %568 = vmatpush1.msra.mxu0 0.0
  %569 = vmatprep.subr.mxu0 0.0
  %570 = vmatpush1.msra.mxu0 0.0
  %571 = vmatprep.subr.mxu0 0.0
  %572 = vmatpush1.msra.mxu0 0.0
  %573 = vmatprep.subr.mxu0 0.0
  %574 = vmatpush1.msra.mxu0 0.0
  %575 = vmatprep.subr.mxu0 0.0
  %576 = vmatpush1.msra.mxu0 0.0
  %577 = vmatprep.subr.mxu0 0.0
  %578 = vmatpush1.msra.mxu0 0.0
  %579 = vmatprep.mubr.f32.mxu0 0.0
  %580 = vmatmul.mubr.f32.gmra.mrb[0].mxu0 %v513
  %v581 = vpop.f32.mrb[0].mxu0
  %v582 = vadd.f32 %v508, %v581
  %v583 = vpop.f32.mrb[0].mxu0
  %584 = vdwg.mxu0
  %s585 = scalar_lea.vmem %s4, 4
  %586 = vst.msk [vmem:[%s585] sm:$0x3] %vm207, %v582
  %s587 = scalar_lea.vmem %s0, 6
  %v588 = vld [vmem:[%s587] sm:$0x3]
  %v589 = vld [vmem:[%s1] sm:$0xff]
  %v590 = vld [vmem:[%s1 + $0x8] sm:$0xff]
  %v591 = vld [vmem:[%s1 + $0x10] sm:$0xff]
  %v592 = vld [vmem:[%s1 + $0x18] sm:$0xff]
  %593 = vmatprep.subr.mxu0 0.0
  %594 = vmatpush1.msra.mxu0 %v589
  %595 = vmatprep.subr.mxu0 0.0
  %596 = vmatpush1.msra.mxu0 %v590
  %597 = vmatprep.subr.mxu0 0.0
  %598 = vmatpush1.msra.mxu0 %v591
  %599 = vmatprep.subr.mxu0 0.0
  %600 = vmatpush1.msra.mxu0 %v592
  %601 = vmatprep.subr.mxu0 0.0
  %602 = vmatpush1.msra.mxu0 0.0
  %603 = vmatprep.subr.mxu0 0.0
  %604 = vmatpush1.msra.mxu0 0.0
  %605 = vmatprep.subr.mxu0 0.0
  %606 = vmatpush1.msra.mxu0 0.0
  %607 = vmatprep.subr.mxu0 0.0
  %608 = vmatpush1.msra.mxu0 0.0
  %609 = vmatprep.subr.mxu0 0.0
  %610 = vmatpush1.msra.mxu0 0.0
  %611 = vmatprep.subr.mxu0 0.0
  %612 = vmatpush1.msra.mxu0 0.0
  %613 = vmatprep.subr.mxu0 0.0
  %614 = vmatpush1.msra.mxu0 0.0
  %615 = vmatprep.subr.mxu0 0.0
  %616 = vmatpush1.msra.mxu0 0.0
  %617 = vmatprep.subr.mxu0 0.0
  %618 = vmatpush1.msra.mxu0 0.0
  %619 = vmatprep.subr.mxu0 0.0
  %620 = vmatpush1.msra.mxu0 0.0
  %621 = vmatprep.subr.mxu0 0.0
  %622 = vmatpush1.msra.mxu0 0.0
  %623 = vmatprep.subr.mxu0 0.0
  %624 = vmatpush1.msra.mxu0 0.0
  %625 = vmatprep.subr.mxu0 0.0
  %626 = vmatpush1.msra.mxu0 0.0
  %627 = vmatprep.subr.mxu0 0.0
  %628 = vmatpush1.msra.mxu0 0.0
  %629 = vmatprep.subr.mxu0 0.0
  %630 = vmatpush1.msra.mxu0 0.0
  %631 = vmatprep.subr.mxu0 0.0
  %632 = vmatpush1.msra.mxu0 0.0
  %633 = vmatprep.subr.mxu0 0.0
  %634 = vmatpush1.msra.mxu0 0.0
  %635 = vmatprep.subr.mxu0 0.0
  %636 = vmatpush1.msra.mxu0 0.0
  %637 = vmatprep.subr.mxu0 0.0
  %638 = vmatpush1.msra.mxu0 0.0
  %639 = vmatprep.subr.mxu0 0.0
  %640 = vmatpush1.msra.mxu0 0.0
  %641 = vmatprep.subr.mxu0 0.0
  %642 = vmatpush1.msra.mxu0 0.0
  %643 = vmatprep.subr.mxu0 0.0
  %644 = vmatpush1.msra.mxu0 0.0
  %645 = vmatprep.subr.mxu0 0.0
  %646 = vmatpush1.msra.mxu0 0.0
  %647 = vmatprep.subr.mxu0 0.0
  %648 = vmatpush1.msra.mxu0 0.0
  %649 = vmatprep.subr.mxu0 0.0
  %650 = vmatpush1.msra.mxu0 0.0
  %651 = vmatprep.subr.mxu0 0.0
  %652 = vmatpush1.msra.mxu0 0.0
  %653 = vmatprep.subr.mxu0 0.0
  %654 = vmatpush1.msra.mxu0 0.0
  %655 = vmatprep.subr.mxu0 0.0
  %656 = vmatpush1.msra.mxu0 0.0
  %657 = vmatprep.mubr.f32.mxu0 0.0
  %658 = vmatmul.mubr.f32.gmra.mrb[0].mxu0 %v513
  %v659 = vpop.f32.mrb[0].mxu0
  %v660 = vadd.f32 0.0, %v659
  %v661 = vpop.f32.mrb[0].mxu0
  %662 = vdwg.mxu0
  %v663 = vadd.f32 %v588, %v660
  %v664 = vxor.u32 %v663, 2147483648
  %v665 = vmul.f32 %v664, 1.442695
  %v666 = vpow.pop %v665
  %v667 = vadd.f32 %v666, 1.0
  %v668 = vrcp.pop %v667
  %v669 = vmul.f32 1.0, %v668
  %v670 = vtanh.pop %v663
  %v671 = vmul.f32 %v669, %v492
  %673 = vrot.lane.b32.xlu0 %v670, 64
  %v674 = vpop.permute.xlu0 %673
  %v676 = vmul.f32 %v669, %v674
  %678 = vrot.lane.b32.xlu0 %v676, 32
  %v679 = vpop.permute.xlu0 %678
  %v681 = vadd.f32 %v671, %v679
  %v682 = vtanh.pop %v681
  %684 = vrot.lane.b32.xlu0 %v682, 64
  %v685 = vpop.permute.xlu0 %684
  %v687 = vmul.f32 %v669, %v685
  %v688 = vld [vmem:[%s2] sm:$0xff]
  %v689 = vld [vmem:[%s2 + $0x8] sm:$0xff]
  %v690 = vld [vmem:[%s2 + $0x10] sm:$0xff]
  %v691 = vld [vmem:[%s2 + $0x18] sm:$0xff]
  %v692 = vld [vmem:[%s3] sm:$0x1]
  %v694 = vlaneseq
  %v695 = vshrl.u32 %v694, 7
  %v696 = vsub.s32 0, %v695
  %v697 = vrot.slane %v692, %v696
  %700 = vrot.lane.b32.xlu0 %v687, 32
  %v701 = vpop.permute.xlu0 %700
  %v702 = vsel %vm22, %v701, 0
  %704 = vmatprep.subr.mxu0 0.0
  %705 = vmatpush1.msra.mxu0 %v688
  %706 = vmatprep.subr.mxu0 0.0
  %707 = vmatpush1.msra.mxu0 %v689
  %708 = vmatprep.subr.mxu0 0.0
  %709 = vmatpush1.msra.mxu0 %v690
  %710 = vmatprep.subr.mxu0 0.0
  %711 = vmatpush1.msra.mxu0 %v691
  %712 = vmatprep.subr.mxu0 0.0
  %713 = vmatpush1.msra.mxu0 0.0
  %714 = vmatprep.subr.mxu0 0.0
  %715 = vmatpush1.msra.mxu0 0.0
  %716 = vmatprep.subr.mxu0 0.0
  %717 = vmatpush1.msra.mxu0 0.0
  %718 = vmatprep.subr.mxu0 0.0
  %719 = vmatpush1.msra.mxu0 0.0
  %720 = vmatprep.subr.mxu0 0.0
  %721 = vmatpush1.msra.mxu0 0.0
  %722 = vmatprep.subr.mxu0 0.0
  %723 = vmatpush1.msra.mxu0 0.0
  %724 = vmatprep.subr.mxu0 0.0
  %725 = vmatpush1.msra.mxu0 0.0
  %726 = vmatprep.subr.mxu0 0.0
  %727 = vmatpush1.msra.mxu0 0.0
  %728 = vmatprep.subr.mxu0 0.0
  %729 = vmatpush1.msra.mxu0 0.0
  %730 = vmatprep.subr.mxu0 0.0
  %731 = vmatpush1.msra.mxu0 0.0
  %732 = vmatprep.subr.mxu0 0.0
  %733 = vmatpush1.msra.mxu0 0.0
  %734 = vmatprep.subr.mxu0 0.0
  %735 = vmatpush1.msra.mxu0 0.0
  %736 = vmatprep.subr.mxu0 0.0
  %737 = vmatpush1.msra.mxu0 0.0
  %738 = vmatprep.subr.mxu0 0.0
  %739 = vmatpush1.msra.mxu0 0.0
  %740 = vmatprep.subr.mxu0 0.0
  %741 = vmatpush1.msra.mxu0 0.0
  %742 = vmatprep.subr.mxu0 0.0
  %743 = vmatpush1.msra.mxu0 0.0
  %744 = vmatprep.subr.mxu0 0.0
  %745 = vmatpush1.msra.mxu0 0.0
  %746 = vmatprep.subr.mxu0 0.0
  %747 = vmatpush1.msra.mxu0 0.0
  %748 = vmatprep.subr.mxu0 0.0
  %749 = vmatpush1.msra.mxu0 0.0
  %750 = vmatprep.subr.mxu0 0.0
  %751 = vmatpush1.msra.mxu0 0.0
  %752 = vmatprep.subr.mxu0 0.0
  %753 = vmatpush1.msra.mxu0 0.0
  %754 = vmatprep.subr.mxu0 0.0
  %755 = vmatpush1.msra.mxu0 0.0
  %756 = vmatprep.subr.mxu0 0.0
  %757 = vmatpush1.msra.mxu0 0.0
  %758 = vmatprep.subr.mxu0 0.0
  %759 = vmatpush1.msra.mxu0 0.0
  %760 = vmatprep.subr.mxu0 0.0
  %761 = vmatpush1.msra.mxu0 0.0
  %762 = vmatprep.subr.mxu0 0.0
  %763 = vmatpush1.msra.mxu0 0.0
  %764 = vmatprep.subr.mxu0 0.0
  %765 = vmatpush1.msra.mxu0 0.0
  %766 = vmatprep.subr.mxu0 0.0
  %767 = vmatpush1.msra.mxu0 0.0
  %768 = vmatprep.mubr.f32.mxu0 0.0
  %769 = vmatmul.mubr.f32.gmra.mrb[0].mxu0 %v702
  %v770 = vpop.f32.mrb[0].mxu0
  %v771 = vadd.f32 %v697, %v770
  %v772 = vpop.f32.mrb[0].mxu0
  %773 = vdwg.mxu0
  %s774 = scalar_lea.vmem %s4, 6
  %775 = vst.msk [vmem:[%s774] sm:$0x3] %vm207, %v771
  // Predicated region
  $region18: #{lstm_cnn_forward.9} parent=0 // pred_check
    _
  $region19: #{lstm_cnn_forward.9} parent=0 // pred_check_branch
    %777 = sbr.rel (0) target = $region21
  $region20: #{lstm_cnn_forward.9} parent=0 // pred_region
    _
  $region21: #{lstm_cnn_forward.9} parent=0 // pred_fallthru
    _
  // Predicated region
  $region22: #{lstm_cnn_forward.9} parent=0 // pred_check
    _
  $region23: #{lstm_cnn_forward.9} parent=0 // pred_check_branch
    %779 = sbr.rel (0) target = $region25
  $region24: #{lstm_cnn_forward.9} parent=0 // pred_region
    _
  $region25: #{lstm_cnn_forward.9} parent=0 // pred_fallthru
    _

</llo_original>
